<compile_context>
chip_gen: v7x
topology: tpu7x:2x2x1
jax: 0.10.0
libtpu: 0.0.40
codegen_flags: <defaults>
</compile_context>

<pallas_src>
import functools
import math

import jax
import jax.numpy as jnp
from jax import lax
from jax.experimental import pallas as pl
from jax.experimental.pallas import tpu as pltpu


# ----------------------------------------------------------------------------
# in-kernel helpers (operate on loaded values)
# ----------------------------------------------------------------------------

def _mm_bf16w(a_f32, w_bf16):
    """activation (f32) @ pre-cast bf16 weight, f32 MXU accumulation."""
    return jnp.dot(a_f32.astype(jnp.bfloat16), w_bf16,
                   preferred_element_type=jnp.float32)


def _bn_elu(h, g, bt, rm, rv):
    """BatchNorm1d(eval, eps=1e-4 as constructed in the module) + ELU(alpha=1)."""
    h = (h - rm) * lax.rsqrt(rv + 1e-4) * g + bt
    em1 = jnp.exp(jnp.minimum(h, 0.0)) - 1.0
    return jnp.where(h > 0.0, h, em1)


def _masked_softmax(scores, mask):
    """Row-wise softmax restricted to mask>0; rows with no edges give zeros."""
    valid = mask > 0
    s = jnp.where(valid, scores, jnp.float32(-1e30))
    smax = jnp.max(s, axis=1, keepdims=True)
    e = jnp.exp(s - smax) * valid.astype(jnp.float32)
    denom = jnp.sum(e, axis=1, keepdims=True)
    # EUP reciprocal (free slot); guarded so empty rows yield 0, not NaN.
    inv = pl.reciprocal(jnp.maximum(denom, jnp.float32(1e-30)), approx=True)
    return e * inv


def _scores(q, k, d):
    """scores[t, s] = <q_t, k_s> / sqrt(d), bf16 operands, f32 accumulation."""
    s = lax.dot_general(q.astype(jnp.bfloat16), k.astype(jnp.bfloat16),
                        (((1,), (1,)), ((), ())),
                        preferred_element_type=jnp.float32)
    return s * (1.0 / math.sqrt(d))


def _att_apply(attT, v):
    """h_t = sum_s attT[t, s] * v_s (bf16 operands, f32 accumulation)."""
    return jnp.dot(attT.astype(jnp.bfloat16), v.astype(jnp.bfloat16),
                   preferred_element_type=jnp.float32)


def _mix(attT, h, attpT, hp, at):
    """(1-at)*A@h + at*A_prue@h_prue with A[s,t] = attT[t,s].

    Implemented as dot_general contracting dim 0 of the attention matrix so no
    explicit XLU transpose is materialized; bf16 operands, f32 accumulation.
    """
    a = lax.dot_general(attT.astype(jnp.bfloat16), h.astype(jnp.bfloat16),
                        (((0,), (0,)), ((), ())),
                        preferred_element_type=jnp.float32)
    b = lax.dot_general(attpT.astype(jnp.bfloat16), hp.astype(jnp.bfloat16),
                        (((0,), (0,)), ((), ())),
                        preferred_element_type=jnp.float32)
    return (1.0 - at) * a + at * b


def _qkvs(x, w_bf16, b_f32, d):
    """Single packed projection -> q | k | v | skip (static lane slices)."""
    proj = _mm_bf16w(x, w_bf16) + b_f32
    return (proj[:, 0:d], proj[:, d:2 * d],
            proj[:, 2 * d:3 * d], proj[:, 3 * d:4 * d])


def _tconv_shared_mix(x, mT, mpT, w, b, d, at, relu):
    """TransformerConv on adj and adj_prue sharing one QKVS projection + mixing."""
    q, k, v, skip = _qkvs(x, w, b, d)
    scores = _scores(q, k, d)
    attT = _masked_softmax(scores, mT)       # adj branch
    attpT = _masked_softmax(scores, mpT)     # adj_prue branch
    h = _att_apply(attT, v) + skip
    hp = _att_apply(attpT, v) + skip
    out = _mix(attT, h, attpT, hp, at)
    if relu:
        out = jnp.maximum(out, 0.0)
    return out


def _tconv_hidden_mix(x, mT, mpT, w, b, d, at):
    """conv_hidden layer: the adj_prue conv consumes the *updated* x (== h),
    with the same weights, exactly as in the PyTorch source."""
    q, k, v, skip = _qkvs(x, w, b, d)
    attT = _masked_softmax(_scores(q, k, d), mT)
    h = _att_apply(attT, v) + skip

    q2, k2, v2, skip2 = _qkvs(h, w, b, d)
    attpT = _masked_softmax(_scores(q2, k2, d), mpT)
    hp = _att_apply(attpT, v2) + skip2

    return jnp.maximum(_mix(attT, h, attpT, hp, at), 0.0)


# ----------------------------------------------------------------------------
# The single fused Pallas kernel (one grid point, everything VMEM-resident)
# ----------------------------------------------------------------------------

def _fused_forward_kernel(
        x_ref, mT_ref, mpT_ref,
        # encoder full_block 1
        w1, b1, g1, bt1, rm1, rv1,
        # encoder full_block 2
        w2, b2, g2, bt2, rm2, rv2,
        # gc1 / conv_hidden[0] / gc2 (packed q|k|v|skip)
        wg1, bg1, wh0, bh0, wg2, bg2,
        # head: codebook, decoder full_block, cluster layer
        cb_ref, wd, bd, gd, btd, rmd, rvd, cl_ref,
        # outputs
        z_ref, de_ref, q_ref, fx_ref,
        *, d1, d2, at, alpha):
    mT = mT_ref[...]        # bf16 mask, m[t, s] = 1 iff edge s -> t
    mpT = mpT_ref[...]

    # ---- encoder: two fused full_blocks -> feat_x ----
    h = _mm_bf16w(x_ref[...], w1[...]) + b1[...]
    h = _bn_elu(h, g1[...], bt1[...], rm1[...], rv1[...])
    h = _mm_bf16w(h, w2[...]) + b2[...]
    feat_x = _bn_elu(h, g2[...], bt2[...], rm2[...], rv2[...])
    fx_ref[...] = feat_x

    # ---- gc1 on both graphs (shared projections) + attention mixing + ReLU ----
    xh = _tconv_shared_mix(feat_x, mT, mpT, wg1[...], bg1[...], d1, at, relu=True)

    # ---- conv_hidden loop (layer_num - 2 == 1 layer) ----
    xh = _tconv_hidden_mix(xh, mT, mpT, wh0[...], bh0[...], d1, at)

    # ---- gc2 -> mu (no ReLU), shared projections ----
    mu = _tconv_shared_mix(xh, mT, mpT, wg2[...], bg2[...], d2, at, relu=False)

    # ---- VectorQuantizer: nearest codebook row (f32 distances, tie -> first) ----
    cb = cb_ref[...]                                                # (K, Dq)
    Kc, Dq = cb.shape
    ones_q = jnp.ones((1, Dq), jnp.float32)
    z2 = jnp.sum(feat_x * feat_x, axis=1, keepdims=True)            # (N, 1)
    e2 = lax.dot_general(ones_q, cb * cb, (((1,), (1,)), ((), ())),
                         preferred_element_type=jnp.float32)        # (1, K)
    ze = lax.dot_general(feat_x, cb, (((1,), (1,)), ((), ())),
                         preferred_element_type=jnp.float32)        # (N, K)
    dist = z2 + e2 - 2.0 * ze
    dmin = jnp.min(dist, axis=1, keepdims=True)
    col = lax.broadcasted_iota(jnp.int32, dist.shape, 1)
    first = jnp.min(jnp.where(dist <= dmin, col, Kc), axis=1, keepdims=True)
    onehot = (col == first).astype(jnp.float32)
    quant = jnp.dot(onehot, cb, preferred_element_type=jnp.float32)  # (N, Dq)

    # ---- z = cat(quant, mu): assembled in registers, written once ----
    z = jnp.concatenate([quant, mu], axis=1)                         # (N, latent)
    z_ref[...] = z

    # ---- decoder full_block ----
    hd = _mm_bf16w(z, wd[...]) + bd[...]
    de_ref[...] = _bn_elu(hd, gd[...], btd[...], rmd[...], rvd[...])

    # ---- Student-t soft cluster assignment (DEC), exact f32 ----
    cl = cl_ref[...]                                                 # (C, latent)
    Dl = cl.shape[1]
    ones_l = jnp.ones((1, Dl), jnp.float32)
    zz = jnp.sum(z * z, axis=1, keepdims=True)
    cc = lax.dot_general(ones_l, cl * cl, (((1,), (1,)), ((), ())),
                         preferred_element_type=jnp.float32)
    zc = lax.dot_general(z, cl, (((1,), (1,)), ((), ())),
                         preferred_element_type=jnp.float32)
    dist2 = jnp.maximum(zz + cc - 2.0 * zc, 0.0)
    qv = 1.0 / (1.0 + dist2 / alpha)
    p = (alpha + 1.0) / 2.0
    if p != 1.0:
        qv = qv ** p
    # exact division so rows sum to 1 to tight tolerance
    q_ref[...] = qv / jnp.sum(qv, axis=1, keepdims=True)


# ----------------------------------------------------------------------------
# pallas_call wrapper (single fused invocation; whole problem fits in VMEM)
# ----------------------------------------------------------------------------

def st_transformer_adaptive_forward(x, adj, adj_prue, params, *, at=0.5, alpha=1.0):
    n, input_dim = x.shape
    d1 = params["gc1"]["w"].shape[1] // 4
    d2 = params["gc2"]["w"].shape[1] // 4
    cb = params["codebook"]
    cl = params["cluster"]
    latent = cb.shape[1] + d2

    # One-time tiny transposes / dtype shrink outside the kernel; masks only gate
    # the softmax so bf16 is semantically identical for 0/1 values.
    adjT = adj.T.astype(jnp.bfloat16)        # [t, s] = 1 iff edge s -> t
    adjpT = adj_prue.T.astype(jnp.bfloat16)

    operands = (x, adjT, adjpT,
                *params["enc1"], *params["enc2"],
                params["gc1"]["w"], params["gc1"]["b"],
                params["hid0"]["w"], params["hid0"]["b"],
                params["gc2"]["w"], params["gc2"]["b"],
                cb, *params["dec1"], cl)

    out_shapes = (jax.ShapeDtypeStruct((n, latent), jnp.float32),      # z
                  jax.ShapeDtypeStruct((n, input_dim), jnp.float32),   # de_feat
                  jax.ShapeDtypeStruct((n, cl.shape[0]), jnp.float32),  # q
                  jax.ShapeDtypeStruct((n, cb.shape[1]), jnp.float32))  # feat_x

    # ---- advisory cost estimate (flops / transcendentals / bytes) ----
    h1 = params["enc1"][0].shape[1]
    h2 = params["enc2"][0].shape[1]
    mm = lambda m, k, nn: 2 * m * k * nn
    flops = (mm(n, input_dim, h1) + mm(n, h1, h2)                       # encoder
             + mm(n, h2, 4 * d1) + mm(n, d1, n) + 4 * mm(n, n, d1)      # gc1 + mix
             + 2 * mm(n, d1, 4 * d1) + 2 * mm(n, d1, n) + 4 * mm(n, n, d1)  # hid0
             + mm(n, d1, 4 * d2) + mm(n, d2, n) + 4 * mm(n, n, d2)      # gc2 + mix
             + 2 * mm(n, cb.shape[1], cb.shape[0])                      # VQ dists + lookup
             + mm(n, latent, input_dim) + mm(n, latent, cl.shape[0]))   # decoder + q
    transcendentals = 8 * n * n + n * (h1 + h2 + input_dim)             # softmax exps + ELUs
    bytes_accessed = (sum(int(a.size) * a.dtype.itemsize for a in operands)
                      + sum(int(math.prod(s.shape)) * 4 for s in out_shapes))

    kernel = functools.partial(_fused_forward_kernel, d1=d1, d2=d2, at=at, alpha=alpha)
    return pl.pallas_call(
        kernel,
        out_shape=out_shapes,
        compiler_params=pltpu.CompilerParams(vmem_limit_bytes=32 * 1024 * 1024),
        cost_estimate=pl.CostEstimate(flops=int(flops),
                                      transcendentals=int(transcendentals),
                                      bytes_accessed=int(bytes_accessed)),
    )(*operands)


# ----------------------------------------------------------------------------
# Parameter init (deterministic, matches the module's shapes; weights pre-cast bf16)
# ----------------------------------------------------------------------------

def _linear_init(key, fin, fout):
    kw, kb = jax.random.split(key)
    s = 1.0 / math.sqrt(fin)
    w = jax.random.uniform(kw, (fin, fout), jnp.float32, -s, s)
    b = jax.random.uniform(kb, (1, fout), jnp.float32, -s, s)
    return w, b


def _full_block_init(key, fin, fout):
    w, b = _linear_init(key, fin, fout)
    gamma = jnp.ones((1, fout), jnp.float32)
    beta = jnp.zeros((1, fout), jnp.float32)
    rmean = jnp.zeros((1, fout), jnp.float32)
    rvar = jnp.ones((1, fout), jnp.float32)
    return (w.astype(jnp.bfloat16), b, gamma, beta, rmean, rvar)


def _tconv_init(key, fin, fout):
    """q/k/v/skip linears packed into a single (fin, 4*fout) bf16 weight."""
    kq, kk, kv, ks = jax.random.split(key, 4)
    wq, bq = _linear_init(kq, fin, fout)
    wk, bk = _linear_init(kk, fin, fout)
    wv, bv = _linear_init(kv, fin, fout)
    ws, bs = _linear_init(ks, fin, fout)
    w = jnp.concatenate([wq, wk, wv, ws], axis=1).astype(jnp.bfloat16)  # q | k | v | skip
    b = jnp.concatenate([bq, bk, bv, bs], axis=1)
    return dict(w=w, b=b)


def init_params(key, *, input_dim, feat_hidden1, feat_hidden2,
                gcn_hidden1, gcn_hidden2, dec_cluster_n):
    latent_dim = gcn_hidden2 + 64
    ks = jax.random.split(key, 8)
    return {
        "enc1": _full_block_init(ks[0], input_dim, feat_hidden1),
        "enc2": _full_block_init(ks[1], feat_hidden1, feat_hidden2),
        "gc1": _tconv_init(ks[2], feat_hidden2, gcn_hidden1),
        "hid0": _tconv_init(ks[3], gcn_hidden1, gcn_hidden1),
        "gc2": _tconv_init(ks[4], gcn_hidden1, gcn_hidden2),
        # VectorQuantizer(latent_dim, 64): codebook of latent_dim entries, dim 64.
        "codebook": jax.random.uniform(ks[5], (latent_dim, 64), jnp.float32,
                                       -1.0 / latent_dim, 1.0 / latent_dim),
        "dec1": _full_block_init(ks[6], latent_dim, input_dim),
        # cluster_layer: (dec_cluster_n, gcn_hidden2 + feat_hidden2), xavier_normal
        "cluster": jax.random.normal(ks[7], (dec_cluster_n,
                                             gcn_hidden2 + feat_hidden2), jnp.float32)
                   * math.sqrt(2.0 / (dec_cluster_n + gcn_hidden2 + feat_hidden2)),
    }


def make_adj(key, n, p_edge):
    """Dense symmetric adjacency mask (no self loops, ring guarantees degree>=1)."""
    r = jax.random.uniform(key, (n, n))
    m = (r < p_edge).astype(jnp.float32)
    m = jnp.maximum(m, m.T)
    eye = jnp.eye(n, dtype=jnp.float32)
    ring = jnp.roll(eye, 1, axis=1) + jnp.roll(eye, -1, axis=1)
    m = jnp.maximum(m, ring)
    return m * (1.0 - eye)


# ----------------------------------------------------------------------------
# main
# ----------------------------------------------------------------------------

if __name__ == "__main__":
    N = 32                # number of nodes / spots
    input_dim = 48
    feat_hidden1 = 64
    feat_hidden2 = 64     # must be 64 so quantize(feat_x) matches the 64-dim codebook
    gcn_hidden1 = 32
    gcn_hidden2 = 32
    dec_cluster_n = 8
    latent_dim = gcn_hidden2 + 64

    key = jax.random.PRNGKey(0)
    kx, kadj, kadjp, kp = jax.random.split(key, 4)

    x = jax.random.normal(kx, (N, input_dim), jnp.float32)
    adj = make_adj(kadj, N, 0.15)
    adj_prue = make_adj(kadjp, N, 0.05)

    params = init_params(kp, input_dim=input_dim, feat_hidden1=feat_hidden1,
                         feat_hidden2=feat_hidden2, gcn_hidden1=gcn_hidden1,
                         gcn_hidden2=gcn_hidden2, dec_cluster_n=dec_cluster_n)

    fwd = jax.jit(functools.partial(st_transformer_adaptive_forward,
                                    at=0.5, alpha=1.0))
    z, de_feat, q, feat_x = fwd(x, adj, adj_prue, params)
    jax.block_until_ready((z, de_feat, q, feat_x))

    assert z.shape == (N, latent_dim)
    assert de_feat.shape == (N, input_dim)
    assert q.shape == (N, dec_cluster_n)
    assert feat_x.shape == (N, feat_hidden2)
    assert bool(jnp.all(jnp.isfinite(z)))
    assert bool(jnp.all(jnp.isfinite(de_feat)))
    assert bool(jnp.all(jnp.isfinite(q)))
    assert bool(jnp.allclose(jnp.sum(q, axis=1), 1.0, atol=1e-5))

    print("KERNEL_OK")
</pallas_src>

<mosaic_0001>
module attributes {stable_mosaic.version = 11 : i64} {
  func.func @_fused_forward_kernel(%arg0: memref<32x48xf32, #tpu.memory_space<vmem>>, %arg1: memref<32x32xbf16, #tpu.memory_space<vmem>>, %arg2: memref<32x32xbf16, #tpu.memory_space<vmem>>, %arg3: memref<48x64xbf16, #tpu.memory_space<vmem>>, %arg4: memref<1x64xf32, #tpu.memory_space<vmem>>, %arg5: memref<1x64xf32, #tpu.memory_space<vmem>>, %arg6: memref<1x64xf32, #tpu.memory_space<vmem>>, %arg7: memref<1x64xf32, #tpu.memory_space<vmem>>, %arg8: memref<1x64xf32, #tpu.memory_space<vmem>>, %arg9: memref<64x64xbf16, #tpu.memory_space<vmem>>, %arg10: memref<1x64xf32, #tpu.memory_space<vmem>>, %arg11: memref<1x64xf32, #tpu.memory_space<vmem>>, %arg12: memref<1x64xf32, #tpu.memory_space<vmem>>, %arg13: memref<1x64xf32, #tpu.memory_space<vmem>>, %arg14: memref<1x64xf32, #tpu.memory_space<vmem>>, %arg15: memref<64x128xbf16, #tpu.memory_space<vmem>>, %arg16: memref<1x128xf32, #tpu.memory_space<vmem>>, %arg17: memref<32x128xbf16, #tpu.memory_space<vmem>>, %arg18: memref<1x128xf32, #tpu.memory_space<vmem>>, %arg19: memref<32x128xbf16, #tpu.memory_space<vmem>>, %arg20: memref<1x128xf32, #tpu.memory_space<vmem>>, %arg21: memref<96x64xf32, #tpu.memory_space<vmem>>, %arg22: memref<96x48xbf16, #tpu.memory_space<vmem>>, %arg23: memref<1x48xf32, #tpu.memory_space<vmem>>, %arg24: memref<1x48xf32, #tpu.memory_space<vmem>>, %arg25: memref<1x48xf32, #tpu.memory_space<vmem>>, %arg26: memref<1x48xf32, #tpu.memory_space<vmem>>, %arg27: memref<1x48xf32, #tpu.memory_space<vmem>>, %arg28: memref<8x96xf32, #tpu.memory_space<vmem>>, %arg29: memref<32x96xf32, #tpu.memory_space<vmem>>, %arg30: memref<32x48xf32, #tpu.memory_space<vmem>>, %arg31: memref<32x8xf32, #tpu.memory_space<vmem>>, %arg32: memref<32x64xf32, #tpu.memory_space<vmem>>) attributes {dimension_semantics = [], scalar_prefetch = 0 : i64, scratch_operands = 0 : i64, tpu.core_type = #tpu.core_type<tc>} {
    %c0 = arith.constant 0 : index
    %c0_0 = arith.constant 0 : index
    %0 = vector.load %arg1[%c0, %c0_0] : memref<32x32xbf16, #tpu.memory_space<vmem>>, vector<32x32xbf16>
    %c0_1 = arith.constant 0 : index
    %c0_2 = arith.constant 0 : index
    %1 = vector.load %arg2[%c0_1, %c0_2] : memref<32x32xbf16, #tpu.memory_space<vmem>>, vector<32x32xbf16>
    %c0_3 = arith.constant 0 : index
    %c0_4 = arith.constant 0 : index
    %2 = vector.load %arg0[%c0_3, %c0_4] : memref<32x48xf32, #tpu.memory_space<vmem>>, vector<32x48xf32>
    %c0_5 = arith.constant 0 : index
    %c0_6 = arith.constant 0 : index
    %3 = vector.load %arg3[%c0_5, %c0_6] : memref<48x64xbf16, #tpu.memory_space<vmem>>, vector<48x64xbf16>
    %4 = arith.truncf %2 : vector<32x48xf32> to vector<32x48xbf16>
    %cst = arith.constant dense<0.000000e+00> : vector<32x64xf32>
    %5 = tpu.matmul %4, %3, %cst {dimension_numbers = #tpu.dot_dimension_numbers<[1], [0], [0], [1], [0, 0, 1, 1], [], []>} : vector<32x48xbf16>, vector<48x64xbf16>, vector<32x64xf32> -> vector<32x64xf32>
    %c0_7 = arith.constant 0 : index
    %c0_8 = arith.constant 0 : index
    %6 = vector.load %arg4[%c0_7, %c0_8] : memref<1x64xf32, #tpu.memory_space<vmem>>, vector<1x64xf32>
    %7 = vector.broadcast %6 : vector<1x64xf32> to vector<32x64xf32>
    %8 = arith.addf %5, %7 : vector<32x64xf32>
    %c0_9 = arith.constant 0 : index
    %c0_10 = arith.constant 0 : index
    %9 = vector.load %arg5[%c0_9, %c0_10] : memref<1x64xf32, #tpu.memory_space<vmem>>, vector<1x64xf32>
    %c0_11 = arith.constant 0 : index
    %c0_12 = arith.constant 0 : index
    %10 = vector.load %arg6[%c0_11, %c0_12] : memref<1x64xf32, #tpu.memory_space<vmem>>, vector<1x64xf32>
    %c0_13 = arith.constant 0 : index
    %c0_14 = arith.constant 0 : index
    %11 = vector.load %arg7[%c0_13, %c0_14] : memref<1x64xf32, #tpu.memory_space<vmem>>, vector<1x64xf32>
    %c0_15 = arith.constant 0 : index
    %c0_16 = arith.constant 0 : index
    %12 = vector.load %arg8[%c0_15, %c0_16] : memref<1x64xf32, #tpu.memory_space<vmem>>, vector<1x64xf32>
    %13 = vector.broadcast %11 : vector<1x64xf32> to vector<32x64xf32>
    %14 = arith.subf %8, %13 : vector<32x64xf32>
    %cst_17 = arith.constant 9.99999974E-5 : f32
    %15 = vector.broadcast %cst_17 : f32 to vector<1x64xf32>
    %16 = arith.addf %12, %15 : vector<1x64xf32>
    %17 = math.rsqrt %16 : vector<1x64xf32>
    %18 = vector.broadcast %17 : vector<1x64xf32> to vector<32x64xf32>
    %19 = arith.mulf %14, %18 : vector<32x64xf32>
    %20 = vector.broadcast %9 : vector<1x64xf32> to vector<32x64xf32>
    %21 = arith.mulf %19, %20 : vector<32x64xf32>
    %22 = vector.broadcast %10 : vector<1x64xf32> to vector<32x64xf32>
    %23 = arith.addf %21, %22 : vector<32x64xf32>
    %cst_18 = arith.constant 0.000000e+00 : f32
    %24 = vector.broadcast %cst_18 : f32 to vector<32x64xf32>
    %25 = arith.minimumf %23, %24 : vector<32x64xf32>
    %26 = math.exp %25 : vector<32x64xf32>
    %cst_19 = arith.constant 1.000000e+00 : f32
    %27 = vector.broadcast %cst_19 : f32 to vector<32x64xf32>
    %28 = arith.subf %26, %27 : vector<32x64xf32>
    %cst_20 = arith.constant 0.000000e+00 : f32
    %29 = vector.broadcast %cst_20 : f32 to vector<32x64xf32>
    %30 = arith.cmpf ogt, %23, %29 : vector<32x64xf32>
    %31 = arith.select %30, %23, %28 : vector<32x64xi1>, vector<32x64xf32>
    %c0_21 = arith.constant 0 : index
    %c0_22 = arith.constant 0 : index
    %32 = vector.load %arg9[%c0_21, %c0_22] : memref<64x64xbf16, #tpu.memory_space<vmem>>, vector<64x64xbf16>
    %33 = arith.truncf %31 : vector<32x64xf32> to vector<32x64xbf16>
    %cst_23 = arith.constant dense<0.000000e+00> : vector<32x64xf32>
    %34 = tpu.matmul %33, %32, %cst_23 {dimension_numbers = #tpu.dot_dimension_numbers<[1], [0], [0], [1], [0, 0, 1, 1], [], []>} : vector<32x64xbf16>, vector<64x64xbf16>, vector<32x64xf32> -> vector<32x64xf32>
    %c0_24 = arith.constant 0 : index
    %c0_25 = arith.constant 0 : index
    %35 = vector.load %arg10[%c0_24, %c0_25] : memref<1x64xf32, #tpu.memory_space<vmem>>, vector<1x64xf32>
    %36 = vector.broadcast %35 : vector<1x64xf32> to vector<32x64xf32>
    %37 = arith.addf %34, %36 : vector<32x64xf32>
    %c0_26 = arith.constant 0 : index
    %c0_27 = arith.constant 0 : index
    %38 = vector.load %arg11[%c0_26, %c0_27] : memref<1x64xf32, #tpu.memory_space<vmem>>, vector<1x64xf32>
    %c0_28 = arith.constant 0 : index
    %c0_29 = arith.constant 0 : index
    %39 = vector.load %arg12[%c0_28, %c0_29] : memref<1x64xf32, #tpu.memory_space<vmem>>, vector<1x64xf32>
    %c0_30 = arith.constant 0 : index
    %c0_31 = arith.constant 0 : index
    %40 = vector.load %arg13[%c0_30, %c0_31] : memref<1x64xf32, #tpu.memory_space<vmem>>, vector<1x64xf32>
    %c0_32 = arith.constant 0 : index
    %c0_33 = arith.constant 0 : index
    %41 = vector.load %arg14[%c0_32, %c0_33] : memref<1x64xf32, #tpu.memory_space<vmem>>, vector<1x64xf32>
    %42 = vector.broadcast %40 : vector<1x64xf32> to vector<32x64xf32>
    %43 = arith.subf %37, %42 : vector<32x64xf32>
    %cst_34 = arith.constant 9.99999974E-5 : f32
    %44 = vector.broadcast %cst_34 : f32 to vector<1x64xf32>
    %45 = arith.addf %41, %44 : vector<1x64xf32>
    %46 = math.rsqrt %45 : vector<1x64xf32>
    %47 = vector.broadcast %46 : vector<1x64xf32> to vector<32x64xf32>
    %48 = arith.mulf %43, %47 : vector<32x64xf32>
    %49 = vector.broadcast %38 : vector<1x64xf32> to vector<32x64xf32>
    %50 = arith.mulf %48, %49 : vector<32x64xf32>
    %51 = vector.broadcast %39 : vector<1x64xf32> to vector<32x64xf32>
    %52 = arith.addf %50, %51 : vector<32x64xf32>
    %cst_35 = arith.constant 0.000000e+00 : f32
    %53 = vector.broadcast %cst_35 : f32 to vector<32x64xf32>
    %54 = arith.minimumf %52, %53 : vector<32x64xf32>
    %55 = math.exp %54 : vector<32x64xf32>
    %cst_36 = arith.constant 1.000000e+00 : f32
    %56 = vector.broadcast %cst_36 : f32 to vector<32x64xf32>
    %57 = arith.subf %55, %56 : vector<32x64xf32>
    %cst_37 = arith.constant 0.000000e+00 : f32
    %58 = vector.broadcast %cst_37 : f32 to vector<32x64xf32>
    %59 = arith.cmpf ogt, %52, %58 : vector<32x64xf32>
    %60 = arith.select %59, %52, %57 : vector<32x64xi1>, vector<32x64xf32>
    %c0_38 = arith.constant 0 : index
    %c0_39 = arith.constant 0 : index
    %61 = vector.load %arg32[%c0_38, %c0_39] : memref<32x64xf32, #tpu.memory_space<vmem>>, vector<32x64xf32>
    tpu.vector_store %arg32[%c0_38, %c0_39], %60 {strides = array<i32>} : memref<32x64xf32, #tpu.memory_space<vmem>>, vector<32x64xf32>,
    %c0_40 = arith.constant 0 : index
    %c0_41 = arith.constant 0 : index
    %62 = vector.load %arg15[%c0_40, %c0_41] : memref<64x128xbf16, #tpu.memory_space<vmem>>, vector<64x128xbf16>
    %c0_42 = arith.constant 0 : index
    %c0_43 = arith.constant 0 : index
    %63 = vector.load %arg16[%c0_42, %c0_43] : memref<1x128xf32, #tpu.memory_space<vmem>>, vector<1x128xf32>
    %64 = arith.truncf %60 : vector<32x64xf32> to vector<32x64xbf16>
    %cst_44 = arith.constant dense<0.000000e+00> : vector<32x128xf32>
    %65 = tpu.matmul %64, %62, %cst_44 {dimension_numbers = #tpu.dot_dimension_numbers<[1], [0], [0], [1], [0, 0, 1, 1], [], []>} : vector<32x64xbf16>, vector<64x128xbf16>, vector<32x128xf32> -> vector<32x128xf32>
    %66 = vector.broadcast %63 : vector<1x128xf32> to vector<32x128xf32>
    %67 = arith.addf %65, %66 : vector<32x128xf32>
    %68 = vector.extract_strided_slice %67 {offsets = [0, 0], sizes = [32, 32], strides = [1, 1]} : vector<32x128xf32> to vector<32x32xf32>
    %69 = vector.extract_strided_slice %67 {offsets = [0, 32], sizes = [32, 32], strides = [1, 1]} : vector<32x128xf32> to vector<32x32xf32>
    %70 = vector.extract_strided_slice %67 {offsets = [0, 64], sizes = [32, 32], strides = [1, 1]} : vector<32x128xf32> to vector<32x32xf32>
    %71 = vector.extract_strided_slice %67 {offsets = [0, 96], sizes = [32, 32], strides = [1, 1]} : vector<32x128xf32> to vector<32x32xf32>
    %72 = arith.truncf %68 : vector<32x32xf32> to vector<32x32xbf16>
    %73 = arith.truncf %69 : vector<32x32xf32> to vector<32x32xbf16>
    %cst_45 = arith.constant dense<0.000000e+00> : vector<32x32xf32>
    %74 = tpu.matmul %72, %73, %cst_45 {dimension_numbers = #tpu.dot_dimension_numbers<[1], [1], [0], [0], [0, 0, 1, 0], [], []>} : vector<32x32xbf16>, vector<32x32xbf16>, vector<32x32xf32> -> vector<32x32xf32>
    %cst_46 = arith.constant 0.176776692 : f32
    %75 = vector.broadcast %cst_46 : f32 to vector<32x32xf32>
    %76 = arith.mulf %74, %75 : vector<32x32xf32>
    %cst_47 = arith.constant 0.000000e+00 : bf16
    %77 = vector.broadcast %cst_47 : bf16 to vector<32x32xbf16>
    %78 = arith.cmpf ogt, %0, %77 : vector<32x32xbf16>
    %cst_48 = arith.constant -1.000000e+30 : f32
    %79 = vector.broadcast %cst_48 : f32 to vector<32x32xf32>
    %80 = arith.select %78, %76, %79 : vector<32x32xi1>, vector<32x32xf32>
    %cst_49 = arith.constant dense<0xFF800000> : vector<32xf32>
    %81 = vector.multi_reduction <maximumf>, %80, %cst_49 [1] : vector<32x32xf32> to vector<32xf32>
    %82 = vector.shape_cast %81 : vector<32xf32> to vector<32x1xf32>
    %83 = vector.broadcast %82 : vector<32x1xf32> to vector<32x32xf32>
    %84 = arith.subf %80, %83 : vector<32x32xf32>
    %85 = math.exp %84 : vector<32x32xf32>
    %86 = arith.extui %78 : vector<32x32xi1> to vector<32x32xi32>
    %87 = arith.sitofp %86 : vector<32x32xi32> to vector<32x32xf32>
    %88 = arith.mulf %85, %87 : vector<32x32xf32>
    %cst_50 = arith.constant dense<0.000000e+00> : vector<32xf32>
    %89 = vector.multi_reduction <add>, %88, %cst_50 [1] : vector<32x32xf32> to vector<32xf32>
    %90 = vector.shape_cast %89 : vector<32xf32> to vector<32x1xf32>
    %cst_51 = arith.constant 1.000000e-30 : f32
    %91 = vector.broadcast %cst_51 : f32 to vector<32x1xf32>
    %92 = arith.maximumf %90, %91 : vector<32x1xf32>
    %93 = tpu.reciprocal %92 {approx = true} : vector<32x1xf32> -> vector<32x1xf32>
    %94 = vector.broadcast %93 : vector<32x1xf32> to vector<32x32xf32>
    %95 = arith.mulf %88, %94 : vector<32x32xf32>
    %cst_52 = arith.constant 0.000000e+00 : bf16
    %96 = vector.broadcast %cst_52 : bf16 to vector<32x32xbf16>
    %97 = arith.cmpf ogt, %1, %96 : vector<32x32xbf16>
    %cst_53 = arith.constant -1.000000e+30 : f32
    %98 = vector.broadcast %cst_53 : f32 to vector<32x32xf32>
    %99 = arith.select %97, %76, %98 : vector<32x32xi1>, vector<32x32xf32>
    %cst_54 = arith.constant dense<0xFF800000> : vector<32xf32>
    %100 = vector.multi_reduction <maximumf>, %99, %cst_54 [1] : vector<32x32xf32> to vector<32xf32>
    %101 = vector.shape_cast %100 : vector<32xf32> to vector<32x1xf32>
    %102 = vector.broadcast %101 : vector<32x1xf32> to vector<32x32xf32>
    %103 = arith.subf %99, %102 : vector<32x32xf32>
    %104 = math.exp %103 : vector<32x32xf32>
    %105 = arith.extui %97 : vector<32x32xi1> to vector<32x32xi32>
    %106 = arith.sitofp %105 : vector<32x32xi32> to vector<32x32xf32>
    %107 = arith.mulf %104, %106 : vector<32x32xf32>
    %cst_55 = arith.constant dense<0.000000e+00> : vector<32xf32>
    %108 = vector.multi_reduction <add>, %107, %cst_55 [1] : vector<32x32xf32> to vector<32xf32>
    %109 = vector.shape_cast %108 : vector<32xf32> to vector<32x1xf32>
    %cst_56 = arith.constant 1.000000e-30 : f32
    %110 = vector.broadcast %cst_56 : f32 to vector<32x1xf32>
    %111 = arith.maximumf %109, %110 : vector<32x1xf32>
    %112 = tpu.reciprocal %111 {approx = true} : vector<32x1xf32> -> vector<32x1xf32>
    %113 = vector.broadcast %112 : vector<32x1xf32> to vector<32x32xf32>
    %114 = arith.mulf %107, %113 : vector<32x32xf32>
    %115 = arith.truncf %95 : vector<32x32xf32> to vector<32x32xbf16>
    %116 = arith.truncf %70 : vector<32x32xf32> to vector<32x32xbf16>
    %cst_57 = arith.constant dense<0.000000e+00> : vector<32x32xf32>
    %117 = tpu.matmul %115, %116, %cst_57 {dimension_numbers = #tpu.dot_dimension_numbers<[1], [0], [0], [1], [0, 0, 1, 1], [], []>} : vector<32x32xbf16>, vector<32x32xbf16>, vector<32x32xf32> -> vector<32x32xf32>
    %118 = arith.addf %117, %71 : vector<32x32xf32>
    %119 = arith.truncf %114 : vector<32x32xf32> to vector<32x32xbf16>
    %120 = arith.truncf %70 : vector<32x32xf32> to vector<32x32xbf16>
    %cst_58 = arith.constant dense<0.000000e+00> : vector<32x32xf32>
    %121 = tpu.matmul %119, %120, %cst_58 {dimension_numbers = #tpu.dot_dimension_numbers<[1], [0], [0], [1], [0, 0, 1, 1], [], []>} : vector<32x32xbf16>, vector<32x32xbf16>, vector<32x32xf32> -> vector<32x32xf32>
    %122 = arith.addf %121, %71 : vector<32x32xf32>
    %123 = arith.truncf %95 : vector<32x32xf32> to vector<32x32xbf16>
    %124 = arith.truncf %118 : vector<32x32xf32> to vector<32x32xbf16>
    %cst_59 = arith.constant dense<0.000000e+00> : vector<32x32xf32>
    %125 = tpu.matmul %123, %124, %cst_59 {dimension_numbers = #tpu.dot_dimension_numbers<[0], [0], [1], [1], [0, 1, 1, 1], [], []>} : vector<32x32xbf16>, vector<32x32xbf16>, vector<32x32xf32> -> vector<32x32xf32>
    %126 = arith.truncf %114 : vector<32x32xf32> to vector<32x32xbf16>
    %127 = arith.truncf %122 : vector<32x32xf32> to vector<32x32xbf16>
    %cst_60 = arith.constant dense<0.000000e+00> : vector<32x32xf32>
    %128 = tpu.matmul %126, %127, %cst_60 {dimension_numbers = #tpu.dot_dimension_numbers<[0], [0], [1], [1], [0, 1, 1, 1], [], []>} : vector<32x32xbf16>, vector<32x32xbf16>, vector<32x32xf32> -> vector<32x32xf32>
    %cst_61 = arith.constant 5.000000e-01 : f32
    %129 = vector.broadcast %cst_61 : f32 to vector<32x32xf32>
    %130 = arith.mulf %129, %125 : vector<32x32xf32>
    %cst_62 = arith.constant 5.000000e-01 : f32
    %131 = vector.broadcast %cst_62 : f32 to vector<32x32xf32>
    %132 = arith.mulf %131, %128 : vector<32x32xf32>
    %133 = arith.addf %130, %132 : vector<32x32xf32>
    %cst_63 = arith.constant 0.000000e+00 : f32
    %134 = vector.broadcast %cst_63 : f32 to vector<32x32xf32>
    %135 = arith.maximumf %133, %134 : vector<32x32xf32>
    %c0_64 = arith.constant 0 : index
    %c0_65 = arith.constant 0 : index
    %136 = vector.load %arg17[%c0_64, %c0_65] : memref<32x128xbf16, #tpu.memory_space<vmem>>, vector<32x128xbf16>
    %c0_66 = arith.constant 0 : index
    %c0_67 = arith.constant 0 : index
    %137 = vector.load %arg18[%c0_66, %c0_67] : memref<1x128xf32, #tpu.memory_space<vmem>>, vector<1x128xf32>
    %138 = arith.truncf %135 : vector<32x32xf32> to vector<32x32xbf16>
    %cst_68 = arith.constant dense<0.000000e+00> : vector<32x128xf32>
    %139 = tpu.matmul %138, %136, %cst_68 {dimension_numbers = #tpu.dot_dimension_numbers<[1], [0], [0], [1], [0, 0, 1, 1], [], []>} : vector<32x32xbf16>, vector<32x128xbf16>, vector<32x128xf32> -> vector<32x128xf32>
    %140 = vector.broadcast %137 : vector<1x128xf32> to vector<32x128xf32>
    %141 = arith.addf %139, %140 : vector<32x128xf32>
    %142 = vector.extract_strided_slice %141 {offsets = [0, 0], sizes = [32, 32], strides = [1, 1]} : vector<32x128xf32> to vector<32x32xf32>
    %143 = vector.extract_strided_slice %141 {offsets = [0, 32], sizes = [32, 32], strides = [1, 1]} : vector<32x128xf32> to vector<32x32xf32>
    %144 = vector.extract_strided_slice %141 {offsets = [0, 64], sizes = [32, 32], strides = [1, 1]} : vector<32x128xf32> to vector<32x32xf32>
    %145 = vector.extract_strided_slice %141 {offsets = [0, 96], sizes = [32, 32], strides = [1, 1]} : vector<32x128xf32> to vector<32x32xf32>
    %146 = arith.truncf %142 : vector<32x32xf32> to vector<32x32xbf16>
    %147 = arith.truncf %143 : vector<32x32xf32> to vector<32x32xbf16>
    %cst_69 = arith.constant dense<0.000000e+00> : vector<32x32xf32>
    %148 = tpu.matmul %146, %147, %cst_69 {dimension_numbers = #tpu.dot_dimension_numbers<[1], [1], [0], [0], [0, 0, 1, 0], [], []>} : vector<32x32xbf16>, vector<32x32xbf16>, vector<32x32xf32> -> vector<32x32xf32>
    %cst_70 = arith.constant 0.176776692 : f32
    %149 = vector.broadcast %cst_70 : f32 to vector<32x32xf32>
    %150 = arith.mulf %148, %149 : vector<32x32xf32>
    %cst_71 = arith.constant 0.000000e+00 : bf16
    %151 = vector.broadcast %cst_71 : bf16 to vector<32x32xbf16>
    %152 = arith.cmpf ogt, %0, %151 : vector<32x32xbf16>
    %cst_72 = arith.constant -1.000000e+30 : f32
    %153 = vector.broadcast %cst_72 : f32 to vector<32x32xf32>
    %154 = arith.select %152, %150, %153 : vector<32x32xi1>, vector<32x32xf32>
    %cst_73 = arith.constant dense<0xFF800000> : vector<32xf32>
    %155 = vector.multi_reduction <maximumf>, %154, %cst_73 [1] : vector<32x32xf32> to vector<32xf32>
    %156 = vector.shape_cast %155 : vector<32xf32> to vector<32x1xf32>
    %157 = vector.broadcast %156 : vector<32x1xf32> to vector<32x32xf32>
    %158 = arith.subf %154, %157 : vector<32x32xf32>
    %159 = math.exp %158 : vector<32x32xf32>
    %160 = arith.extui %152 : vector<32x32xi1> to vector<32x32xi32>
    %161 = arith.sitofp %160 : vector<32x32xi32> to vector<32x32xf32>
    %162 = arith.mulf %159, %161 : vector<32x32xf32>
    %cst_74 = arith.constant dense<0.000000e+00> : vector<32xf32>
    %163 = vector.multi_reduction <add>, %162, %cst_74 [1] : vector<32x32xf32> to vector<32xf32>
    %164 = vector.shape_cast %163 : vector<32xf32> to vector<32x1xf32>
    %cst_75 = arith.constant 1.000000e-30 : f32
    %165 = vector.broadcast %cst_75 : f32 to vector<32x1xf32>
    %166 = arith.maximumf %164, %165 : vector<32x1xf32>
    %167 = tpu.reciprocal %166 {approx = true} : vector<32x1xf32> -> vector<32x1xf32>
    %168 = vector.broadcast %167 : vector<32x1xf32> to vector<32x32xf32>
    %169 = arith.mulf %162, %168 : vector<32x32xf32>
    %170 = arith.truncf %169 : vector<32x32xf32> to vector<32x32xbf16>
    %171 = arith.truncf %144 : vector<32x32xf32> to vector<32x32xbf16>
    %cst_76 = arith.constant dense<0.000000e+00> : vector<32x32xf32>
    %172 = tpu.matmul %170, %171, %cst_76 {dimension_numbers = #tpu.dot_dimension_numbers<[1], [0], [0], [1], [0, 0, 1, 1], [], []>} : vector<32x32xbf16>, vector<32x32xbf16>, vector<32x32xf32> -> vector<32x32xf32>
    %173 = arith.addf %172, %145 : vector<32x32xf32>
    %174 = arith.truncf %173 : vector<32x32xf32> to vector<32x32xbf16>
    %cst_77 = arith.constant dense<0.000000e+00> : vector<32x128xf32>
    %175 = tpu.matmul %174, %136, %cst_77 {dimension_numbers = #tpu.dot_dimension_numbers<[1], [0], [0], [1], [0, 0, 1, 1], [], []>} : vector<32x32xbf16>, vector<32x128xbf16>, vector<32x128xf32> -> vector<32x128xf32>
    %176 = vector.broadcast %137 : vector<1x128xf32> to vector<32x128xf32>
    %177 = arith.addf %175, %176 : vector<32x128xf32>
    %178 = vector.extract_strided_slice %177 {offsets = [0, 0], sizes = [32, 32], strides = [1, 1]} : vector<32x128xf32> to vector<32x32xf32>
    %179 = vector.extract_strided_slice %177 {offsets = [0, 32], sizes = [32, 32], strides = [1, 1]} : vector<32x128xf32> to vector<32x32xf32>
    %180 = vector.extract_strided_slice %177 {offsets = [0, 64], sizes = [32, 32], strides = [1, 1]} : vector<32x128xf32> to vector<32x32xf32>
    %181 = vector.extract_strided_slice %177 {offsets = [0, 96], sizes = [32, 32], strides = [1, 1]} : vector<32x128xf32> to vector<32x32xf32>
    %182 = arith.truncf %178 : vector<32x32xf32> to vector<32x32xbf16>
    %183 = arith.truncf %179 : vector<32x32xf32> to vector<32x32xbf16>
    %cst_78 = arith.constant dense<0.000000e+00> : vector<32x32xf32>
    %184 = tpu.matmul %182, %183, %cst_78 {dimension_numbers = #tpu.dot_dimension_numbers<[1], [1], [0], [0], [0, 0, 1, 0], [], []>} : vector<32x32xbf16>, vector<32x32xbf16>, vector<32x32xf32> -> vector<32x32xf32>
    %cst_79 = arith.constant 0.176776692 : f32
    %185 = vector.broadcast %cst_79 : f32 to vector<32x32xf32>
    %186 = arith.mulf %184, %185 : vector<32x32xf32>
    %cst_80 = arith.constant 0.000000e+00 : bf16
    %187 = vector.broadcast %cst_80 : bf16 to vector<32x32xbf16>
    %188 = arith.cmpf ogt, %1, %187 : vector<32x32xbf16>
    %cst_81 = arith.constant -1.000000e+30 : f32
    %189 = vector.broadcast %cst_81 : f32 to vector<32x32xf32>
    %190 = arith.select %188, %186, %189 : vector<32x32xi1>, vector<32x32xf32>
    %cst_82 = arith.constant dense<0xFF800000> : vector<32xf32>
    %191 = vector.multi_reduction <maximumf>, %190, %cst_82 [1] : vector<32x32xf32> to vector<32xf32>
    %192 = vector.shape_cast %191 : vector<32xf32> to vector<32x1xf32>
    %193 = vector.broadcast %192 : vector<32x1xf32> to vector<32x32xf32>
    %194 = arith.subf %190, %193 : vector<32x32xf32>
    %195 = math.exp %194 : vector<32x32xf32>
    %196 = arith.extui %188 : vector<32x32xi1> to vector<32x32xi32>
    %197 = arith.sitofp %196 : vector<32x32xi32> to vector<32x32xf32>
    %198 = arith.mulf %195, %197 : vector<32x32xf32>
    %cst_83 = arith.constant dense<0.000000e+00> : vector<32xf32>
    %199 = vector.multi_reduction <add>, %198, %cst_83 [1] : vector<32x32xf32> to vector<32xf32>
    %200 = vector.shape_cast %199 : vector<32xf32> to vector<32x1xf32>
    %cst_84 = arith.constant 1.000000e-30 : f32
    %201 = vector.broadcast %cst_84 : f32 to vector<32x1xf32>
    %202 = arith.maximumf %200, %201 : vector<32x1xf32>
    %203 = tpu.reciprocal %202 {approx = true} : vector<32x1xf32> -> vector<32x1xf32>
    %204 = vector.broadcast %203 : vector<32x1xf32> to vector<32x32xf32>
    %205 = arith.mulf %198, %204 : vector<32x32xf32>
    %206 = arith.truncf %205 : vector<32x32xf32> to vector<32x32xbf16>
    %207 = arith.truncf %180 : vector<32x32xf32> to vector<32x32xbf16>
    %cst_85 = arith.constant dense<0.000000e+00> : vector<32x32xf32>
    %208 = tpu.matmul %206, %207, %cst_85 {dimension_numbers = #tpu.dot_dimension_numbers<[1], [0], [0], [1], [0, 0, 1, 1], [], []>} : vector<32x32xbf16>, vector<32x32xbf16>, vector<32x32xf32> -> vector<32x32xf32>
    %209 = arith.addf %208, %181 : vector<32x32xf32>
    %210 = arith.truncf %169 : vector<32x32xf32> to vector<32x32xbf16>
    %211 = arith.truncf %173 : vector<32x32xf32> to vector<32x32xbf16>
    %cst_86 = arith.constant dense<0.000000e+00> : vector<32x32xf32>
    %212 = tpu.matmul %210, %211, %cst_86 {dimension_numbers = #tpu.dot_dimension_numbers<[0], [0], [1], [1], [0, 1, 1, 1], [], []>} : vector<32x32xbf16>, vector<32x32xbf16>, vector<32x32xf32> -> vector<32x32xf32>
    %213 = arith.truncf %205 : vector<32x32xf32> to vector<32x32xbf16>
    %214 = arith.truncf %209 : vector<32x32xf32> to vector<32x32xbf16>
    %cst_87 = arith.constant dense<0.000000e+00> : vector<32x32xf32>
    %215 = tpu.matmul %213, %214, %cst_87 {dimension_numbers = #tpu.dot_dimension_numbers<[0], [0], [1], [1], [0, 1, 1, 1], [], []>} : vector<32x32xbf16>, vector<32x32xbf16>, vector<32x32xf32> -> vector<32x32xf32>
    %cst_88 = arith.constant 5.000000e-01 : f32
    %216 = vector.broadcast %cst_88 : f32 to vector<32x32xf32>
    %217 = arith.mulf %216, %212 : vector<32x32xf32>
    %cst_89 = arith.constant 5.000000e-01 : f32
    %218 = vector.broadcast %cst_89 : f32 to vector<32x32xf32>
    %219 = arith.mulf %218, %215 : vector<32x32xf32>
    %220 = arith.addf %217, %219 : vector<32x32xf32>
    %cst_90 = arith.constant 0.000000e+00 : f32
    %221 = vector.broadcast %cst_90 : f32 to vector<32x32xf32>
    %222 = arith.maximumf %220, %221 : vector<32x32xf32>
    %c0_91 = arith.constant 0 : index
    %c0_92 = arith.constant 0 : index
    %223 = vector.load %arg19[%c0_91, %c0_92] : memref<32x128xbf16, #tpu.memory_space<vmem>>, vector<32x128xbf16>
    %c0_93 = arith.constant 0 : index
    %c0_94 = arith.constant 0 : index
    %224 = vector.load %arg20[%c0_93, %c0_94] : memref<1x128xf32, #tpu.memory_space<vmem>>, vector<1x128xf32>
    %225 = arith.truncf %222 : vector<32x32xf32> to vector<32x32xbf16>
    %cst_95 = arith.constant dense<0.000000e+00> : vector<32x128xf32>
    %226 = tpu.matmul %225, %223, %cst_95 {dimension_numbers = #tpu.dot_dimension_numbers<[1], [0], [0], [1], [0, 0, 1, 1], [], []>} : vector<32x32xbf16>, vector<32x128xbf16>, vector<32x128xf32> -> vector<32x128xf32>
    %227 = vector.broadcast %224 : vector<1x128xf32> to vector<32x128xf32>
    %228 = arith.addf %226, %227 : vector<32x128xf32>
    %229 = vector.extract_strided_slice %228 {offsets = [0, 0], sizes = [32, 32], strides = [1, 1]} : vector<32x128xf32> to vector<32x32xf32>
    %230 = vector.extract_strided_slice %228 {offsets = [0, 32], sizes = [32, 32], strides = [1, 1]} : vector<32x128xf32> to vector<32x32xf32>
    %231 = vector.extract_strided_slice %228 {offsets = [0, 64], sizes = [32, 32], strides = [1, 1]} : vector<32x128xf32> to vector<32x32xf32>
    %232 = vector.extract_strided_slice %228 {offsets = [0, 96], sizes = [32, 32], strides = [1, 1]} : vector<32x128xf32> to vector<32x32xf32>
    %233 = arith.truncf %229 : vector<32x32xf32> to vector<32x32xbf16>
    %234 = arith.truncf %230 : vector<32x32xf32> to vector<32x32xbf16>
    %cst_96 = arith.constant dense<0.000000e+00> : vector<32x32xf32>
    %235 = tpu.matmul %233, %234, %cst_96 {dimension_numbers = #tpu.dot_dimension_numbers<[1], [1], [0], [0], [0, 0, 1, 0], [], []>} : vector<32x32xbf16>, vector<32x32xbf16>, vector<32x32xf32> -> vector<32x32xf32>
    %cst_97 = arith.constant 0.176776692 : f32
    %236 = vector.broadcast %cst_97 : f32 to vector<32x32xf32>
    %237 = arith.mulf %235, %236 : vector<32x32xf32>
    %cst_98 = arith.constant 0.000000e+00 : bf16
    %238 = vector.broadcast %cst_98 : bf16 to vector<32x32xbf16>
    %239 = arith.cmpf ogt, %0, %238 : vector<32x32xbf16>
    %cst_99 = arith.constant -1.000000e+30 : f32
    %240 = vector.broadcast %cst_99 : f32 to vector<32x32xf32>
    %241 = arith.select %239, %237, %240 : vector<32x32xi1>, vector<32x32xf32>
    %cst_100 = arith.constant dense<0xFF800000> : vector<32xf32>
    %242 = vector.multi_reduction <maximumf>, %241, %cst_100 [1] : vector<32x32xf32> to vector<32xf32>
    %243 = vector.shape_cast %242 : vector<32xf32> to vector<32x1xf32>
    %244 = vector.broadcast %243 : vector<32x1xf32> to vector<32x32xf32>
    %245 = arith.subf %241, %244 : vector<32x32xf32>
    %246 = math.exp %245 : vector<32x32xf32>
    %247 = arith.extui %239 : vector<32x32xi1> to vector<32x32xi32>
    %248 = arith.sitofp %247 : vector<32x32xi32> to vector<32x32xf32>
    %249 = arith.mulf %246, %248 : vector<32x32xf32>
    %cst_101 = arith.constant dense<0.000000e+00> : vector<32xf32>
    %250 = vector.multi_reduction <add>, %249, %cst_101 [1] : vector<32x32xf32> to vector<32xf32>
    %251 = vector.shape_cast %250 : vector<32xf32> to vector<32x1xf32>
    %cst_102 = arith.constant 1.000000e-30 : f32
    %252 = vector.broadcast %cst_102 : f32 to vector<32x1xf32>
    %253 = arith.maximumf %251, %252 : vector<32x1xf32>
    %254 = tpu.reciprocal %253 {approx = true} : vector<32x1xf32> -> vector<32x1xf32>
    %255 = vector.broadcast %254 : vector<32x1xf32> to vector<32x32xf32>
    %256 = arith.mulf %249, %255 : vector<32x32xf32>
    %cst_103 = arith.constant 0.000000e+00 : bf16
    %257 = vector.broadcast %cst_103 : bf16 to vector<32x32xbf16>
    %258 = arith.cmpf ogt, %1, %257 : vector<32x32xbf16>
    %cst_104 = arith.constant -1.000000e+30 : f32
    %259 = vector.broadcast %cst_104 : f32 to vector<32x32xf32>
    %260 = arith.select %258, %237, %259 : vector<32x32xi1>, vector<32x32xf32>
    %cst_105 = arith.constant dense<0xFF800000> : vector<32xf32>
    %261 = vector.multi_reduction <maximumf>, %260, %cst_105 [1] : vector<32x32xf32> to vector<32xf32>
    %262 = vector.shape_cast %261 : vector<32xf32> to vector<32x1xf32>
    %263 = vector.broadcast %262 : vector<32x1xf32> to vector<32x32xf32>
    %264 = arith.subf %260, %263 : vector<32x32xf32>
    %265 = math.exp %264 : vector<32x32xf32>
    %266 = arith.extui %258 : vector<32x32xi1> to vector<32x32xi32>
    %267 = arith.sitofp %266 : vector<32x32xi32> to vector<32x32xf32>
    %268 = arith.mulf %265, %267 : vector<32x32xf32>
    %cst_106 = arith.constant dense<0.000000e+00> : vector<32xf32>
    %269 = vector.multi_reduction <add>, %268, %cst_106 [1] : vector<32x32xf32> to vector<32xf32>
    %270 = vector.shape_cast %269 : vector<32xf32> to vector<32x1xf32>
    %cst_107 = arith.constant 1.000000e-30 : f32
    %271 = vector.broadcast %cst_107 : f32 to vector<32x1xf32>
    %272 = arith.maximumf %270, %271 : vector<32x1xf32>
    %273 = tpu.reciprocal %272 {approx = true} : vector<32x1xf32> -> vector<32x1xf32>
    %274 = vector.broadcast %273 : vector<32x1xf32> to vector<32x32xf32>
    %275 = arith.mulf %268, %274 : vector<32x32xf32>
    %276 = arith.truncf %256 : vector<32x32xf32> to vector<32x32xbf16>
    %277 = arith.truncf %231 : vector<32x32xf32> to vector<32x32xbf16>
    %cst_108 = arith.constant dense<0.000000e+00> : vector<32x32xf32>
    %278 = tpu.matmul %276, %277, %cst_108 {dimension_numbers = #tpu.dot_dimension_numbers<[1], [0], [0], [1], [0, 0, 1, 1], [], []>} : vector<32x32xbf16>, vector<32x32xbf16>, vector<32x32xf32> -> vector<32x32xf32>
    %279 = arith.addf %278, %232 : vector<32x32xf32>
    %280 = arith.truncf %275 : vector<32x32xf32> to vector<32x32xbf16>
    %281 = arith.truncf %231 : vector<32x32xf32> to vector<32x32xbf16>
    %cst_109 = arith.constant dense<0.000000e+00> : vector<32x32xf32>
    %282 = tpu.matmul %280, %281, %cst_109 {dimension_numbers = #tpu.dot_dimension_numbers<[1], [0], [0], [1], [0, 0, 1, 1], [], []>} : vector<32x32xbf16>, vector<32x32xbf16>, vector<32x32xf32> -> vector<32x32xf32>
    %283 = arith.addf %282, %232 : vector<32x32xf32>
    %284 = arith.truncf %256 : vector<32x32xf32> to vector<32x32xbf16>
    %285 = arith.truncf %279 : vector<32x32xf32> to vector<32x32xbf16>
    %cst_110 = arith.constant dense<0.000000e+00> : vector<32x32xf32>
    %286 = tpu.matmul %284, %285, %cst_110 {dimension_numbers = #tpu.dot_dimension_numbers<[0], [0], [1], [1], [0, 1, 1, 1], [], []>} : vector<32x32xbf16>, vector<32x32xbf16>, vector<32x32xf32> -> vector<32x32xf32>
    %287 = arith.truncf %275 : vector<32x32xf32> to vector<32x32xbf16>
    %288 = arith.truncf %283 : vector<32x32xf32> to vector<32x32xbf16>
    %cst_111 = arith.constant dense<0.000000e+00> : vector<32x32xf32>
    %289 = tpu.matmul %287, %288, %cst_111 {dimension_numbers = #tpu.dot_dimension_numbers<[0], [0], [1], [1], [0, 1, 1, 1], [], []>} : vector<32x32xbf16>, vector<32x32xbf16>, vector<32x32xf32> -> vector<32x32xf32>
    %cst_112 = arith.constant 5.000000e-01 : f32
    %290 = vector.broadcast %cst_112 : f32 to vector<32x32xf32>
    %291 = arith.mulf %290, %286 : vector<32x32xf32>
    %cst_113 = arith.constant 5.000000e-01 : f32
    %292 = vector.broadcast %cst_113 : f32 to vector<32x32xf32>
    %293 = arith.mulf %292, %289 : vector<32x32xf32>
    %294 = arith.addf %291, %293 : vector<32x32xf32>
    %c0_114 = arith.constant 0 : index
    %c0_115 = arith.constant 0 : index
    %295 = vector.load %arg21[%c0_114, %c0_115] : memref<96x64xf32, #tpu.memory_space<vmem>>, vector<96x64xf32>
    %cst_116 = arith.constant 1.000000e+00 : f32
    %296 = vector.broadcast %cst_116 : f32 to vector<1x64xf32>
    %297 = arith.mulf %60, %60 : vector<32x64xf32>
    %cst_117 = arith.constant dense<0.000000e+00> : vector<32xf32>
    %298 = vector.multi_reduction <add>, %297, %cst_117 [1] : vector<32x64xf32> to vector<32xf32>
    %299 = vector.shape_cast %298 : vector<32xf32> to vector<32x1xf32>
    %300 = arith.mulf %295, %295 : vector<96x64xf32>
    %cst_118 = arith.constant dense<0.000000e+00> : vector<1x96xf32>
    %301 = tpu.matmul %296, %300, %cst_118 {dimension_numbers = #tpu.dot_dimension_numbers<[1], [1], [0], [0], [0, 0, 1, 0], [], []>} : vector<1x64xf32>, vector<96x64xf32>, vector<1x96xf32> -> vector<1x96xf32>
    %cst_119 = arith.constant dense<0.000000e+00> : vector<32x96xf32>
    %302 = tpu.matmul %60, %295, %cst_119 {dimension_numbers = #tpu.dot_dimension_numbers<[1], [1], [0], [0], [0, 0, 1, 0], [], []>} : vector<32x64xf32>, vector<96x64xf32>, vector<32x96xf32> -> vector<32x96xf32>
    %303 = vector.broadcast %299 : vector<32x1xf32> to vector<32x96xf32>
    %304 = vector.broadcast %301 : vector<1x96xf32> to vector<32x96xf32>
    %305 = arith.addf %303, %304 : vector<32x96xf32>
    %cst_120 = arith.constant 2.000000e+00 : f32
    %306 = vector.broadcast %cst_120 : f32 to vector<32x96xf32>
    %307 = arith.mulf %306, %302 : vector<32x96xf32>
    %308 = arith.subf %305, %307 : vector<32x96xf32>
    %cst_121 = arith.constant dense<0x7F800000> : vector<32xf32>
    %309 = vector.multi_reduction <minimumf>, %308, %cst_121 [1] : vector<32x96xf32> to vector<32xf32>
    %310 = vector.shape_cast %309 : vector<32xf32> to vector<32x1xf32>
    %311 = tpu.iota {dimensions = array<i32: 1>} : vector<32x96xi32>
    %312 = vector.broadcast %310 : vector<32x1xf32> to vector<32x96xf32>
    %313 = arith.cmpf ole, %308, %312 : vector<32x96xf32>
    %c96_i32 = arith.constant 96 : i32
    %314 = vector.broadcast %c96_i32 : i32 to vector<32x96xi32>
    %315 = arith.select %313, %311, %314 : vector<32x96xi1>, vector<32x96xi32>
    %cst_122 = arith.constant dense<2147483647> : vector<32xi32>
    %316 = vector.multi_reduction <minsi>, %315, %cst_122 [1] : vector<32x96xi32> to vector<32xi32>
    %317 = vector.shape_cast %316 : vector<32xi32> to vector<32x1xi32>
    %318 = vector.broadcast %317 : vector<32x1xi32> to vector<32x96xi32>
    %319 = arith.cmpi eq, %311, %318 : vector<32x96xi32>
    %320 = arith.extui %319 : vector<32x96xi1> to vector<32x96xi32>
    %321 = arith.sitofp %320 : vector<32x96xi32> to vector<32x96xf32>
    %cst_123 = arith.constant dense<0.000000e+00> : vector<32x64xf32>
    %322 = tpu.matmul %321, %295, %cst_123 {dimension_numbers = #tpu.dot_dimension_numbers<[1], [0], [0], [1], [0, 0, 1, 1], [], []>} : vector<32x96xf32>, vector<96x64xf32>, vector<32x64xf32> -> vector<32x64xf32>
    %323 = tpu.concatenate %322, %294 in 1 : vector<32x64xf32>, vector<32x32xf32> -> vector<32x96xf32>
    %c0_124 = arith.constant 0 : index
    %c0_125 = arith.constant 0 : index
    %324 = vector.load %arg29[%c0_124, %c0_125] : memref<32x96xf32, #tpu.memory_space<vmem>>, vector<32x96xf32>
    tpu.vector_store %arg29[%c0_124, %c0_125], %323 {strides = array<i32>} : memref<32x96xf32, #tpu.memory_space<vmem>>, vector<32x96xf32>,
    %c0_126 = arith.constant 0 : index
    %c0_127 = arith.constant 0 : index
    %325 = vector.load %arg22[%c0_126, %c0_127] : memref<96x48xbf16, #tpu.memory_space<vmem>>, vector<96x48xbf16>
    %326 = arith.truncf %323 : vector<32x96xf32> to vector<32x96xbf16>
    %cst_128 = arith.constant dense<0.000000e+00> : vector<32x48xf32>
    %327 = tpu.matmul %326, %325, %cst_128 {dimension_numbers = #tpu.dot_dimension_numbers<[1], [0], [0], [1], [0, 0, 1, 1], [], []>} : vector<32x96xbf16>, vector<96x48xbf16>, vector<32x48xf32> -> vector<32x48xf32>
    %c0_129 = arith.constant 0 : index
    %c0_130 = arith.constant 0 : index
    %328 = vector.load %arg23[%c0_129, %c0_130] : memref<1x48xf32, #tpu.memory_space<vmem>>, vector<1x48xf32>
    %329 = vector.broadcast %328 : vector<1x48xf32> to vector<32x48xf32>
    %330 = arith.addf %327, %329 : vector<32x48xf32>
    %c0_131 = arith.constant 0 : index
    %c0_132 = arith.constant 0 : index
    %331 = vector.load %arg24[%c0_131, %c0_132] : memref<1x48xf32, #tpu.memory_space<vmem>>, vector<1x48xf32>
    %c0_133 = arith.constant 0 : index
    %c0_134 = arith.constant 0 : index
    %332 = vector.load %arg25[%c0_133, %c0_134] : memref<1x48xf32, #tpu.memory_space<vmem>>, vector<1x48xf32>
    %c0_135 = arith.constant 0 : index
    %c0_136 = arith.constant 0 : index
    %333 = vector.load %arg26[%c0_135, %c0_136] : memref<1x48xf32, #tpu.memory_space<vmem>>, vector<1x48xf32>
    %c0_137 = arith.constant 0 : index
    %c0_138 = arith.constant 0 : index
    %334 = vector.load %arg27[%c0_137, %c0_138] : memref<1x48xf32, #tpu.memory_space<vmem>>, vector<1x48xf32>
    %335 = vector.broadcast %333 : vector<1x48xf32> to vector<32x48xf32>
    %336 = arith.subf %330, %335 : vector<32x48xf32>
    %cst_139 = arith.constant 9.99999974E-5 : f32
    %337 = vector.broadcast %cst_139 : f32 to vector<1x48xf32>
    %338 = arith.addf %334, %337 : vector<1x48xf32>
    %339 = math.rsqrt %338 : vector<1x48xf32>
    %340 = vector.broadcast %339 : vector<1x48xf32> to vector<32x48xf32>
    %341 = arith.mulf %336, %340 : vector<32x48xf32>
    %342 = vector.broadcast %331 : vector<1x48xf32> to vector<32x48xf32>
    %343 = arith.mulf %341, %342 : vector<32x48xf32>
    %344 = vector.broadcast %332 : vector<1x48xf32> to vector<32x48xf32>
    %345 = arith.addf %343, %344 : vector<32x48xf32>
    %cst_140 = arith.constant 0.000000e+00 : f32
    %346 = vector.broadcast %cst_140 : f32 to vector<32x48xf32>
    %347 = arith.minimumf %345, %346 : vector<32x48xf32>
    %348 = math.exp %347 : vector<32x48xf32>
    %cst_141 = arith.constant 1.000000e+00 : f32
    %349 = vector.broadcast %cst_141 : f32 to vector<32x48xf32>
    %350 = arith.subf %348, %349 : vector<32x48xf32>
    %cst_142 = arith.constant 0.000000e+00 : f32
    %351 = vector.broadcast %cst_142 : f32 to vector<32x48xf32>
    %352 = arith.cmpf ogt, %345, %351 : vector<32x48xf32>
    %353 = arith.select %352, %345, %350 : vector<32x48xi1>, vector<32x48xf32>
    %c0_143 = arith.constant 0 : index
    %c0_144 = arith.constant 0 : index
    %354 = vector.load %arg30[%c0_143, %c0_144] : memref<32x48xf32, #tpu.memory_space<vmem>>, vector<32x48xf32>
    tpu.vector_store %arg30[%c0_143, %c0_144], %353 {strides = array<i32>} : memref<32x48xf32, #tpu.memory_space<vmem>>, vector<32x48xf32>,
    %c0_145 = arith.constant 0 : index
    %c0_146 = arith.constant 0 : index
    %355 = vector.load %arg28[%c0_145, %c0_146] : memref<8x96xf32, #tpu.memory_space<vmem>>, vector<8x96xf32>
    %cst_147 = arith.constant 1.000000e+00 : f32
    %356 = vector.broadcast %cst_147 : f32 to vector<1x96xf32>
    %357 = arith.mulf %323, %323 : vector<32x96xf32>
    %cst_148 = arith.constant dense<0.000000e+00> : vector<32xf32>
    %358 = vector.multi_reduction <add>, %357, %cst_148 [1] : vector<32x96xf32> to vector<32xf32>
    %359 = vector.shape_cast %358 : vector<32xf32> to vector<32x1xf32>
    %360 = arith.mulf %355, %355 : vector<8x96xf32>
    %cst_149 = arith.constant dense<0.000000e+00> : vector<1x8xf32>
    %361 = tpu.matmul %356, %360, %cst_149 {dimension_numbers = #tpu.dot_dimension_numbers<[1], [1], [0], [0], [0, 0, 1, 0], [], []>} : vector<1x96xf32>, vector<8x96xf32>, vector<1x8xf32> -> vector<1x8xf32>
    %cst_150 = arith.constant dense<0.000000e+00> : vector<32x8xf32>
    %362 = tpu.matmul %323, %355, %cst_150 {dimension_numbers = #tpu.dot_dimension_numbers<[1], [1], [0], [0], [0, 0, 1, 0], [], []>} : vector<32x96xf32>, vector<8x96xf32>, vector<32x8xf32> -> vector<32x8xf32>
    %363 = vector.broadcast %359 : vector<32x1xf32> to vector<32x8xf32>
    %364 = vector.broadcast %361 : vector<1x8xf32> to vector<32x8xf32>
    %365 = arith.addf %363, %364 : vector<32x8xf32>
    %cst_151 = arith.constant 2.000000e+00 : f32
    %366 = vector.broadcast %cst_151 : f32 to vector<32x8xf32>
    %367 = arith.mulf %366, %362 : vector<32x8xf32>
    %368 = arith.subf %365, %367 : vector<32x8xf32>
    %cst_152 = arith.constant 0.000000e+00 : f32
    %369 = vector.broadcast %cst_152 : f32 to vector<32x8xf32>
    %370 = arith.maximumf %368, %369 : vector<32x8xf32>
    %cst_153 = arith.constant 1.000000e+00 : f32
    %371 = vector.broadcast %cst_153 : f32 to vector<32x8xf32>
    %372 = arith.divf %370, %371 : vector<32x8xf32>
    %cst_154 = arith.constant 1.000000e+00 : f32
    %373 = vector.broadcast %cst_154 : f32 to vector<32x8xf32>
    %374 = arith.addf %373, %372 : vector<32x8xf32>
    %cst_155 = arith.constant 1.000000e+00 : f32
    %375 = vector.broadcast %cst_155 : f32 to vector<32x8xf32>
    %376 = arith.divf %375, %374 : vector<32x8xf32>
    %cst_156 = arith.constant dense<0.000000e+00> : vector<32xf32>
    %377 = vector.multi_reduction <add>, %376, %cst_156 [1] : vector<32x8xf32> to vector<32xf32>
    %378 = vector.shape_cast %377 : vector<32xf32> to vector<32x1xf32>
    %379 = vector.broadcast %378 : vector<32x1xf32> to vector<32x8xf32>
    %380 = arith.divf %376, %379 : vector<32x8xf32>
    %c0_157 = arith.constant 0 : index
    %c0_158 = arith.constant 0 : index
    %381 = vector.load %arg31[%c0_157, %c0_158] : memref<32x8xf32, #tpu.memory_space<vmem>>, vector<32x8xf32>
    tpu.vector_store %arg31[%c0_157, %c0_158], %380 {strides = array<i32>} : memref<32x8xf32, #tpu.memory_space<vmem>>, vector<32x8xf32>,
    return
  }
}

</mosaic_0001>

<llo_original>
// kernel: st_transformer_adaptive_forward.1
$region0: #{st_transformer_adaptive_forward.1}
  #allocation0 [shape = 'u32[]', space=smem, size = 0x4, offset = 0x4, fixed_abs, tag = 'smem constant byte address 0x4 - core index']
  #allocation1 [shape = 'u32[144,128]{1,0:T(1,128)}', space=vmem, size = 0x12000, scoped, tag = 'internal scratch']
  %s0 = inlined_call_operand.smem [shape: u32[33], index: -1, kind: input, shape index: {}]
  %s1 = sld [smem:[%s0]]
  %s2 = scalar_lea.smem %s0, 1
  %s3 = sld [smem:[%s2]]
  %s4 = scalar_lea.smem %s0, 2
  %s5 = sld [smem:[%s4]]
  %s6 = scalar_lea.smem %s0, 3
  %s7 = sld [smem:[%s6]]
  %s8 = scalar_lea.smem %s0, 4
  %s9 = sld [smem:[%s8]]
  %s10 = scalar_lea.smem %s0, 5
  %s11 = sld [smem:[%s10]]
  %s12 = scalar_lea.smem %s0, 6
  %s13 = sld [smem:[%s12]]
  %s14 = scalar_lea.smem %s0, 7
  %s15 = sld [smem:[%s14]]
  %s16 = scalar_lea.smem %s0, 8
  %s17 = sld [smem:[%s16]]
  %s18 = scalar_lea.smem %s0, 9
  %s19 = sld [smem:[%s18]]
  %s20 = scalar_lea.smem %s0, 10
  %s21 = sld [smem:[%s20]]
  %s22 = scalar_lea.smem %s0, 11
  %s23 = sld [smem:[%s22]]
  %s24 = scalar_lea.smem %s0, 12
  %s25 = sld [smem:[%s24]]
  %s26 = scalar_lea.smem %s0, 13
  %s27 = sld [smem:[%s26]]
  %s28 = scalar_lea.smem %s0, 14
  %s29 = sld [smem:[%s28]]
  %s30 = scalar_lea.smem %s0, 15
  %s31 = sld [smem:[%s30]]
  %s32 = scalar_lea.smem %s0, 16
  %s33 = sld [smem:[%s32]]
  %s34 = scalar_lea.smem %s0, 17
  %s35 = sld [smem:[%s34]]
  %s36 = scalar_lea.smem %s0, 18
  %s37 = sld [smem:[%s36]]
  %s38 = scalar_lea.smem %s0, 19
  %s39 = sld [smem:[%s38]]
  %s40 = scalar_lea.smem %s0, 20
  %s41 = sld [smem:[%s40]]
  %s42 = scalar_lea.smem %s0, 21
  %s43 = sld [smem:[%s42]]
  %s44 = scalar_lea.smem %s0, 22
  %s45 = sld [smem:[%s44]]
  %s46 = scalar_lea.smem %s0, 23
  %s47 = sld [smem:[%s46]]
  %s48 = scalar_lea.smem %s0, 24
  %s49 = sld [smem:[%s48]]
  %s50 = scalar_lea.smem %s0, 25
  %s51 = sld [smem:[%s50]]
  %s52 = scalar_lea.smem %s0, 26
  %s53 = sld [smem:[%s52]]
  %s54 = scalar_lea.smem %s0, 27
  %s55 = sld [smem:[%s54]]
  %s56 = scalar_lea.smem %s0, 28
  %s57 = sld [smem:[%s56]]
  %s58 = scalar_lea.smem %s0, 29
  %s59 = sld [smem:[%s58]]
  %s60 = scalar_lea.smem %s0, 30
  %s61 = sld [smem:[%s60]]
  %s62 = scalar_lea.smem %s0, 31
  %s63 = sld [smem:[%s62]]
  %s64 = scalar_lea.smem %s0, 32
  %s65 = sld [smem:[%s64]]
  %66 = xla_tuple %s59, %s61, %s63, %s65
  %s67 = sld [smem:[#allocation0]]
  $region150: #{st_transformer_adaptive_forward.1} parent=0
    _
  %s69 = ssub.s32 1, %s67
  %s70 = scalar_select 0, %s69, %s67
  $region1: #{st_transformer_adaptive_forward.1} parent=0
    #allocation2 [shape = 'u8[16384]{0}', space=vmem, size = 0x4000, scoped, tag = 'output window, operand 0, single buffered']
    #allocation3 [shape = 's32[1]{0}', space=sflag, size = 0x4, scoped, tag = 'scoped memory for st_transformer_adaptive_forward.1']
    #allocation4 [shape = 'u8[16384]{0}', space=vmem, size = 0x4000, scoped, tag = 'output window, operand 1, single buffered']
    #allocation5 [shape = 's32[1]{0}', space=sflag, size = 0x4, scoped, tag = 'scoped memory for st_transformer_adaptive_forward.1']
    #allocation6 [shape = 'u8[16384]{0}', space=vmem, size = 0x4000, scoped, tag = 'output window, operand 3, single buffered']
    %71 = vsyncpa [#allocation3], 0
    %72 = vsyncpa [#allocation5], 0
    // Predicated region
    $region2: #{st_transformer_adaptive_forward.1} parent=1 // pred_check
      _
    $region3: #{st_transformer_adaptive_forward.1} parent=1 // pred_check_branch
      %74 = sbr.rel (0) target = $region5
    $region4: #{st_transformer_adaptive_forward.1} parent=1 // pred_region
      _
    $region5: #{st_transformer_adaptive_forward.1} parent=1 // pred_fallthru
      _
    // Predicated region
    $region6: #{st_transformer_adaptive_forward.1} parent=1 // pred_check
      _
    $region7: #{st_transformer_adaptive_forward.1} parent=1 // pred_check_branch
      %76 = sbr.rel (0) target = $region9
    $region8: #{st_transformer_adaptive_forward.1} parent=1 // pred_region
      _
    $region9: #{st_transformer_adaptive_forward.1} parent=1 // pred_fallthru
      _
    // Predicated region
    $region10: #{st_transformer_adaptive_forward.1} parent=1 // pred_check
      _
    $region11: #{st_transformer_adaptive_forward.1} parent=1 // pred_check_branch
      %78 = sbr.rel (0) target = $region13
    $region12: #{st_transformer_adaptive_forward.1} parent=1 // pred_region
      _
    $region13: #{st_transformer_adaptive_forward.1} parent=1 // pred_fallthru
      _
    // Predicated region
    $region14: #{st_transformer_adaptive_forward.1} parent=1 // pred_check
      _
    $region15: #{st_transformer_adaptive_forward.1} parent=1 // pred_check_branch
      %80 = sbr.rel (0) target = $region17
    $region16: #{st_transformer_adaptive_forward.1} parent=1 // pred_region
      _
    $region17: #{st_transformer_adaptive_forward.1} parent=1 // pred_fallthru
      _
    // Predicated region
    $region18: #{st_transformer_adaptive_forward.1} parent=1 // pred_check
      _
    $region19: #{st_transformer_adaptive_forward.1} parent=1 // pred_check_branch
      %82 = sbr.rel (0) target = $region21
    $region20: #{st_transformer_adaptive_forward.1} parent=1 // pred_region
      _
    $region21: #{st_transformer_adaptive_forward.1} parent=1 // pred_fallthru
      _
    // Predicated region
    $region22: #{st_transformer_adaptive_forward.1} parent=1 // pred_check
      _
    $region23: #{st_transformer_adaptive_forward.1} parent=1 // pred_check_branch
      %84 = sbr.rel (0) target = $region25
    $region24: #{st_transformer_adaptive_forward.1} parent=1 // pred_region
      _
    $region25: #{st_transformer_adaptive_forward.1} parent=1 // pred_fallthru
      _
    // Predicated region
    $region26: #{st_transformer_adaptive_forward.1} parent=1 // pred_check
      _
    $region27: #{st_transformer_adaptive_forward.1} parent=1 // pred_check_branch
      %86 = sbr.rel (0) target = $region29
    $region28: #{st_transformer_adaptive_forward.1} parent=1 // pred_region
      _
    $region29: #{st_transformer_adaptive_forward.1} parent=1 // pred_fallthru
      _
    // Predicated region
    $region30: #{st_transformer_adaptive_forward.1} parent=1 // pred_check
      _
    $region31: #{st_transformer_adaptive_forward.1} parent=1 // pred_check_branch
      %88 = sbr.rel (0) target = $region33
    $region32: #{st_transformer_adaptive_forward.1} parent=1 // pred_region
      _
    $region33: #{st_transformer_adaptive_forward.1} parent=1 // pred_fallthru
      _
    // Predicated region
    $region34: #{st_transformer_adaptive_forward.1} parent=1 // pred_check
      _
    $region35: #{st_transformer_adaptive_forward.1} parent=1 // pred_check_branch
      %90 = sbr.rel (0) target = $region37
    $region36: #{st_transformer_adaptive_forward.1} parent=1 // pred_region
      _
    $region37: #{st_transformer_adaptive_forward.1} parent=1 // pred_fallthru
      _
    // Predicated region
    $region38: #{st_transformer_adaptive_forward.1} parent=1 // pred_check
      _
    $region39: #{st_transformer_adaptive_forward.1} parent=1 // pred_check_branch
      %92 = sbr.rel (0) target = $region41
    $region40: #{st_transformer_adaptive_forward.1} parent=1 // pred_region
      _
    $region41: #{st_transformer_adaptive_forward.1} parent=1 // pred_fallthru
      _
    // Predicated region
    $region42: #{st_transformer_adaptive_forward.1} parent=1 // pred_check
      _
    $region43: #{st_transformer_adaptive_forward.1} parent=1 // pred_check_branch
      %94 = sbr.rel (0) target = $region45
    $region44: #{st_transformer_adaptive_forward.1} parent=1 // pred_region
      _
    $region45: #{st_transformer_adaptive_forward.1} parent=1 // pred_fallthru
      _
    // Predicated region
    $region46: #{st_transformer_adaptive_forward.1} parent=1 // pred_check
      _
    $region47: #{st_transformer_adaptive_forward.1} parent=1 // pred_check_branch
      %96 = sbr.rel (0) target = $region49
    $region48: #{st_transformer_adaptive_forward.1} parent=1 // pred_region
      _
    $region49: #{st_transformer_adaptive_forward.1} parent=1 // pred_fallthru
      _
    // Predicated region
    $region50: #{st_transformer_adaptive_forward.1} parent=1 // pred_check
      _
    $region51: #{st_transformer_adaptive_forward.1} parent=1 // pred_check_branch
      %98 = sbr.rel (0) target = $region53
    $region52: #{st_transformer_adaptive_forward.1} parent=1 // pred_region
      _
    $region53: #{st_transformer_adaptive_forward.1} parent=1 // pred_fallthru
      _
    // Predicated region
    $region54: #{st_transformer_adaptive_forward.1} parent=1 // pred_check
      _
    $region55: #{st_transformer_adaptive_forward.1} parent=1 // pred_check_branch
      %100 = sbr.rel (0) target = $region57
    $region56: #{st_transformer_adaptive_forward.1} parent=1 // pred_region
      _
    $region57: #{st_transformer_adaptive_forward.1} parent=1 // pred_fallthru
      _
    // Predicated region
    $region58: #{st_transformer_adaptive_forward.1} parent=1 // pred_check
      _
    $region59: #{st_transformer_adaptive_forward.1} parent=1 // pred_check_branch
      %102 = sbr.rel (0) target = $region61
    $region60: #{st_transformer_adaptive_forward.1} parent=1 // pred_region
      _
    $region61: #{st_transformer_adaptive_forward.1} parent=1 // pred_fallthru
      _
    // Predicated region
    $region62: #{st_transformer_adaptive_forward.1} parent=1 // pred_check
      _
    $region63: #{st_transformer_adaptive_forward.1} parent=1 // pred_check_branch
      %104 = sbr.rel (0) target = $region65
    $region64: #{st_transformer_adaptive_forward.1} parent=1 // pred_region
      _
    $region65: #{st_transformer_adaptive_forward.1} parent=1 // pred_fallthru
      _
    // Predicated region
    $region66: #{st_transformer_adaptive_forward.1} parent=1 // pred_check
      _
    $region67: #{st_transformer_adaptive_forward.1} parent=1 // pred_check_branch
      %106 = sbr.rel (0) target = $region69
    $region68: #{st_transformer_adaptive_forward.1} parent=1 // pred_region
      _
    $region69: #{st_transformer_adaptive_forward.1} parent=1 // pred_fallthru
      _
    // Predicated region
    $region70: #{st_transformer_adaptive_forward.1} parent=1 // pred_check
      _
    $region71: #{st_transformer_adaptive_forward.1} parent=1 // pred_check_branch
      %108 = sbr.rel (0) target = $region73
    $region72: #{st_transformer_adaptive_forward.1} parent=1 // pred_region
      _
    $region73: #{st_transformer_adaptive_forward.1} parent=1 // pred_fallthru
      _
    // Predicated region
    $region74: #{st_transformer_adaptive_forward.1} parent=1 // pred_check
      _
    $region75: #{st_transformer_adaptive_forward.1} parent=1 // pred_check_branch
      %110 = sbr.rel (0) target = $region77
    $region76: #{st_transformer_adaptive_forward.1} parent=1 // pred_region
      _
    $region77: #{st_transformer_adaptive_forward.1} parent=1 // pred_fallthru
      _
    // Predicated region
    $region78: #{st_transformer_adaptive_forward.1} parent=1 // pred_check
      _
    $region79: #{st_transformer_adaptive_forward.1} parent=1 // pred_check_branch
      %112 = sbr.rel (0) target = $region81
    $region80: #{st_transformer_adaptive_forward.1} parent=1 // pred_region
      _
    $region81: #{st_transformer_adaptive_forward.1} parent=1 // pred_fallthru
      _
    // Predicated region
    $region82: #{st_transformer_adaptive_forward.1} parent=1 // pred_check
      _
    $region83: #{st_transformer_adaptive_forward.1} parent=1 // pred_check_branch
      %114 = sbr.rel (0) target = $region85
    $region84: #{st_transformer_adaptive_forward.1} parent=1 // pred_region
      _
    $region85: #{st_transformer_adaptive_forward.1} parent=1 // pred_fallthru
      _
    // Predicated region
    $region86: #{st_transformer_adaptive_forward.1} parent=1 // pred_check
      _
    $region87: #{st_transformer_adaptive_forward.1} parent=1 // pred_check_branch
      %116 = sbr.rel (0) target = $region89
    $region88: #{st_transformer_adaptive_forward.1} parent=1 // pred_region
      _
    $region89: #{st_transformer_adaptive_forward.1} parent=1 // pred_fallthru
      _
    // Predicated region
    $region90: #{st_transformer_adaptive_forward.1} parent=1 // pred_check
      _
    $region91: #{st_transformer_adaptive_forward.1} parent=1 // pred_check_branch
      %118 = sbr.rel (0) target = $region93
    $region92: #{st_transformer_adaptive_forward.1} parent=1 // pred_region
      _
    $region93: #{st_transformer_adaptive_forward.1} parent=1 // pred_fallthru
      _
    // Predicated region
    $region94: #{st_transformer_adaptive_forward.1} parent=1 // pred_check
      _
    $region95: #{st_transformer_adaptive_forward.1} parent=1 // pred_check_branch
      %120 = sbr.rel (0) target = $region97
    $region96: #{st_transformer_adaptive_forward.1} parent=1 // pred_region
      _
    $region97: #{st_transformer_adaptive_forward.1} parent=1 // pred_fallthru
      _
    // Predicated region
    $region98: #{st_transformer_adaptive_forward.1} parent=1 // pred_check
      _
    $region99: #{st_transformer_adaptive_forward.1} parent=1 // pred_check_branch
      %122 = sbr.rel (0) target = $region101
    $region100: #{st_transformer_adaptive_forward.1} parent=1 // pred_region
      _
    $region101: #{st_transformer_adaptive_forward.1} parent=1 // pred_fallthru
      _
    // Predicated region
    $region102: #{st_transformer_adaptive_forward.1} parent=1 // pred_check
      _
    $region103: #{st_transformer_adaptive_forward.1} parent=1 // pred_check_branch
      %124 = sbr.rel (0) target = $region105
    $region104: #{st_transformer_adaptive_forward.1} parent=1 // pred_region
      _
    $region105: #{st_transformer_adaptive_forward.1} parent=1 // pred_fallthru
      _
    // Predicated region
    $region106: #{st_transformer_adaptive_forward.1} parent=1 // pred_check
      _
    $region107: #{st_transformer_adaptive_forward.1} parent=1 // pred_check_branch
      %126 = sbr.rel (0) target = $region109
    $region108: #{st_transformer_adaptive_forward.1} parent=1 // pred_region
      _
    $region109: #{st_transformer_adaptive_forward.1} parent=1 // pred_fallthru
      _
    // Predicated region
    $region110: #{st_transformer_adaptive_forward.1} parent=1 // pred_check
      _
    $region111: #{st_transformer_adaptive_forward.1} parent=1 // pred_check_branch
      %128 = sbr.rel (0) target = $region113
    $region112: #{st_transformer_adaptive_forward.1} parent=1 // pred_region
      _
    $region113: #{st_transformer_adaptive_forward.1} parent=1 // pred_fallthru
      _
    // Predicated region
    $region114: #{st_transformer_adaptive_forward.1} parent=1 // pred_check
      _
    $region115: #{st_transformer_adaptive_forward.1} parent=1 // pred_check_branch
      %130 = sbr.rel (0) target = $region117
    $region116: #{st_transformer_adaptive_forward.1} parent=1 // pred_region
      _
    $region117: #{st_transformer_adaptive_forward.1} parent=1 // pred_fallthru
      _
    %v134 = vld [vmem:[%s3] sm:$0xf]
    %v135 = vld [vmem:[%s3 + $0x4] sm:$0xf]
    %v136 = vld [vmem:[%s3 + $0x8] sm:$0xf]
    %v137 = vld [vmem:[%s3 + $0xc] sm:$0xf]
    %v138 = vld [vmem:[%s5] sm:$0xf]
    %v139 = vld [vmem:[%s5 + $0x4] sm:$0xf]
    %v140 = vld [vmem:[%s5 + $0x8] sm:$0xf]
    %v141 = vld [vmem:[%s5 + $0xc] sm:$0xf]
    %v142 = vld [vmem:[%s1] sm:$0xff]
    %v143 = vld [vmem:[%s1 + $0x8] sm:$0xff]
    %v144 = vld [vmem:[%s1 + $0x10] sm:$0xff]
    %v145 = vld [vmem:[%s1 + $0x18] sm:$0xff]
    %v146 = vld [vmem:[%s7] sm:$0xf]
    %v147 = vld [vmem:[%s7 + $0x4] sm:$0xf]
    %v148 = vld [vmem:[%s7 + $0x8] sm:$0xf]
    %v149 = vld [vmem:[%s7 + $0xc] sm:$0xf]
    %v150 = vld [vmem:[%s7 + $0x10] sm:$0xf]
    %v151 = vld [vmem:[%s7 + $0x14] sm:$0xf]
    %v152 = vpack.c.bf16 %v143, %v142
    %v153 = vpack.c.bf16 %v145, %v144
    %v154 = vld [vmem:[%s9] sm:$0x1]
    %v156 = vlaneseq
    %v157 = vshrl.u32 %v156, 7
    %v158 = vsub.s32 0, %v157
    %v159 = vrot.slane %v154, %v158
    %v167 = vunpack.c.l.b16 %v146
    %v168 = vunpack.c.l.b16 %v147
    %v169 = vunpack.c.l.b16 %v148
    %v170 = vunpack.c.l.b16 %v149
    %v171 = vunpack.c.l.b16 %v150
    %v172 = vunpack.c.l.b16 %v151
    %v173 = vpack.c.b16 %v168, %v167
    %v174 = vpack.c.b16 %v170, %v169
    %v175 = vpack.c.b16 %v172, %v171
    %vm179 = vcmask 392192
    %v181 = vsel %vm179, %v152, 0
    %v184 = vsel %vm179, %v153, 0
    %186 = vmatprep.subr.bf16.mxu0 0
    %187 = vmatpush1.bf16.msra.mxu0 %v173
    %188 = vmatprep.subr.bf16.mxu0 0
    %189 = vmatpush1.bf16.msra.mxu0 %v174
    %190 = vmatprep.subr.bf16.mxu0 0
    %191 = vmatpush1.bf16.msra.mxu0 %v175
    %192 = vmatprep.subr.bf16.mxu0 0
    %193 = vmatpush1.bf16.msra.mxu0 0
    %194 = vmatprep.subr.bf16.mxu0 0
    %195 = vmatpush1.bf16.msra.mxu0 0
    %196 = vmatprep.subr.bf16.mxu0 0
    %197 = vmatpush1.bf16.msra.mxu0 0
    %198 = vmatprep.subr.bf16.mxu0 0
    %199 = vmatpush1.bf16.msra.mxu0 0
    %200 = vmatprep.subr.bf16.mxu0 0
    %201 = vmatpush1.bf16.msra.mxu0 0
    %202 = vmatprep.subr.bf16.mxu0 0
    %203 = vmatpush1.bf16.msra.mxu0 0
    %204 = vmatprep.subr.bf16.mxu0 0
    %205 = vmatpush1.bf16.msra.mxu0 0
    %206 = vmatprep.subr.bf16.mxu0 0
    %207 = vmatpush1.bf16.msra.mxu0 0
    %208 = vmatprep.subr.bf16.mxu0 0
    %209 = vmatpush1.bf16.msra.mxu0 0
    %210 = vmatprep.subr.bf16.mxu0 0
    %211 = vmatpush1.bf16.msra.mxu0 0
    %212 = vmatprep.subr.bf16.mxu0 0
    %213 = vmatpush1.bf16.msra.mxu0 0
    %214 = vmatprep.subr.bf16.mxu0 0
    %215 = vmatpush1.bf16.msra.mxu0 0
    %216 = vmatprep.subr.bf16.mxu0 0
    %217 = vmatpush1.bf16.msra.mxu0 0
    %218 = vmatprep.mubr.bf16.mxu0 0
    %219 = vmatmul.mubr.bf16.gmra.mrb[0].mxu0 %v181
    %v220 = vpop.f32.mrb[0].mxu0
    %v221 = vadd.f32 %v159, %v220
    %v222 = vpop.f32.mrb[0].mxu0
    %v223 = vpop.f32.mrb[0].mxu0
    %v224 = vadd.f32 %v159, %v223
    %v225 = vpop.f32.mrb[0].mxu0
    %226 = vmatprep.mubr.bf16.mxu0 0
    %227 = vmatmul.mubr.bf16.gmra.mrb[0].mxu0 %v184
    %v228 = vpop.f32.mrb[0].mxu0
    %v229 = vadd.f32 %v159, %v228
    %v230 = vpop.f32.mrb[0].mxu0
    %v231 = vpop.f32.mrb[0].mxu0
    %v232 = vadd.f32 %v159, %v231
    %v233 = vpop.f32.mrb[0].mxu0
    %234 = vdwg.mxu0
    %v235 = vld [vmem:[%s11] sm:$0x1]
    %v236 = vld [vmem:[%s13] sm:$0x1]
    %v237 = vld [vmem:[%s15] sm:$0x1]
    %v238 = vld [vmem:[%s17] sm:$0x1]
    %v240 = vlaneseq
    %v241 = vshrl.u32 %v240, 7
    %v242 = vsub.s32 0, %v241
    %v243 = vrot.slane %v237, %v242
    %v245 = vsub.f32 %v221, %v243
    %v246 = vsub.f32 %v224, %v243
    %v247 = vsub.f32 %v229, %v243
    %v248 = vsub.f32 %v232, %v243
    %v249 = vadd.f32 %v238, 0.0001
    %v250 = vrsqrt.pop %v249
    %v252 = vlaneseq
    %v253 = vshrl.u32 %v252, 7
    %v254 = vsub.s32 0, %v253
    %v255 = vrot.slane %v250, %v254
    %v257 = vmul.f32 %v245, %v255
    %v258 = vmul.f32 %v246, %v255
    %v259 = vmul.f32 %v247, %v255
    %v260 = vmul.f32 %v248, %v255
    %v262 = vlaneseq
    %v263 = vshrl.u32 %v262, 7
    %v264 = vsub.s32 0, %v263
    %v265 = vrot.slane %v235, %v264
    %v267 = vmul.f32 %v257, %v265
    %v268 = vmul.f32 %v258, %v265
    %v269 = vmul.f32 %v259, %v265
    %v270 = vmul.f32 %v260, %v265
    %v272 = vlaneseq
    %v273 = vshrl.u32 %v272, 7
    %v274 = vsub.s32 0, %v273
    %v275 = vrot.slane %v236, %v274
    %v277 = vadd.f32 %v267, %v275
    %v278 = vadd.f32 %v268, %v275
    %v279 = vadd.f32 %v269, %v275
    %v280 = vadd.f32 %v270, %v275
    %v281 = vmin.f32 %v277, 0.0
    %v282 = vmin.f32 %v278, 0.0
    %v283 = vmin.f32 %v279, 0.0
    %v284 = vmin.f32 %v280, 0.0
    %v285 = vmul.f32 %v281, 1.442695
    %v286 = vpow.pop %v285
    %v287 = vmul.f32 %v282, 1.442695
    %v288 = vpow.pop %v287
    %v289 = vmul.f32 %v283, 1.442695
    %v290 = vpow.pop %v289
    %v291 = vmul.f32 %v284, 1.442695
    %v292 = vpow.pop %v291
    %v293 = vsub.f32 %v286, 1.0
    %v294 = vsub.f32 %v288, 1.0
    %v295 = vsub.f32 %v290, 1.0
    %v296 = vsub.f32 %v292, 1.0
    %vm297 = vcmp.gt.f32.partialorder %v277, 0.0
    %vm298 = vcmp.gt.f32.partialorder %v278, 0.0
    %vm299 = vcmp.gt.f32.partialorder %v279, 0.0
    %vm300 = vcmp.gt.f32.partialorder %v280, 0.0
    %v301 = vsel %vm297, %v277, %v293
    %v302 = vsel %vm298, %v278, %v294
    %v303 = vsel %vm299, %v279, %v295
    %v304 = vsel %vm300, %v280, %v296
    %v305 = vld [vmem:[%s19] sm:$0xf]
    %v306 = vld [vmem:[%s19 + $0x4] sm:$0xf]
    %v307 = vld [vmem:[%s19 + $0x8] sm:$0xf]
    %v308 = vld [vmem:[%s19 + $0xc] sm:$0xf]
    %v309 = vld [vmem:[%s19 + $0x10] sm:$0xf]
    %v310 = vld [vmem:[%s19 + $0x14] sm:$0xf]
    %v311 = vld [vmem:[%s19 + $0x18] sm:$0xf]
    %v312 = vld [vmem:[%s19 + $0x1c] sm:$0xf]
    %v313 = vpack.c.bf16 %v302, %v301
    %v314 = vpack.c.bf16 %v304, %v303
    %v315 = vld [vmem:[%s21] sm:$0x1]
    %v317 = vlaneseq
    %v318 = vshrl.u32 %v317, 7
    %v319 = vsub.s32 0, %v318
    %v320 = vrot.slane %v315, %v319
    %v330 = vunpack.c.l.b16 %v305
    %v331 = vunpack.c.l.b16 %v306
    %v332 = vunpack.c.l.b16 %v307
    %v333 = vunpack.c.l.b16 %v308
    %v334 = vunpack.c.l.b16 %v309
    %v335 = vunpack.c.l.b16 %v310
    %v336 = vunpack.c.l.b16 %v311
    %v337 = vunpack.c.l.b16 %v312
    %v338 = vpack.c.b16 %v331, %v330
    %v339 = vpack.c.b16 %v333, %v332
    %v340 = vpack.c.b16 %v335, %v334
    %v341 = vpack.c.b16 %v337, %v336
    %vm346 = vcmask 523264
    %v348 = vsel %vm346, %v313, 0
    %v351 = vsel %vm346, %v314, 0
    %353 = vmatprep.subr.bf16.mxu0 0
    %354 = vmatpush1.bf16.msra.mxu0 %v338
    %355 = vmatprep.subr.bf16.mxu0 0
    %356 = vmatpush1.bf16.msra.mxu0 %v339
    %357 = vmatprep.subr.bf16.mxu0 0
    %358 = vmatpush1.bf16.msra.mxu0 %v340
    %359 = vmatprep.subr.bf16.mxu0 0
    %360 = vmatpush1.bf16.msra.mxu0 %v341
    %361 = vmatprep.subr.bf16.mxu0 0
    %362 = vmatpush1.bf16.msra.mxu0 0
    %363 = vmatprep.subr.bf16.mxu0 0
    %364 = vmatpush1.bf16.msra.mxu0 0
    %365 = vmatprep.subr.bf16.mxu0 0
    %366 = vmatpush1.bf16.msra.mxu0 0
    %367 = vmatprep.subr.bf16.mxu0 0
    %368 = vmatpush1.bf16.msra.mxu0 0
    %369 = vmatprep.subr.bf16.mxu0 0
    %370 = vmatpush1.bf16.msra.mxu0 0
    %371 = vmatprep.subr.bf16.mxu0 0
    %372 = vmatpush1.bf16.msra.mxu0 0
    %373 = vmatprep.subr.bf16.mxu0 0
    %374 = vmatpush1.bf16.msra.mxu0 0
    %375 = vmatprep.subr.bf16.mxu0 0
    %376 = vmatpush1.bf16.msra.mxu0 0
    %377 = vmatprep.subr.bf16.mxu0 0
    %378 = vmatpush1.bf16.msra.mxu0 0
    %379 = vmatprep.subr.bf16.mxu0 0
    %380 = vmatpush1.bf16.msra.mxu0 0
    %381 = vmatprep.subr.bf16.mxu0 0
    %382 = vmatpush1.bf16.msra.mxu0 0
    %383 = vmatprep.subr.bf16.mxu0 0
    %384 = vmatpush1.bf16.msra.mxu0 0
    %385 = vmatprep.mubr.bf16.mxu0 0
    %386 = vmatmul.mubr.bf16.gmra.mrb[0].mxu0 %v348
    %v387 = vpop.f32.mrb[0].mxu0
    %v388 = vadd.f32 %v320, %v387
    %v389 = vpop.f32.mrb[0].mxu0
    %v390 = vpop.f32.mrb[0].mxu0
    %v391 = vadd.f32 %v320, %v390
    %v392 = vpop.f32.mrb[0].mxu0
    %393 = vmatprep.mubr.bf16.mxu0 0
    %394 = vmatmul.mubr.bf16.gmra.mrb[0].mxu0 %v351
    %v395 = vpop.f32.mrb[0].mxu0
    %v396 = vadd.f32 %v320, %v395
    %v397 = vpop.f32.mrb[0].mxu0
    %v398 = vpop.f32.mrb[0].mxu0
    %v399 = vadd.f32 %v320, %v398
    %v400 = vpop.f32.mrb[0].mxu0
    %401 = vdwg.mxu0
    %v402 = vld [vmem:[%s23] sm:$0x1]
    %v403 = vld [vmem:[%s25] sm:$0x1]
    %v404 = vld [vmem:[%s27] sm:$0x1]
    %v405 = vld [vmem:[%s29] sm:$0x1]
    %v407 = vlaneseq
    %v408 = vshrl.u32 %v407, 7
    %v409 = vsub.s32 0, %v408
    %v410 = vrot.slane %v404, %v409
    %v412 = vsub.f32 %v388, %v410
    %v413 = vsub.f32 %v391, %v410
    %v414 = vsub.f32 %v396, %v410
    %v415 = vsub.f32 %v399, %v410
    %v416 = vadd.f32 %v405, 0.0001
    %v417 = vrsqrt.pop %v416
    %v419 = vlaneseq
    %v420 = vshrl.u32 %v419, 7
    %v421 = vsub.s32 0, %v420
    %v422 = vrot.slane %v417, %v421
    %v424 = vmul.f32 %v412, %v422
    %v425 = vmul.f32 %v413, %v422
    %v426 = vmul.f32 %v414, %v422
    %v427 = vmul.f32 %v415, %v422
    %v429 = vlaneseq
    %v430 = vshrl.u32 %v429, 7
    %v431 = vsub.s32 0, %v430
    %v432 = vrot.slane %v402, %v431
    %v434 = vmul.f32 %v424, %v432
    %v435 = vmul.f32 %v425, %v432
    %v436 = vmul.f32 %v426, %v432
    %v437 = vmul.f32 %v427, %v432
    %v439 = vlaneseq
    %v440 = vshrl.u32 %v439, 7
    %v441 = vsub.s32 0, %v440
    %v442 = vrot.slane %v403, %v441
    %v444 = vadd.f32 %v434, %v442
    %v445 = vadd.f32 %v435, %v442
    %v446 = vadd.f32 %v436, %v442
    %v447 = vadd.f32 %v437, %v442
    %v448 = vmin.f32 %v444, 0.0
    %v449 = vmin.f32 %v445, 0.0
    %v450 = vmin.f32 %v446, 0.0
    %v451 = vmin.f32 %v447, 0.0
    %v452 = vmul.f32 %v448, 1.442695
    %v453 = vpow.pop %v452
    %v454 = vmul.f32 %v449, 1.442695
    %v455 = vpow.pop %v454
    %v456 = vmul.f32 %v450, 1.442695
    %v457 = vpow.pop %v456
    %v458 = vmul.f32 %v451, 1.442695
    %v459 = vpow.pop %v458
    %v460 = vsub.f32 %v453, 1.0
    %v461 = vsub.f32 %v455, 1.0
    %v462 = vsub.f32 %v457, 1.0
    %v463 = vsub.f32 %v459, 1.0
    %vm464 = vcmp.gt.f32.partialorder %v444, 0.0
    %vm465 = vcmp.gt.f32.partialorder %v445, 0.0
    %vm466 = vcmp.gt.f32.partialorder %v446, 0.0
    %vm467 = vcmp.gt.f32.partialorder %v447, 0.0
    %v468 = vsel %vm464, %v444, %v460
    %v469 = vsel %vm465, %v445, %v461
    %v470 = vsel %vm466, %v446, %v462
    %v471 = vsel %vm467, %v447, %v463
    %472 = vst.msk [vmem:[#allocation6] sm:$0xff] %vm346, %v468
    %473 = vst.msk [vmem:[#allocation6 + $0x8] sm:$0xff] %vm346, %v469
    %474 = vst.msk [vmem:[#allocation6 + $0x10] sm:$0xff] %vm346, %v470
    %475 = vst.msk [vmem:[#allocation6 + $0x18] sm:$0xff] %vm346, %v471
    %v476 = vld [vmem:[%s31] sm:$0xf]
    %v477 = vld [vmem:[%s31 + $0x4] sm:$0xf]
    %v478 = vld [vmem:[%s31 + $0x8] sm:$0xf]
    %v479 = vld [vmem:[%s31 + $0xc] sm:$0xf]
    %v480 = vld [vmem:[%s31 + $0x10] sm:$0xf]
    %v481 = vld [vmem:[%s31 + $0x14] sm:$0xf]
    %v482 = vld [vmem:[%s31 + $0x18] sm:$0xf]
    %v483 = vld [vmem:[%s31 + $0x1c] sm:$0xf]
    %v484 = vld [vmem:[%s33] sm:$0x1]
    %v485 = vpack.c.bf16 %v469, %v468
    %v486 = vpack.c.bf16 %v471, %v470
    %v488 = vlaneseq
    %v489 = vshrl.u32 %v488, 7
    %v490 = vsub.s32 0, %v489
    %v491 = vrot.slane %v484, %v490
    %v501 = vunpack.c.l.b16 %v476
    %v502 = vunpack.c.l.b16 %v477
    %v503 = vunpack.c.l.b16 %v478
    %v504 = vunpack.c.l.b16 %v479
    %v505 = vunpack.c.l.b16 %v480
    %v506 = vunpack.c.l.b16 %v481
    %v507 = vunpack.c.l.b16 %v482
    %v508 = vunpack.c.l.b16 %v483
    %v509 = vpack.c.b16 %v502, %v501
    %v510 = vpack.c.b16 %v504, %v503
    %v511 = vpack.c.b16 %v506, %v505
    %v512 = vpack.c.b16 %v508, %v507
    %v518 = vsel %vm346, %v485, 0
    %v521 = vsel %vm346, %v486, 0
    %523 = vmatprep.subr.bf16.mxu0 0
    %524 = vmatpush1.bf16.msra.mxu0 %v509
    %525 = vmatprep.subr.bf16.mxu0 0
    %526 = vmatpush1.bf16.msra.mxu0 %v510
    %527 = vmatprep.subr.bf16.mxu0 0
    %528 = vmatpush1.bf16.msra.mxu0 %v511
    %529 = vmatprep.subr.bf16.mxu0 0
    %530 = vmatpush1.bf16.msra.mxu0 %v512
    %531 = vmatprep.subr.bf16.mxu0 0
    %532 = vmatpush1.bf16.msra.mxu0 0
    %533 = vmatprep.subr.bf16.mxu0 0
    %534 = vmatpush1.bf16.msra.mxu0 0
    %535 = vmatprep.subr.bf16.mxu0 0
    %536 = vmatpush1.bf16.msra.mxu0 0
    %537 = vmatprep.subr.bf16.mxu0 0
    %538 = vmatpush1.bf16.msra.mxu0 0
    %539 = vmatprep.subr.bf16.mxu0 0
    %540 = vmatpush1.bf16.msra.mxu0 0
    %541 = vmatprep.subr.bf16.mxu0 0
    %542 = vmatpush1.bf16.msra.mxu0 0
    %543 = vmatprep.subr.bf16.mxu0 0
    %544 = vmatpush1.bf16.msra.mxu0 0
    %545 = vmatprep.subr.bf16.mxu0 0
    %546 = vmatpush1.bf16.msra.mxu0 0
    %547 = vmatprep.subr.bf16.mxu0 0
    %548 = vmatpush1.bf16.msra.mxu0 0
    %549 = vmatprep.subr.bf16.mxu0 0
    %550 = vmatpush1.bf16.msra.mxu0 0
    %551 = vmatprep.subr.bf16.mxu0 0
    %552 = vmatpush1.bf16.msra.mxu0 0
    %553 = vmatprep.subr.bf16.mxu0 0
    %554 = vmatpush1.bf16.msra.mxu0 0
    %555 = vmatprep.mubr.bf16.mxu0 0
    %556 = vmatmul.mubr.bf16.gmra.mrb[0].mxu0 %v518
    %v557 = vpop.f32.mrb[0].mxu0
    %v558 = vadd.f32 %v491, %v557
    %v559 = vpop.f32.mrb[0].mxu0
    %v560 = vpop.f32.mrb[0].mxu0
    %v561 = vadd.f32 %v491, %v560
    %v562 = vpop.f32.mrb[0].mxu0
    %563 = vmatprep.mubr.bf16.mxu0 0
    %564 = vmatmul.mubr.bf16.gmra.mrb[0].mxu0 %v521
    %v565 = vpop.f32.mrb[0].mxu0
    %v566 = vadd.f32 %v491, %v565
    %v567 = vpop.f32.mrb[0].mxu0
    %v568 = vpop.f32.mrb[0].mxu0
    %v569 = vadd.f32 %v491, %v568
    %v570 = vpop.f32.mrb[0].mxu0
    %571 = vdwg.mxu0
    %v572 = vpack.c.bf16 %v561, %v558
    %v573 = vpack.c.bf16 %v569, %v566
    %576 = vrot.lane.b32.xlu0 %v572, 96
    %v577 = vpop.permute.xlu0 %576
    %578 = vrot.lane.b32.xlu0 %v573, 96
    %v579 = vpop.permute.xlu0 %578
    %vm580 = vcmask 261120
    %v582 = vsel %vm580, %v572, 0
    %v585 = vsel %vm580, %v573, 0
    %v588 = vsel %vm580, %v577, 0
    %v591 = vsel %vm580, %v579, 0
    %593 = vmatprep.subr.bf16.mxu0 0
    %594 = vmatpush1.bf16.xpose.msra.mxu0 %v588
    %595 = vmatprep.subr.bf16.mxu0 0
    %596 = vmatpush1.bf16.xpose.msra.mxu0 %v591
    %597 = vmatprep.subr.bf16.mxu0 0
    %598 = vmatpush1.bf16.xpose.msra.mxu0 0
    %599 = vmatprep.subr.bf16.mxu0 0
    %600 = vmatpush1.bf16.xpose.msra.mxu0 0
    %601 = vmatprep.subr.bf16.mxu0 0
    %602 = vmatpush1.bf16.xpose.msra.mxu0 0
    %603 = vmatprep.subr.bf16.mxu0 0
    %604 = vmatpush1.bf16.xpose.msra.mxu0 0
    %605 = vmatprep.subr.bf16.mxu0 0
    %606 = vmatpush1.bf16.xpose.msra.mxu0 0
    %607 = vmatprep.subr.bf16.mxu0 0
    %608 = vmatpush1.bf16.xpose.msra.mxu0 0
    %609 = vmatprep.subr.bf16.mxu0 0
    %610 = vmatpush1.bf16.xpose.msra.mxu0 0
    %611 = vmatprep.subr.bf16.mxu0 0
    %612 = vmatpush1.bf16.xpose.msra.mxu0 0
    %613 = vmatprep.subr.bf16.mxu0 0
    %614 = vmatpush1.bf16.xpose.msra.mxu0 0
    %615 = vmatprep.subr.bf16.mxu0 0
    %616 = vmatpush1.bf16.xpose.msra.mxu0 0
    %617 = vmatprep.subr.bf16.mxu0 0
    %618 = vmatpush1.bf16.xpose.msra.mxu0 0
    %619 = vmatprep.subr.bf16.mxu0 0
    %620 = vmatpush1.bf16.xpose.msra.mxu0 0
    %621 = vmatprep.subr.bf16.mxu0 0
    %622 = vmatpush1.bf16.xpose.msra.mxu0 0
    %623 = vmatprep.subr.bf16.mxu0 0
    %624 = vmatpush1.bf16.xpose.msra.mxu0 0
    %625 = vmatprep.mubr.bf16.mxu0 0
    %626 = vmatmul.mubr.bf16.gmra.mrb[0].mxu0 %v582
    %v627 = vpop.f32.mrb[0].mxu0
    %v628 = vadd.f32 0.0, %v627
    %v629 = vpop.f32.mrb[0].mxu0
    %v630 = vpop.f32.mrb[0].mxu0
    %v631 = vadd.f32 0.0, %v630
    %v632 = vpop.f32.mrb[0].mxu0
    %633 = vmatprep.mubr.bf16.mxu0 0
    %634 = vmatmul.mubr.bf16.gmra.mrb[0].mxu0 %v585
    %v635 = vpop.f32.mrb[0].mxu0
    %v636 = vadd.f32 0.0, %v635
    %v637 = vpop.f32.mrb[0].mxu0
    %v638 = vpop.f32.mrb[0].mxu0
    %v639 = vadd.f32 0.0, %v638
    %v640 = vpop.f32.mrb[0].mxu0
    %641 = vdwg.mxu0
    %v642 = vmul.f32 %v628, 0.17677669
    %v643 = vmul.f32 %v631, 0.17677669
    %v644 = vmul.f32 %v636, 0.17677669
    %v645 = vmul.f32 %v639, 0.17677669
    %vm646 = vcmp.gt.bf16.partialorder %v134, 0
    %vm647 = vcmp.gt.bf16.partialorder %v135, 0
    %vm648 = vcmp.gt.bf16.partialorder %v136, 0
    %vm649 = vcmp.gt.bf16.partialorder %v137, 0
    %v650 = vsel %vm646, 65537, 0
    %v651 = vsel %vm647, 65537, 0
    %v652 = vsel %vm648, 65537, 0
    %v653 = vsel %vm649, 65537, 0
    %v654 = vunpack.c.l.b16 %v650
    %v655 = vunpack.c.l.b16 %v651
    %v656 = vunpack.c.l.b16 %v652
    %v657 = vunpack.c.l.b16 %v653
    %vm658 = vcmp.ne.s32.totalorder %v654, 0
    %vm659 = vcmp.ne.s32.totalorder %v655, 0
    %vm660 = vcmp.ne.s32.totalorder %v656, 0
    %vm661 = vcmp.ne.s32.totalorder %v657, 0
    %v662 = vsel %vm658, %v642, -1e+30
    %v663 = vsel %vm659, %v643, -1e+30
    %v664 = vsel %vm660, %v644, -1e+30
    %v665 = vsel %vm661, %v645, -1e+30
    %v666 = vsel %vm580, %v662, -inf
    %667 = vmax.xlane.f32.xlu0 %v666
    %v668 = vpop.xlane.xlu0 %667
    %v669 = vsel %vm580, %v663, -inf
    %670 = vmax.xlane.f32.xlu0 %v669
    %v671 = vpop.xlane.xlu0 %670
    %v672 = vsel %vm580, %v664, -inf
    %673 = vmax.xlane.f32.xlu0 %v672
    %v674 = vpop.xlane.xlu0 %673
    %v675 = vsel %vm580, %v665, -inf
    %676 = vmax.xlane.f32.xlu0 %v675
    %v677 = vpop.xlane.xlu0 %676
    %v678 = vsub.f32 %v662, %v668
    %v679 = vsub.f32 %v663, %v671
    %v680 = vsub.f32 %v664, %v674
    %v681 = vsub.f32 %v665, %v677
    %v682 = vmul.f32 %v678, 1.442695
    %v683 = vpow.pop %v682
    %v684 = vmul.f32 %v679, 1.442695
    %v685 = vpow.pop %v684
    %v686 = vmul.f32 %v680, 1.442695
    %v687 = vpow.pop %v686
    %v688 = vmul.f32 %v681, 1.442695
    %v689 = vpow.pop %v688
    %v690 = vsel %vm658, 1, 0
    %v691 = vsel %vm659, 1, 0
    %v692 = vsel %vm660, 1, 0
    %v693 = vsel %vm661, 1, 0
    %v694 = vcvt.s32.f32 %v690
    %v695 = vcvt.s32.f32 %v691
    %v696 = vcvt.s32.f32 %v692
    %v697 = vcvt.s32.f32 %v693
    %v698 = vmul.f32 %v683, %v694
    %v699 = vmul.f32 %v685, %v695
    %v700 = vmul.f32 %v687, %v696
    %v701 = vmul.f32 %v689, %v697
    %v702 = vsel %vm580, %v698, 0.0
    %703 = vadd.xlane.f32.xlu0 %v702
    %v704 = vpop.xlane.xlu0 %703
    %v705 = vsel %vm580, %v699, 0.0
    %706 = vadd.xlane.f32.xlu0 %v705
    %v707 = vpop.xlane.xlu0 %706
    %v708 = vsel %vm580, %v700, 0.0
    %709 = vadd.xlane.f32.xlu0 %v708
    %v710 = vpop.xlane.xlu0 %709
    %v711 = vsel %vm580, %v701, 0.0
    %712 = vadd.xlane.f32.xlu0 %v711
    %v713 = vpop.xlane.xlu0 %712
    %v714 = vmax.f32 %v704, 1e-30
    %v715 = vmax.f32 %v707, 1e-30
    %v716 = vmax.f32 %v710, 1e-30
    %v717 = vmax.f32 %v713, 1e-30
    %v718 = vrcp.pop %v714
    %v719 = vrcp.pop %v715
    %v720 = vrcp.pop %v716
    %v721 = vrcp.pop %v717
    %v722 = vmul.f32 %v698, %v718
    %v723 = vmul.f32 %v699, %v719
    %v724 = vmul.f32 %v700, %v720
    %v725 = vmul.f32 %v701, %v721
    %vm726 = vcmp.gt.bf16.partialorder %v138, 0
    %vm727 = vcmp.gt.bf16.partialorder %v139, 0
    %vm728 = vcmp.gt.bf16.partialorder %v140, 0
    %vm729 = vcmp.gt.bf16.partialorder %v141, 0
    %v730 = vsel %vm726, 65537, 0
    %v731 = vsel %vm727, 65537, 0
    %v732 = vsel %vm728, 65537, 0
    %v733 = vsel %vm729, 65537, 0
    %v734 = vunpack.c.l.b16 %v730
    %v735 = vunpack.c.l.b16 %v731
    %v736 = vunpack.c.l.b16 %v732
    %v737 = vunpack.c.l.b16 %v733
    %vm738 = vcmp.ne.s32.totalorder %v734, 0
    %vm739 = vcmp.ne.s32.totalorder %v735, 0
    %vm740 = vcmp.ne.s32.totalorder %v736, 0
    %vm741 = vcmp.ne.s32.totalorder %v737, 0
    %v742 = vsel %vm738, %v642, -1e+30
    %v743 = vsel %vm739, %v643, -1e+30
    %v744 = vsel %vm740, %v644, -1e+30
    %v745 = vsel %vm741, %v645, -1e+30
    %v746 = vsel %vm580, %v742, -inf
    %747 = vmax.xlane.f32.xlu0 %v746
    %v748 = vpop.xlane.xlu0 %747
    %v749 = vsel %vm580, %v743, -inf
    %750 = vmax.xlane.f32.xlu0 %v749
    %v751 = vpop.xlane.xlu0 %750
    %v752 = vsel %vm580, %v744, -inf
    %753 = vmax.xlane.f32.xlu0 %v752
    %v754 = vpop.xlane.xlu0 %753
    %v755 = vsel %vm580, %v745, -inf
    %756 = vmax.xlane.f32.xlu0 %v755
    %v757 = vpop.xlane.xlu0 %756
    %v758 = vsub.f32 %v742, %v748
    %v759 = vsub.f32 %v743, %v751
    %v760 = vsub.f32 %v744, %v754
    %v761 = vsub.f32 %v745, %v757
    %v762 = vmul.f32 %v758, 1.442695
    %v763 = vpow.pop %v762
    %v764 = vmul.f32 %v759, 1.442695
    %v765 = vpow.pop %v764
    %v766 = vmul.f32 %v760, 1.442695
    %v767 = vpow.pop %v766
    %v768 = vmul.f32 %v761, 1.442695
    %v769 = vpow.pop %v768
    %v770 = vsel %vm738, 1, 0
    %v771 = vsel %vm739, 1, 0
    %v772 = vsel %vm740, 1, 0
    %v773 = vsel %vm741, 1, 0
    %v774 = vcvt.s32.f32 %v770
    %v775 = vcvt.s32.f32 %v771
    %v776 = vcvt.s32.f32 %v772
    %v777 = vcvt.s32.f32 %v773
    %v778 = vmul.f32 %v763, %v774
    %v779 = vmul.f32 %v765, %v775
    %v780 = vmul.f32 %v767, %v776
    %v781 = vmul.f32 %v769, %v777
    %v782 = vsel %vm580, %v778, 0.0
    %783 = vadd.xlane.f32.xlu0 %v782
    %v784 = vpop.xlane.xlu0 %783
    %v785 = vsel %vm580, %v779, 0.0
    %786 = vadd.xlane.f32.xlu0 %v785
    %v787 = vpop.xlane.xlu0 %786
    %v788 = vsel %vm580, %v780, 0.0
    %789 = vadd.xlane.f32.xlu0 %v788
    %v790 = vpop.xlane.xlu0 %789
    %v791 = vsel %vm580, %v781, 0.0
    %792 = vadd.xlane.f32.xlu0 %v791
    %v793 = vpop.xlane.xlu0 %792
    %v794 = vmax.f32 %v784, 1e-30
    %v795 = vmax.f32 %v787, 1e-30
    %v796 = vmax.f32 %v790, 1e-30
    %v797 = vmax.f32 %v793, 1e-30
    %v798 = vrcp.pop %v794
    %v799 = vrcp.pop %v795
    %v800 = vrcp.pop %v796
    %v801 = vrcp.pop %v797
    %v802 = vmul.f32 %v778, %v798
    %v803 = vmul.f32 %v779, %v799
    %v804 = vmul.f32 %v780, %v800
    %v805 = vmul.f32 %v781, %v801
    %v806 = vpack.c.bf16 %v723, %v722
    %v807 = vpack.c.bf16 %v725, %v724
    %808 = vrot.lane.b32.xlu0 %v572, 64
    %v809 = vpop.permute.xlu0 %808
    %810 = vrot.lane.b32.xlu0 %v573, 64
    %v811 = vpop.permute.xlu0 %810
    %818 = vrot.lane.b32.xlu0 %v558, 32
    %v819 = vpop.permute.xlu0 %818
    %820 = vrot.lane.b32.xlu0 %v561, 32
    %v821 = vpop.permute.xlu0 %820
    %822 = vrot.lane.b32.xlu0 %v566, 32
    %v823 = vpop.permute.xlu0 %822
    %824 = vrot.lane.b32.xlu0 %v569, 32
    %v825 = vpop.permute.xlu0 %824
    %v831 = vsel %vm580, %v806, 0
    %v834 = vsel %vm580, %v807, 0
    %836 = vmatprep.subr.bf16.mxu0 0
    %837 = vmatpush1.bf16.msra.mxu0 %v809
    %838 = vmatprep.subr.bf16.mxu0 0
    %839 = vmatpush1.bf16.msra.mxu0 %v811
    %840 = vmatprep.subr.bf16.mxu0 0
    %841 = vmatpush1.bf16.msra.mxu0 0
    %842 = vmatprep.subr.bf16.mxu0 0
    %843 = vmatpush1.bf16.msra.mxu0 0
    %844 = vmatprep.subr.bf16.mxu0 0
    %845 = vmatpush1.bf16.msra.mxu0 0
    %846 = vmatprep.subr.bf16.mxu0 0
    %847 = vmatpush1.bf16.msra.mxu0 0
    %848 = vmatprep.subr.bf16.mxu0 0
    %849 = vmatpush1.bf16.msra.mxu0 0
    %850 = vmatprep.subr.bf16.mxu0 0
    %851 = vmatpush1.bf16.msra.mxu0 0
    %852 = vmatprep.subr.bf16.mxu0 0
    %853 = vmatpush1.bf16.msra.mxu0 0
    %854 = vmatprep.subr.bf16.mxu0 0
    %855 = vmatpush1.bf16.msra.mxu0 0
    %856 = vmatprep.subr.bf16.mxu0 0
    %857 = vmatpush1.bf16.msra.mxu0 0
    %858 = vmatprep.subr.bf16.mxu0 0
    %859 = vmatpush1.bf16.msra.mxu0 0
    %860 = vmatprep.subr.bf16.mxu0 0
    %861 = vmatpush1.bf16.msra.mxu0 0
    %862 = vmatprep.subr.bf16.mxu0 0
    %863 = vmatpush1.bf16.msra.mxu0 0
    %864 = vmatprep.subr.bf16.mxu0 0
    %865 = vmatpush1.bf16.msra.mxu0 0
    %866 = vmatprep.subr.bf16.mxu0 0
    %867 = vmatpush1.bf16.msra.mxu0 0
    %868 = vmatprep.mubr.bf16.mxu0 0
    %869 = vmatmul.mubr.bf16.gmra.mrb[0].mxu0 %v831
    %v870 = vpop.f32.mrb[0].mxu0
    %v871 = vadd.f32 %v819, %v870
    %v872 = vpop.f32.mrb[0].mxu0
    %v873 = vpop.f32.mrb[0].mxu0
    %v874 = vadd.f32 %v821, %v873
    %v875 = vpop.f32.mrb[0].mxu0
    %876 = vmatprep.mubr.bf16.mxu0 0
    %877 = vmatmul.mubr.bf16.gmra.mrb[0].mxu0 %v834
    %v878 = vpop.f32.mrb[0].mxu0
    %v879 = vadd.f32 %v823, %v878
    %v880 = vpop.f32.mrb[0].mxu0
    %v881 = vpop.f32.mrb[0].mxu0
    %v882 = vadd.f32 %v825, %v881
    %v883 = vpop.f32.mrb[0].mxu0
    %884 = vdwg.mxu0
    %v885 = vpack.c.bf16 %v803, %v802
    %v886 = vpack.c.bf16 %v805, %v804
    %v888 = vsel %vm580, %v885, 0
    %v891 = vsel %vm580, %v886, 0
    %893 = vmatprep.subr.bf16.mxu0 0
    %894 = vmatpush1.bf16.msra.mxu0 %v809
    %895 = vmatprep.subr.bf16.mxu0 0
    %896 = vmatpush1.bf16.msra.mxu0 %v811
    %897 = vmatprep.subr.bf16.mxu0 0
    %898 = vmatpush1.bf16.msra.mxu0 0
    %899 = vmatprep.subr.bf16.mxu0 0
    %900 = vmatpush1.bf16.msra.mxu0 0
    %901 = vmatprep.subr.bf16.mxu0 0
    %902 = vmatpush1.bf16.msra.mxu0 0
    %903 = vmatprep.subr.bf16.mxu0 0
    %904 = vmatpush1.bf16.msra.mxu0 0
    %905 = vmatprep.subr.bf16.mxu0 0
    %906 = vmatpush1.bf16.msra.mxu0 0
    %907 = vmatprep.subr.bf16.mxu0 0
    %908 = vmatpush1.bf16.msra.mxu0 0
    %909 = vmatprep.subr.bf16.mxu0 0
    %910 = vmatpush1.bf16.msra.mxu0 0
    %911 = vmatprep.subr.bf16.mxu0 0
    %912 = vmatpush1.bf16.msra.mxu0 0
    %913 = vmatprep.subr.bf16.mxu0 0
    %914 = vmatpush1.bf16.msra.mxu0 0
    %915 = vmatprep.subr.bf16.mxu0 0
    %916 = vmatpush1.bf16.msra.mxu0 0
    %917 = vmatprep.subr.bf16.mxu0 0
    %918 = vmatpush1.bf16.msra.mxu0 0
    %919 = vmatprep.subr.bf16.mxu0 0
    %920 = vmatpush1.bf16.msra.mxu0 0
    %921 = vmatprep.subr.bf16.mxu0 0
    %922 = vmatpush1.bf16.msra.mxu0 0
    %923 = vmatprep.subr.bf16.mxu0 0
    %924 = vmatpush1.bf16.msra.mxu0 0
    %925 = vmatprep.mubr.bf16.mxu0 0
    %926 = vmatmul.mubr.bf16.gmra.mrb[0].mxu0 %v888
    %v927 = vpop.f32.mrb[0].mxu0
    %v928 = vadd.f32 %v819, %v927
    %v929 = vpop.f32.mrb[0].mxu0
    %v930 = vpop.f32.mrb[0].mxu0
    %v931 = vadd.f32 %v821, %v930
    %v932 = vpop.f32.mrb[0].mxu0
    %933 = vmatprep.mubr.bf16.mxu0 0
    %934 = vmatmul.mubr.bf16.gmra.mrb[0].mxu0 %v891
    %v935 = vpop.f32.mrb[0].mxu0
    %v936 = vadd.f32 %v823, %v935
    %v937 = vpop.f32.mrb[0].mxu0
    %v938 = vpop.f32.mrb[0].mxu0
    %v939 = vadd.f32 %v825, %v938
    %v940 = vpop.f32.mrb[0].mxu0
    %941 = vdwg.mxu0
    %v942 = vpack.c.bf16 %v874, %v871
    %v943 = vpack.c.bf16 %v882, %v879
    %944 = vxpose.xlu0.c.b16.start [1/8] %v806, 128
    %945 = vxpose.xlu0.c.b16.cont [2/8] %v807, 128
    %946 = vxpose.xlu0.c.b16.cont [3/8] 0, 128
    %947 = vxpose.xlu0.c.b16.cont [4/8] 0, 128
    %948 = vxpose.xlu0.c.b16.cont [5/8] 0, 128
    %949 = vxpose.xlu0.c.b16.cont [6/8] 0, 128
    %950 = vxpose.xlu0.c.b16.cont [7/8] 0, 128
    %951 = vxpose.xlu0.c.b16.end [8/8] 0, 128
    %v952 = vpop.trf.xlu0
    %v953 = vpop.trf.xlu0
    %v954 = vpop.trf.xlu0
    %v955 = vpop.trf.xlu0
    %v956 = vpop.trf.xlu0
    %v957 = vpop.trf.xlu0
    %v958 = vpop.trf.xlu0
    %v959 = vpop.trf.xlu0
    %v961 = vsel %vm580, %v952, 0
    %v964 = vsel %vm580, %v953, 0
    %966 = vmatprep.subr.bf16.mxu0 0
    %967 = vmatpush1.bf16.msra.mxu0 %v942
    %968 = vmatprep.subr.bf16.mxu0 0
    %969 = vmatpush1.bf16.msra.mxu0 %v943
    %970 = vmatprep.subr.bf16.mxu0 0
    %971 = vmatpush1.bf16.msra.mxu0 0
    %972 = vmatprep.subr.bf16.mxu0 0
    %973 = vmatpush1.bf16.msra.mxu0 0
    %974 = vmatprep.subr.bf16.mxu0 0
    %975 = vmatpush1.bf16.msra.mxu0 0
    %976 = vmatprep.subr.bf16.mxu0 0
    %977 = vmatpush1.bf16.msra.mxu0 0
    %978 = vmatprep.subr.bf16.mxu0 0
    %979 = vmatpush1.bf16.msra.mxu0 0
    %980 = vmatprep.subr.bf16.mxu0 0
    %981 = vmatpush1.bf16.msra.mxu0 0
    %982 = vmatprep.subr.bf16.mxu0 0
    %983 = vmatpush1.bf16.msra.mxu0 0
    %984 = vmatprep.subr.bf16.mxu0 0
    %985 = vmatpush1.bf16.msra.mxu0 0
    %986 = vmatprep.subr.bf16.mxu0 0
    %987 = vmatpush1.bf16.msra.mxu0 0
    %988 = vmatprep.subr.bf16.mxu0 0
    %989 = vmatpush1.bf16.msra.mxu0 0
    %990 = vmatprep.subr.bf16.mxu0 0
    %991 = vmatpush1.bf16.msra.mxu0 0
    %992 = vmatprep.subr.bf16.mxu0 0
    %993 = vmatpush1.bf16.msra.mxu0 0
    %994 = vmatprep.subr.bf16.mxu0 0
    %995 = vmatpush1.bf16.msra.mxu0 0
    %996 = vmatprep.subr.bf16.mxu0 0
    %997 = vmatpush1.bf16.msra.mxu0 0
    %998 = vmatprep.mubr.bf16.mxu0 0
    %999 = vmatmul.mubr.bf16.gmra.mrb[0].mxu0 %v961
    %v1000 = vpop.f32.mrb[0].mxu0
    %v1001 = vadd.f32 0.0, %v1000
    %v1002 = vpop.f32.mrb[0].mxu0
    %v1003 = vpop.f32.mrb[0].mxu0
    %v1004 = vadd.f32 0.0, %v1003
    %v1005 = vpop.f32.mrb[0].mxu0
    %1006 = vmatprep.mubr.bf16.mxu0 0
    %1007 = vmatmul.mubr.bf16.gmra.mrb[0].mxu0 %v964
    %v1008 = vpop.f32.mrb[0].mxu0
    %v1009 = vadd.f32 0.0, %v1008
    %v1010 = vpop.f32.mrb[0].mxu0
    %v1011 = vpop.f32.mrb[0].mxu0
    %v1012 = vadd.f32 0.0, %v1011
    %v1013 = vpop.f32.mrb[0].mxu0
    %1014 = vdwg.mxu0
    %v1015 = vpack.c.bf16 %v931, %v928
    %v1016 = vpack.c.bf16 %v939, %v936
    %1017 = vxpose.xlu0.c.b16.start [1/8] %v885, 128
    %1018 = vxpose.xlu0.c.b16.cont [2/8] %v886, 128
    %1019 = vxpose.xlu0.c.b16.cont [3/8] 0, 128
    %1020 = vxpose.xlu0.c.b16.cont [4/8] 0, 128
    %1021 = vxpose.xlu0.c.b16.cont [5/8] 0, 128
    %1022 = vxpose.xlu0.c.b16.cont [6/8] 0, 128
    %1023 = vxpose.xlu0.c.b16.cont [7/8] 0, 128
    %1024 = vxpose.xlu0.c.b16.end [8/8] 0, 128
    %v1025 = vpop.trf.xlu0
    %v1026 = vpop.trf.xlu0
    %v1027 = vpop.trf.xlu0
    %v1028 = vpop.trf.xlu0
    %v1029 = vpop.trf.xlu0
    %v1030 = vpop.trf.xlu0
    %v1031 = vpop.trf.xlu0
    %v1032 = vpop.trf.xlu0
    %v1034 = vsel %vm580, %v1025, 0
    %v1037 = vsel %vm580, %v1026, 0
    %1039 = vmatprep.subr.bf16.mxu0 0
    %1040 = vmatpush1.bf16.msra.mxu0 %v1015
    %1041 = vmatprep.subr.bf16.mxu0 0
    %1042 = vmatpush1.bf16.msra.mxu0 %v1016
    %1043 = vmatprep.subr.bf16.mxu0 0
    %1044 = vmatpush1.bf16.msra.mxu0 0
    %1045 = vmatprep.subr.bf16.mxu0 0
    %1046 = vmatpush1.bf16.msra.mxu0 0
    %1047 = vmatprep.subr.bf16.mxu0 0
    %1048 = vmatpush1.bf16.msra.mxu0 0
    %1049 = vmatprep.subr.bf16.mxu0 0
    %1050 = vmatpush1.bf16.msra.mxu0 0
    %1051 = vmatprep.subr.bf16.mxu0 0
    %1052 = vmatpush1.bf16.msra.mxu0 0
    %1053 = vmatprep.subr.bf16.mxu0 0
    %1054 = vmatpush1.bf16.msra.mxu0 0
    %1055 = vmatprep.subr.bf16.mxu0 0
    %1056 = vmatpush1.bf16.msra.mxu0 0
    %1057 = vmatprep.subr.bf16.mxu0 0
    %1058 = vmatpush1.bf16.msra.mxu0 0
    %1059 = vmatprep.subr.bf16.mxu0 0
    %1060 = vmatpush1.bf16.msra.mxu0 0
    %1061 = vmatprep.subr.bf16.mxu0 0
    %1062 = vmatpush1.bf16.msra.mxu0 0
    %1063 = vmatprep.subr.bf16.mxu0 0
    %1064 = vmatpush1.bf16.msra.mxu0 0
    %1065 = vmatprep.subr.bf16.mxu0 0
    %1066 = vmatpush1.bf16.msra.mxu0 0
    %1067 = vmatprep.subr.bf16.mxu0 0
    %1068 = vmatpush1.bf16.msra.mxu0 0
    %1069 = vmatprep.subr.bf16.mxu0 0
    %1070 = vmatpush1.bf16.msra.mxu0 0
    %1071 = vmatprep.mubr.bf16.mxu0 0
    %1072 = vmatmul.mubr.bf16.gmra.mrb[0].mxu0 %v1034
    %v1073 = vpop.f32.mrb[0].mxu0
    %v1074 = vadd.f32 0.0, %v1073
    %v1075 = vpop.f32.mrb[0].mxu0
    %v1076 = vpop.f32.mrb[0].mxu0
    %v1077 = vadd.f32 0.0, %v1076
    %v1078 = vpop.f32.mrb[0].mxu0
    %1079 = vmatprep.mubr.bf16.mxu0 0
    %1080 = vmatmul.mubr.bf16.gmra.mrb[0].mxu0 %v1037
    %v1081 = vpop.f32.mrb[0].mxu0
    %v1082 = vadd.f32 0.0, %v1081
    %v1083 = vpop.f32.mrb[0].mxu0
    %v1084 = vpop.f32.mrb[0].mxu0
    %v1085 = vadd.f32 0.0, %v1084
    %v1086 = vpop.f32.mrb[0].mxu0
    %1087 = vdwg.mxu0
    %v1088 = vmul.f32 %v1001, 0.5
    %v1089 = vmul.f32 %v1004, 0.5
    %v1090 = vmul.f32 %v1009, 0.5
    %v1091 = vmul.f32 %v1012, 0.5
    %v1092 = vmul.f32 %v1074, 0.5
    %v1093 = vmul.f32 %v1077, 0.5
    %v1094 = vmul.f32 %v1082, 0.5
    %v1095 = vmul.f32 %v1085, 0.5
    %v1096 = vadd.f32 %v1088, %v1092
    %v1097 = vadd.f32 %v1089, %v1093
    %v1098 = vadd.f32 %v1090, %v1094
    %v1099 = vadd.f32 %v1091, %v1095
    %v1100 = vmax.f32 %v1096, 0.0
    %v1101 = vmax.f32 %v1097, 0.0
    %v1102 = vmax.f32 %v1098, 0.0
    %v1103 = vmax.f32 %v1099, 0.0
    %v1104 = vld [vmem:[%s35] sm:$0xf]
    %v1105 = vld [vmem:[%s35 + $0x4] sm:$0xf]
    %v1106 = vld [vmem:[%s35 + $0x8] sm:$0xf]
    %v1107 = vld [vmem:[%s35 + $0xc] sm:$0xf]
    %v1108 = vld [vmem:[%s37] sm:$0x1]
    %v1109 = vpack.c.bf16 %v1101, %v1100
    %v1110 = vpack.c.bf16 %v1103, %v1102
    %v1112 = vlaneseq
    %v1113 = vshrl.u32 %v1112, 7
    %v1114 = vsub.s32 0, %v1113
    %v1115 = vrot.slane %v1108, %v1114
    %v1121 = vunpack.c.l.b16 %v1104
    %v1122 = vunpack.c.l.b16 %v1105
    %v1123 = vunpack.c.l.b16 %v1106
    %v1124 = vunpack.c.l.b16 %v1107
    %v1125 = vpack.c.b16 %v1122, %v1121
    %v1126 = vpack.c.b16 %v1124, %v1123
    %v1130 = vsel %vm580, %v1109, 0
    %v1133 = vsel %vm580, %v1110, 0
    %1135 = vmatprep.subr.bf16.mxu0 0
    %1136 = vmatpush1.bf16.msra.mxu0 %v1125
    %1137 = vmatprep.subr.bf16.mxu0 0
    %1138 = vmatpush1.bf16.msra.mxu0 %v1126
    %1139 = vmatprep.subr.bf16.mxu0 0
    %1140 = vmatpush1.bf16.msra.mxu0 0
    %1141 = vmatprep.subr.bf16.mxu0 0
    %1142 = vmatpush1.bf16.msra.mxu0 0
    %1143 = vmatprep.subr.bf16.mxu0 0
    %1144 = vmatpush1.bf16.msra.mxu0 0
    %1145 = vmatprep.subr.bf16.mxu0 0
    %1146 = vmatpush1.bf16.msra.mxu0 0
    %1147 = vmatprep.subr.bf16.mxu0 0
    %1148 = vmatpush1.bf16.msra.mxu0 0
    %1149 = vmatprep.subr.bf16.mxu0 0
    %1150 = vmatpush1.bf16.msra.mxu0 0
    %1151 = vmatprep.subr.bf16.mxu0 0
    %1152 = vmatpush1.bf16.msra.mxu0 0
    %1153 = vmatprep.subr.bf16.mxu0 0
    %1154 = vmatpush1.bf16.msra.mxu0 0
    %1155 = vmatprep.subr.bf16.mxu0 0
    %1156 = vmatpush1.bf16.msra.mxu0 0
    %1157 = vmatprep.subr.bf16.mxu0 0
    %1158 = vmatpush1.bf16.msra.mxu0 0
    %1159 = vmatprep.subr.bf16.mxu0 0
    %1160 = vmatpush1.bf16.msra.mxu0 0
    %1161 = vmatprep.subr.bf16.mxu0 0
    %1162 = vmatpush1.bf16.msra.mxu0 0
    %1163 = vmatprep.subr.bf16.mxu0 0
    %1164 = vmatpush1.bf16.msra.mxu0 0
    %1165 = vmatprep.subr.bf16.mxu0 0
    %1166 = vmatpush1.bf16.msra.mxu0 0
    %1167 = vmatprep.mubr.bf16.mxu0 0
    %1168 = vmatmul.mubr.bf16.gmra.mrb[0].mxu0 %v1130
    %v1169 = vpop.f32.mrb[0].mxu0
    %v1170 = vadd.f32 %v1115, %v1169
    %v1171 = vpop.f32.mrb[0].mxu0
    %v1172 = vpop.f32.mrb[0].mxu0
    %v1173 = vadd.f32 %v1115, %v1172
    %v1174 = vpop.f32.mrb[0].mxu0
    %1175 = vmatprep.mubr.bf16.mxu0 0
    %1176 = vmatmul.mubr.bf16.gmra.mrb[0].mxu0 %v1133
    %v1177 = vpop.f32.mrb[0].mxu0
    %v1178 = vadd.f32 %v1115, %v1177
    %v1179 = vpop.f32.mrb[0].mxu0
    %v1180 = vpop.f32.mrb[0].mxu0
    %v1181 = vadd.f32 %v1115, %v1180
    %v1182 = vpop.f32.mrb[0].mxu0
    %1183 = vdwg.mxu0
    %v1184 = vpack.c.bf16 %v1173, %v1170
    %v1185 = vpack.c.bf16 %v1181, %v1178
    %1188 = vrot.lane.b32.xlu0 %v1184, 96
    %v1189 = vpop.permute.xlu0 %1188
    %1190 = vrot.lane.b32.xlu0 %v1185, 96
    %v1191 = vpop.permute.xlu0 %1190
    %v1193 = vsel %vm580, %v1184, 0
    %v1196 = vsel %vm580, %v1185, 0
    %v1199 = vsel %vm580, %v1189, 0
    %v1202 = vsel %vm580, %v1191, 0
    %1204 = vmatprep.subr.bf16.mxu0 0
    %1205 = vmatpush1.bf16.xpose.msra.mxu0 %v1199
    %1206 = vmatprep.subr.bf16.mxu0 0
    %1207 = vmatpush1.bf16.xpose.msra.mxu0 %v1202
    %1208 = vmatprep.subr.bf16.mxu0 0
    %1209 = vmatpush1.bf16.xpose.msra.mxu0 0
    %1210 = vmatprep.subr.bf16.mxu0 0
    %1211 = vmatpush1.bf16.xpose.msra.mxu0 0
    %1212 = vmatprep.subr.bf16.mxu0 0
    %1213 = vmatpush1.bf16.xpose.msra.mxu0 0
    %1214 = vmatprep.subr.bf16.mxu0 0
    %1215 = vmatpush1.bf16.xpose.msra.mxu0 0
    %1216 = vmatprep.subr.bf16.mxu0 0
    %1217 = vmatpush1.bf16.xpose.msra.mxu0 0
    %1218 = vmatprep.subr.bf16.mxu0 0
    %1219 = vmatpush1.bf16.xpose.msra.mxu0 0
    %1220 = vmatprep.subr.bf16.mxu0 0
    %1221 = vmatpush1.bf16.xpose.msra.mxu0 0
    %1222 = vmatprep.subr.bf16.mxu0 0
    %1223 = vmatpush1.bf16.xpose.msra.mxu0 0
    %1224 = vmatprep.subr.bf16.mxu0 0
    %1225 = vmatpush1.bf16.xpose.msra.mxu0 0
    %1226 = vmatprep.subr.bf16.mxu0 0
    %1227 = vmatpush1.bf16.xpose.msra.mxu0 0
    %1228 = vmatprep.subr.bf16.mxu0 0
    %1229 = vmatpush1.bf16.xpose.msra.mxu0 0
    %1230 = vmatprep.subr.bf16.mxu0 0
    %1231 = vmatpush1.bf16.xpose.msra.mxu0 0
    %1232 = vmatprep.subr.bf16.mxu0 0
    %1233 = vmatpush1.bf16.xpose.msra.mxu0 0
    %1234 = vmatprep.subr.bf16.mxu0 0
    %1235 = vmatpush1.bf16.xpose.msra.mxu0 0
    %1236 = vmatprep.mubr.bf16.mxu0 0
    %1237 = vmatmul.mubr.bf16.gmra.mrb[0].mxu0 %v1193
    %v1238 = vpop.f32.mrb[0].mxu0
    %v1239 = vadd.f32 0.0, %v1238
    %v1240 = vpop.f32.mrb[0].mxu0
    %v1241 = vpop.f32.mrb[0].mxu0
    %v1242 = vadd.f32 0.0, %v1241
    %v1243 = vpop.f32.mrb[0].mxu0
    %1244 = vmatprep.mubr.bf16.mxu0 0
    %1245 = vmatmul.mubr.bf16.gmra.mrb[0].mxu0 %v1196
    %v1246 = vpop.f32.mrb[0].mxu0
    %v1247 = vadd.f32 0.0, %v1246
    %v1248 = vpop.f32.mrb[0].mxu0
    %v1249 = vpop.f32.mrb[0].mxu0
    %v1250 = vadd.f32 0.0, %v1249
    %v1251 = vpop.f32.mrb[0].mxu0
    %1252 = vdwg.mxu0
    %v1253 = vmul.f32 %v1239, 0.17677669
    %v1254 = vmul.f32 %v1242, 0.17677669
    %v1255 = vmul.f32 %v1247, 0.17677669
    %v1256 = vmul.f32 %v1250, 0.17677669
    %v1257 = vsel %vm658, %v1253, -1e+30
    %v1258 = vsel %vm659, %v1254, -1e+30
    %v1259 = vsel %vm660, %v1255, -1e+30
    %v1260 = vsel %vm661, %v1256, -1e+30
    %v1261 = vsel %vm580, %v1257, -inf
    %1262 = vmax.xlane.f32.xlu0 %v1261
    %v1263 = vpop.xlane.xlu0 %1262
    %v1264 = vsel %vm580, %v1258, -inf
    %1265 = vmax.xlane.f32.xlu0 %v1264
    %v1266 = vpop.xlane.xlu0 %1265
    %v1267 = vsel %vm580, %v1259, -inf
    %1268 = vmax.xlane.f32.xlu0 %v1267
    %v1269 = vpop.xlane.xlu0 %1268
    %v1270 = vsel %vm580, %v1260, -inf
    %1271 = vmax.xlane.f32.xlu0 %v1270
    %v1272 = vpop.xlane.xlu0 %1271
    %v1273 = vsub.f32 %v1257, %v1263
    %v1274 = vsub.f32 %v1258, %v1266
    %v1275 = vsub.f32 %v1259, %v1269
    %v1276 = vsub.f32 %v1260, %v1272
    %v1277 = vmul.f32 %v1273, 1.442695
    %v1278 = vpow.pop %v1277
    %v1279 = vmul.f32 %v1274, 1.442695
    %v1280 = vpow.pop %v1279
    %v1281 = vmul.f32 %v1275, 1.442695
    %v1282 = vpow.pop %v1281
    %v1283 = vmul.f32 %v1276, 1.442695
    %v1284 = vpow.pop %v1283
    %v1285 = vmul.f32 %v1278, %v694
    %v1286 = vmul.f32 %v1280, %v695
    %v1287 = vmul.f32 %v1282, %v696
    %v1288 = vmul.f32 %v1284, %v697
    %v1289 = vsel %vm580, %v1285, 0.0
    %1290 = vadd.xlane.f32.xlu0 %v1289
    %v1291 = vpop.xlane.xlu0 %1290
    %v1292 = vsel %vm580, %v1286, 0.0
    %1293 = vadd.xlane.f32.xlu0 %v1292
    %v1294 = vpop.xlane.xlu0 %1293
    %v1295 = vsel %vm580, %v1287, 0.0
    %1296 = vadd.xlane.f32.xlu0 %v1295
    %v1297 = vpop.xlane.xlu0 %1296
    %v1298 = vsel %vm580, %v1288, 0.0
    %1299 = vadd.xlane.f32.xlu0 %v1298
    %v1300 = vpop.xlane.xlu0 %1299
    %v1301 = vmax.f32 %v1291, 1e-30
    %v1302 = vmax.f32 %v1294, 1e-30
    %v1303 = vmax.f32 %v1297, 1e-30
    %v1304 = vmax.f32 %v1300, 1e-30
    %v1305 = vrcp.pop %v1301
    %v1306 = vrcp.pop %v1302
    %v1307 = vrcp.pop %v1303
    %v1308 = vrcp.pop %v1304
    %v1309 = vmul.f32 %v1285, %v1305
    %v1310 = vmul.f32 %v1286, %v1306
    %v1311 = vmul.f32 %v1287, %v1307
    %v1312 = vmul.f32 %v1288, %v1308
    %v1313 = vpack.c.bf16 %v1310, %v1309
    %v1314 = vpack.c.bf16 %v1312, %v1311
    %1315 = vrot.lane.b32.xlu0 %v1184, 64
    %v1316 = vpop.permute.xlu0 %1315
    %1317 = vrot.lane.b32.xlu0 %v1185, 64
    %v1318 = vpop.permute.xlu0 %1317
    %1325 = vrot.lane.b32.xlu0 %v1170, 32
    %v1326 = vpop.permute.xlu0 %1325
    %1327 = vrot.lane.b32.xlu0 %v1173, 32
    %v1328 = vpop.permute.xlu0 %1327
    %1329 = vrot.lane.b32.xlu0 %v1178, 32
    %v1330 = vpop.permute.xlu0 %1329
    %1331 = vrot.lane.b32.xlu0 %v1181, 32
    %v1332 = vpop.permute.xlu0 %1331
    %v1338 = vsel %vm580, %v1313, 0
    %v1341 = vsel %vm580, %v1314, 0
    %1343 = vmatprep.subr.bf16.mxu0 0
    %1344 = vmatpush1.bf16.msra.mxu0 %v1316
    %1345 = vmatprep.subr.bf16.mxu0 0
    %1346 = vmatpush1.bf16.msra.mxu0 %v1318
    %1347 = vmatprep.subr.bf16.mxu0 0
    %1348 = vmatpush1.bf16.msra.mxu0 0
    %1349 = vmatprep.subr.bf16.mxu0 0
    %1350 = vmatpush1.bf16.msra.mxu0 0
    %1351 = vmatprep.subr.bf16.mxu0 0
    %1352 = vmatpush1.bf16.msra.mxu0 0
    %1353 = vmatprep.subr.bf16.mxu0 0
    %1354 = vmatpush1.bf16.msra.mxu0 0
    %1355 = vmatprep.subr.bf16.mxu0 0
    %1356 = vmatpush1.bf16.msra.mxu0 0
    %1357 = vmatprep.subr.bf16.mxu0 0
    %1358 = vmatpush1.bf16.msra.mxu0 0
    %1359 = vmatprep.subr.bf16.mxu0 0
    %1360 = vmatpush1.bf16.msra.mxu0 0
    %1361 = vmatprep.subr.bf16.mxu0 0
    %1362 = vmatpush1.bf16.msra.mxu0 0
    %1363 = vmatprep.subr.bf16.mxu0 0
    %1364 = vmatpush1.bf16.msra.mxu0 0
    %1365 = vmatprep.subr.bf16.mxu0 0
    %1366 = vmatpush1.bf16.msra.mxu0 0
    %1367 = vmatprep.subr.bf16.mxu0 0
    %1368 = vmatpush1.bf16.msra.mxu0 0
    %1369 = vmatprep.subr.bf16.mxu0 0
    %1370 = vmatpush1.bf16.msra.mxu0 0
    %1371 = vmatprep.subr.bf16.mxu0 0
    %1372 = vmatpush1.bf16.msra.mxu0 0
    %1373 = vmatprep.subr.bf16.mxu0 0
    %1374 = vmatpush1.bf16.msra.mxu0 0
    %1375 = vmatprep.mubr.bf16.mxu0 0
    %1376 = vmatmul.mubr.bf16.gmra.mrb[0].mxu0 %v1338
    %v1377 = vpop.f32.mrb[0].mxu0
    %v1378 = vadd.f32 %v1326, %v1377
    %v1379 = vpop.f32.mrb[0].mxu0
    %v1380 = vpop.f32.mrb[0].mxu0
    %v1381 = vadd.f32 %v1328, %v1380
    %v1382 = vpop.f32.mrb[0].mxu0
    %1383 = vmatprep.mubr.bf16.mxu0 0
    %1384 = vmatmul.mubr.bf16.gmra.mrb[0].mxu0 %v1341
    %v1385 = vpop.f32.mrb[0].mxu0
    %v1386 = vadd.f32 %v1330, %v1385
    %v1387 = vpop.f32.mrb[0].mxu0
    %v1388 = vpop.f32.mrb[0].mxu0
    %v1389 = vadd.f32 %v1332, %v1388
    %v1390 = vpop.f32.mrb[0].mxu0
    %1391 = vdwg.mxu0
    %v1392 = vpack.c.bf16 %v1381, %v1378
    %v1393 = vpack.c.bf16 %v1389, %v1386
    %v1395 = vsel %vm580, %v1392, 0
    %v1398 = vsel %vm580, %v1393, 0
    %1400 = vmatprep.subr.bf16.mxu0 0
    %1401 = vmatpush1.bf16.msra.mxu0 %v1125
    %1402 = vmatprep.subr.bf16.mxu0 0
    %1403 = vmatpush1.bf16.msra.mxu0 %v1126
    %1404 = vmatprep.subr.bf16.mxu0 0
    %1405 = vmatpush1.bf16.msra.mxu0 0
    %1406 = vmatprep.subr.bf16.mxu0 0
    %1407 = vmatpush1.bf16.msra.mxu0 0
    %1408 = vmatprep.subr.bf16.mxu0 0
    %1409 = vmatpush1.bf16.msra.mxu0 0
    %1410 = vmatprep.subr.bf16.mxu0 0
    %1411 = vmatpush1.bf16.msra.mxu0 0
    %1412 = vmatprep.subr.bf16.mxu0 0
    %1413 = vmatpush1.bf16.msra.mxu0 0
    %1414 = vmatprep.subr.bf16.mxu0 0
    %1415 = vmatpush1.bf16.msra.mxu0 0
    %1416 = vmatprep.subr.bf16.mxu0 0
    %1417 = vmatpush1.bf16.msra.mxu0 0
    %1418 = vmatprep.subr.bf16.mxu0 0
    %1419 = vmatpush1.bf16.msra.mxu0 0
    %1420 = vmatprep.subr.bf16.mxu0 0
    %1421 = vmatpush1.bf16.msra.mxu0 0
    %1422 = vmatprep.subr.bf16.mxu0 0
    %1423 = vmatpush1.bf16.msra.mxu0 0
    %1424 = vmatprep.subr.bf16.mxu0 0
    %1425 = vmatpush1.bf16.msra.mxu0 0
    %1426 = vmatprep.subr.bf16.mxu0 0
    %1427 = vmatpush1.bf16.msra.mxu0 0
    %1428 = vmatprep.subr.bf16.mxu0 0
    %1429 = vmatpush1.bf16.msra.mxu0 0
    %1430 = vmatprep.subr.bf16.mxu0 0
    %1431 = vmatpush1.bf16.msra.mxu0 0
    %1432 = vmatprep.mubr.bf16.mxu0 0
    %1433 = vmatmul.mubr.bf16.gmra.mrb[0].mxu0 %v1395
    %v1434 = vpop.f32.mrb[0].mxu0
    %v1435 = vadd.f32 %v1115, %v1434
    %v1436 = vpop.f32.mrb[0].mxu0
    %v1437 = vpop.f32.mrb[0].mxu0
    %v1438 = vadd.f32 %v1115, %v1437
    %v1439 = vpop.f32.mrb[0].mxu0
    %1440 = vmatprep.mubr.bf16.mxu0 0
    %1441 = vmatmul.mubr.bf16.gmra.mrb[0].mxu0 %v1398
    %v1442 = vpop.f32.mrb[0].mxu0
    %v1443 = vadd.f32 %v1115, %v1442
    %v1444 = vpop.f32.mrb[0].mxu0
    %v1445 = vpop.f32.mrb[0].mxu0
    %v1446 = vadd.f32 %v1115, %v1445
    %v1447 = vpop.f32.mrb[0].mxu0
    %1448 = vdwg.mxu0
    %v1449 = vpack.c.bf16 %v1438, %v1435
    %v1450 = vpack.c.bf16 %v1446, %v1443
    %1453 = vrot.lane.b32.xlu0 %v1449, 96
    %v1454 = vpop.permute.xlu0 %1453
    %1455 = vrot.lane.b32.xlu0 %v1450, 96
    %v1456 = vpop.permute.xlu0 %1455
    %v1458 = vsel %vm580, %v1449, 0
    %v1461 = vsel %vm580, %v1450, 0
    %v1464 = vsel %vm580, %v1454, 0
    %v1467 = vsel %vm580, %v1456, 0
    %1469 = vmatprep.subr.bf16.mxu0 0
    %1470 = vmatpush1.bf16.xpose.msra.mxu0 %v1464
    %1471 = vmatprep.subr.bf16.mxu0 0
    %1472 = vmatpush1.bf16.xpose.msra.mxu0 %v1467
    %1473 = vmatprep.subr.bf16.mxu0 0
    %1474 = vmatpush1.bf16.xpose.msra.mxu0 0
    %1475 = vmatprep.subr.bf16.mxu0 0
    %1476 = vmatpush1.bf16.xpose.msra.mxu0 0
    %1477 = vmatprep.subr.bf16.mxu0 0
    %1478 = vmatpush1.bf16.xpose.msra.mxu0 0
    %1479 = vmatprep.subr.bf16.mxu0 0
    %1480 = vmatpush1.bf16.xpose.msra.mxu0 0
    %1481 = vmatprep.subr.bf16.mxu0 0
    %1482 = vmatpush1.bf16.xpose.msra.mxu0 0
    %1483 = vmatprep.subr.bf16.mxu0 0
    %1484 = vmatpush1.bf16.xpose.msra.mxu0 0
    %1485 = vmatprep.subr.bf16.mxu0 0
    %1486 = vmatpush1.bf16.xpose.msra.mxu0 0
    %1487 = vmatprep.subr.bf16.mxu0 0
    %1488 = vmatpush1.bf16.xpose.msra.mxu0 0
    %1489 = vmatprep.subr.bf16.mxu0 0
    %1490 = vmatpush1.bf16.xpose.msra.mxu0 0
    %1491 = vmatprep.subr.bf16.mxu0 0
    %1492 = vmatpush1.bf16.xpose.msra.mxu0 0
    %1493 = vmatprep.subr.bf16.mxu0 0
    %1494 = vmatpush1.bf16.xpose.msra.mxu0 0
    %1495 = vmatprep.subr.bf16.mxu0 0
    %1496 = vmatpush1.bf16.xpose.msra.mxu0 0
    %1497 = vmatprep.subr.bf16.mxu0 0
    %1498 = vmatpush1.bf16.xpose.msra.mxu0 0
    %1499 = vmatprep.subr.bf16.mxu0 0
    %1500 = vmatpush1.bf16.xpose.msra.mxu0 0
    %1501 = vmatprep.mubr.bf16.mxu0 0
    %1502 = vmatmul.mubr.bf16.gmra.mrb[0].mxu0 %v1458
    %v1503 = vpop.f32.mrb[0].mxu0
    %v1504 = vadd.f32 0.0, %v1503
    %v1505 = vpop.f32.mrb[0].mxu0
    %v1506 = vpop.f32.mrb[0].mxu0
    %v1507 = vadd.f32 0.0, %v1506
    %v1508 = vpop.f32.mrb[0].mxu0
    %1509 = vmatprep.mubr.bf16.mxu0 0
    %1510 = vmatmul.mubr.bf16.gmra.mrb[0].mxu0 %v1461
    %v1511 = vpop.f32.mrb[0].mxu0
    %v1512 = vadd.f32 0.0, %v1511
    %v1513 = vpop.f32.mrb[0].mxu0
    %v1514 = vpop.f32.mrb[0].mxu0
    %v1515 = vadd.f32 0.0, %v1514
    %v1516 = vpop.f32.mrb[0].mxu0
    %1517 = vdwg.mxu0
    %v1518 = vmul.f32 %v1504, 0.17677669
    %v1519 = vmul.f32 %v1507, 0.17677669
    %v1520 = vmul.f32 %v1512, 0.17677669
    %v1521 = vmul.f32 %v1515, 0.17677669
    %v1522 = vsel %vm738, %v1518, -1e+30
    %v1523 = vsel %vm739, %v1519, -1e+30
    %v1524 = vsel %vm740, %v1520, -1e+30
    %v1525 = vsel %vm741, %v1521, -1e+30
    %v1526 = vsel %vm580, %v1522, -inf
    %1527 = vmax.xlane.f32.xlu0 %v1526
    %v1528 = vpop.xlane.xlu0 %1527
    %v1529 = vsel %vm580, %v1523, -inf
    %1530 = vmax.xlane.f32.xlu0 %v1529
    %v1531 = vpop.xlane.xlu0 %1530
    %v1532 = vsel %vm580, %v1524, -inf
    %1533 = vmax.xlane.f32.xlu0 %v1532
    %v1534 = vpop.xlane.xlu0 %1533
    %v1535 = vsel %vm580, %v1525, -inf
    %1536 = vmax.xlane.f32.xlu0 %v1535
    %v1537 = vpop.xlane.xlu0 %1536
    %v1538 = vsub.f32 %v1522, %v1528
    %v1539 = vsub.f32 %v1523, %v1531
    %v1540 = vsub.f32 %v1524, %v1534
    %v1541 = vsub.f32 %v1525, %v1537
    %v1542 = vmul.f32 %v1538, 1.442695
    %v1543 = vpow.pop %v1542
    %v1544 = vmul.f32 %v1539, 1.442695
    %v1545 = vpow.pop %v1544
    %v1546 = vmul.f32 %v1540, 1.442695
    %v1547 = vpow.pop %v1546
    %v1548 = vmul.f32 %v1541, 1.442695
    %v1549 = vpow.pop %v1548
    %v1550 = vmul.f32 %v1543, %v774
    %v1551 = vmul.f32 %v1545, %v775
    %v1552 = vmul.f32 %v1547, %v776
    %v1553 = vmul.f32 %v1549, %v777
    %v1554 = vsel %vm580, %v1550, 0.0
    %1555 = vadd.xlane.f32.xlu0 %v1554
    %v1556 = vpop.xlane.xlu0 %1555
    %v1557 = vsel %vm580, %v1551, 0.0
    %1558 = vadd.xlane.f32.xlu0 %v1557
    %v1559 = vpop.xlane.xlu0 %1558
    %v1560 = vsel %vm580, %v1552, 0.0
    %1561 = vadd.xlane.f32.xlu0 %v1560
    %v1562 = vpop.xlane.xlu0 %1561
    %v1563 = vsel %vm580, %v1553, 0.0
    %1564 = vadd.xlane.f32.xlu0 %v1563
    %v1565 = vpop.xlane.xlu0 %1564
    %v1566 = vmax.f32 %v1556, 1e-30
    %v1567 = vmax.f32 %v1559, 1e-30
    %v1568 = vmax.f32 %v1562, 1e-30
    %v1569 = vmax.f32 %v1565, 1e-30
    %v1570 = vrcp.pop %v1566
    %v1571 = vrcp.pop %v1567
    %v1572 = vrcp.pop %v1568
    %v1573 = vrcp.pop %v1569
    %v1574 = vmul.f32 %v1550, %v1570
    %v1575 = vmul.f32 %v1551, %v1571
    %v1576 = vmul.f32 %v1552, %v1572
    %v1577 = vmul.f32 %v1553, %v1573
    %v1578 = vpack.c.bf16 %v1575, %v1574
    %v1579 = vpack.c.bf16 %v1577, %v1576
    %1580 = vrot.lane.b32.xlu0 %v1449, 64
    %v1581 = vpop.permute.xlu0 %1580
    %1582 = vrot.lane.b32.xlu0 %v1450, 64
    %v1583 = vpop.permute.xlu0 %1582
    %1590 = vrot.lane.b32.xlu0 %v1435, 32
    %v1591 = vpop.permute.xlu0 %1590
    %1592 = vrot.lane.b32.xlu0 %v1438, 32
    %v1593 = vpop.permute.xlu0 %1592
    %1594 = vrot.lane.b32.xlu0 %v1443, 32
    %v1595 = vpop.permute.xlu0 %1594
    %1596 = vrot.lane.b32.xlu0 %v1446, 32
    %v1597 = vpop.permute.xlu0 %1596
    %v1603 = vsel %vm580, %v1578, 0
    %v1606 = vsel %vm580, %v1579, 0
    %1608 = vmatprep.subr.bf16.mxu0 0
    %1609 = vmatpush1.bf16.msra.mxu0 %v1581
    %1610 = vmatprep.subr.bf16.mxu0 0
    %1611 = vmatpush1.bf16.msra.mxu0 %v1583
    %1612 = vmatprep.subr.bf16.mxu0 0
    %1613 = vmatpush1.bf16.msra.mxu0 0
    %1614 = vmatprep.subr.bf16.mxu0 0
    %1615 = vmatpush1.bf16.msra.mxu0 0
    %1616 = vmatprep.subr.bf16.mxu0 0
    %1617 = vmatpush1.bf16.msra.mxu0 0
    %1618 = vmatprep.subr.bf16.mxu0 0
    %1619 = vmatpush1.bf16.msra.mxu0 0
    %1620 = vmatprep.subr.bf16.mxu0 0
    %1621 = vmatpush1.bf16.msra.mxu0 0
    %1622 = vmatprep.subr.bf16.mxu0 0
    %1623 = vmatpush1.bf16.msra.mxu0 0
    %1624 = vmatprep.subr.bf16.mxu0 0
    %1625 = vmatpush1.bf16.msra.mxu0 0
    %1626 = vmatprep.subr.bf16.mxu0 0
    %1627 = vmatpush1.bf16.msra.mxu0 0
    %1628 = vmatprep.subr.bf16.mxu0 0
    %1629 = vmatpush1.bf16.msra.mxu0 0
    %1630 = vmatprep.subr.bf16.mxu0 0
    %1631 = vmatpush1.bf16.msra.mxu0 0
    %1632 = vmatprep.subr.bf16.mxu0 0
    %1633 = vmatpush1.bf16.msra.mxu0 0
    %1634 = vmatprep.subr.bf16.mxu0 0
    %1635 = vmatpush1.bf16.msra.mxu0 0
    %1636 = vmatprep.subr.bf16.mxu0 0
    %1637 = vmatpush1.bf16.msra.mxu0 0
    %1638 = vmatprep.subr.bf16.mxu0 0
    %1639 = vmatpush1.bf16.msra.mxu0 0
    %1640 = vmatprep.mubr.bf16.mxu0 0
    %1641 = vmatmul.mubr.bf16.gmra.mrb[0].mxu0 %v1603
    %v1642 = vpop.f32.mrb[0].mxu0
    %v1643 = vadd.f32 %v1591, %v1642
    %v1644 = vpop.f32.mrb[0].mxu0
    %v1645 = vpop.f32.mrb[0].mxu0
    %v1646 = vadd.f32 %v1593, %v1645
    %v1647 = vpop.f32.mrb[0].mxu0
    %1648 = vmatprep.mubr.bf16.mxu0 0
    %1649 = vmatmul.mubr.bf16.gmra.mrb[0].mxu0 %v1606
    %v1650 = vpop.f32.mrb[0].mxu0
    %v1651 = vadd.f32 %v1595, %v1650
    %v1652 = vpop.f32.mrb[0].mxu0
    %v1653 = vpop.f32.mrb[0].mxu0
    %v1654 = vadd.f32 %v1597, %v1653
    %v1655 = vpop.f32.mrb[0].mxu0
    %1656 = vdwg.mxu0
    %1657 = vxpose.xlu0.c.b16.start [1/8] %v1313, 128
    %1658 = vxpose.xlu0.c.b16.cont [2/8] %v1314, 128
    %1659 = vxpose.xlu0.c.b16.cont [3/8] 0, 128
    %1660 = vxpose.xlu0.c.b16.cont [4/8] 0, 128
    %1661 = vxpose.xlu0.c.b16.cont [5/8] 0, 128
    %1662 = vxpose.xlu0.c.b16.cont [6/8] 0, 128
    %1663 = vxpose.xlu0.c.b16.cont [7/8] 0, 128
    %1664 = vxpose.xlu0.c.b16.end [8/8] 0, 128
    %v1665 = vpop.trf.xlu0
    %v1666 = vpop.trf.xlu0
    %v1667 = vpop.trf.xlu0
    %v1668 = vpop.trf.xlu0
    %v1669 = vpop.trf.xlu0
    %v1670 = vpop.trf.xlu0
    %v1671 = vpop.trf.xlu0
    %v1672 = vpop.trf.xlu0
    %v1674 = vsel %vm580, %v1665, 0
    %v1677 = vsel %vm580, %v1666, 0
    %1679 = vmatprep.subr.bf16.mxu0 0
    %1680 = vmatpush1.bf16.msra.mxu0 %v1392
    %1681 = vmatprep.subr.bf16.mxu0 0
    %1682 = vmatpush1.bf16.msra.mxu0 %v1393
    %1683 = vmatprep.subr.bf16.mxu0 0
    %1684 = vmatpush1.bf16.msra.mxu0 0
    %1685 = vmatprep.subr.bf16.mxu0 0
    %1686 = vmatpush1.bf16.msra.mxu0 0
    %1687 = vmatprep.subr.bf16.mxu0 0
    %1688 = vmatpush1.bf16.msra.mxu0 0
    %1689 = vmatprep.subr.bf16.mxu0 0
    %1690 = vmatpush1.bf16.msra.mxu0 0
    %1691 = vmatprep.subr.bf16.mxu0 0
    %1692 = vmatpush1.bf16.msra.mxu0 0
    %1693 = vmatprep.subr.bf16.mxu0 0
    %1694 = vmatpush1.bf16.msra.mxu0 0
    %1695 = vmatprep.subr.bf16.mxu0 0
    %1696 = vmatpush1.bf16.msra.mxu0 0
    %1697 = vmatprep.subr.bf16.mxu0 0
    %1698 = vmatpush1.bf16.msra.mxu0 0
    %1699 = vmatprep.subr.bf16.mxu0 0
    %1700 = vmatpush1.bf16.msra.mxu0 0
    %1701 = vmatprep.subr.bf16.mxu0 0
    %1702 = vmatpush1.bf16.msra.mxu0 0
    %1703 = vmatprep.subr.bf16.mxu0 0
    %1704 = vmatpush1.bf16.msra.mxu0 0
    %1705 = vmatprep.subr.bf16.mxu0 0
    %1706 = vmatpush1.bf16.msra.mxu0 0
    %1707 = vmatprep.subr.bf16.mxu0 0
    %1708 = vmatpush1.bf16.msra.mxu0 0
    %1709 = vmatprep.subr.bf16.mxu0 0
    %1710 = vmatpush1.bf16.msra.mxu0 0
    %1711 = vmatprep.mubr.bf16.mxu0 0
    %1712 = vmatmul.mubr.bf16.gmra.mrb[0].mxu0 %v1674
    %v1713 = vpop.f32.mrb[0].mxu0
    %v1714 = vadd.f32 0.0, %v1713
    %v1715 = vpop.f32.mrb[0].mxu0
    %v1716 = vpop.f32.mrb[0].mxu0
    %v1717 = vadd.f32 0.0, %v1716
    %v1718 = vpop.f32.mrb[0].mxu0
    %1719 = vmatprep.mubr.bf16.mxu0 0
    %1720 = vmatmul.mubr.bf16.gmra.mrb[0].mxu0 %v1677
    %v1721 = vpop.f32.mrb[0].mxu0
    %v1722 = vadd.f32 0.0, %v1721
    %v1723 = vpop.f32.mrb[0].mxu0
    %v1724 = vpop.f32.mrb[0].mxu0
    %v1725 = vadd.f32 0.0, %v1724
    %v1726 = vpop.f32.mrb[0].mxu0
    %1727 = vdwg.mxu0
    %v1728 = vpack.c.bf16 %v1646, %v1643
    %v1729 = vpack.c.bf16 %v1654, %v1651
    %1730 = vxpose.xlu0.c.b16.start [1/8] %v1578, 128
    %1731 = vxpose.xlu0.c.b16.cont [2/8] %v1579, 128
    %1732 = vxpose.xlu0.c.b16.cont [3/8] 0, 128
    %1733 = vxpose.xlu0.c.b16.cont [4/8] 0, 128
    %1734 = vxpose.xlu0.c.b16.cont [5/8] 0, 128
    %1735 = vxpose.xlu0.c.b16.cont [6/8] 0, 128
    %1736 = vxpose.xlu0.c.b16.cont [7/8] 0, 128
    %1737 = vxpose.xlu0.c.b16.end [8/8] 0, 128
    %v1738 = vpop.trf.xlu0
    %v1739 = vpop.trf.xlu0
    %v1740 = vpop.trf.xlu0
    %v1741 = vpop.trf.xlu0
    %v1742 = vpop.trf.xlu0
    %v1743 = vpop.trf.xlu0
    %v1744 = vpop.trf.xlu0
    %v1745 = vpop.trf.xlu0
    %v1747 = vsel %vm580, %v1738, 0
    %v1750 = vsel %vm580, %v1739, 0
    %1752 = vmatprep.subr.bf16.mxu0 0
    %1753 = vmatpush1.bf16.msra.mxu0 %v1728
    %1754 = vmatprep.subr.bf16.mxu0 0
    %1755 = vmatpush1.bf16.msra.mxu0 %v1729
    %1756 = vmatprep.subr.bf16.mxu0 0
    %1757 = vmatpush1.bf16.msra.mxu0 0
    %1758 = vmatprep.subr.bf16.mxu0 0
    %1759 = vmatpush1.bf16.msra.mxu0 0
    %1760 = vmatprep.subr.bf16.mxu0 0
    %1761 = vmatpush1.bf16.msra.mxu0 0
    %1762 = vmatprep.subr.bf16.mxu0 0
    %1763 = vmatpush1.bf16.msra.mxu0 0
    %1764 = vmatprep.subr.bf16.mxu0 0
    %1765 = vmatpush1.bf16.msra.mxu0 0
    %1766 = vmatprep.subr.bf16.mxu0 0
    %1767 = vmatpush1.bf16.msra.mxu0 0
    %1768 = vmatprep.subr.bf16.mxu0 0
    %1769 = vmatpush1.bf16.msra.mxu0 0
    %1770 = vmatprep.subr.bf16.mxu0 0
    %1771 = vmatpush1.bf16.msra.mxu0 0
    %1772 = vmatprep.subr.bf16.mxu0 0
    %1773 = vmatpush1.bf16.msra.mxu0 0
    %1774 = vmatprep.subr.bf16.mxu0 0
    %1775 = vmatpush1.bf16.msra.mxu0 0
    %1776 = vmatprep.subr.bf16.mxu0 0
    %1777 = vmatpush1.bf16.msra.mxu0 0
    %1778 = vmatprep.subr.bf16.mxu0 0
    %1779 = vmatpush1.bf16.msra.mxu0 0
    %1780 = vmatprep.subr.bf16.mxu0 0
    %1781 = vmatpush1.bf16.msra.mxu0 0
    %1782 = vmatprep.subr.bf16.mxu0 0
    %1783 = vmatpush1.bf16.msra.mxu0 0
    %1784 = vmatprep.mubr.bf16.mxu0 0
    %1785 = vmatmul.mubr.bf16.gmra.mrb[0].mxu0 %v1747
    %v1786 = vpop.f32.mrb[0].mxu0
    %v1787 = vadd.f32 0.0, %v1786
    %v1788 = vpop.f32.mrb[0].mxu0
    %v1789 = vpop.f32.mrb[0].mxu0
    %v1790 = vadd.f32 0.0, %v1789
    %v1791 = vpop.f32.mrb[0].mxu0
    %1792 = vmatprep.mubr.bf16.mxu0 0
    %1793 = vmatmul.mubr.bf16.gmra.mrb[0].mxu0 %v1750
    %v1794 = vpop.f32.mrb[0].mxu0
    %v1795 = vadd.f32 0.0, %v1794
    %v1796 = vpop.f32.mrb[0].mxu0
    %v1797 = vpop.f32.mrb[0].mxu0
    %v1798 = vadd.f32 0.0, %v1797
    %v1799 = vpop.f32.mrb[0].mxu0
    %1800 = vdwg.mxu0
    %v1801 = vmul.f32 %v1714, 0.5
    %v1802 = vmul.f32 %v1717, 0.5
    %v1803 = vmul.f32 %v1722, 0.5
    %v1804 = vmul.f32 %v1725, 0.5
    %v1805 = vmul.f32 %v1787, 0.5
    %v1806 = vmul.f32 %v1790, 0.5
    %v1807 = vmul.f32 %v1795, 0.5
    %v1808 = vmul.f32 %v1798, 0.5
    %v1809 = vadd.f32 %v1801, %v1805
    %v1810 = vadd.f32 %v1802, %v1806
    %v1811 = vadd.f32 %v1803, %v1807
    %v1812 = vadd.f32 %v1804, %v1808
    %v1813 = vmax.f32 %v1809, 0.0
    %v1814 = vmax.f32 %v1810, 0.0
    %v1815 = vmax.f32 %v1811, 0.0
    %v1816 = vmax.f32 %v1812, 0.0
    %v1817 = vld [vmem:[%s39] sm:$0xf]
    %v1818 = vld [vmem:[%s39 + $0x4] sm:$0xf]
    %v1819 = vld [vmem:[%s39 + $0x8] sm:$0xf]
    %v1820 = vld [vmem:[%s39 + $0xc] sm:$0xf]
    %v1821 = vld [vmem:[%s41] sm:$0x1]
    %v1822 = vpack.c.bf16 %v1814, %v1813
    %v1823 = vpack.c.bf16 %v1816, %v1815
    %v1825 = vlaneseq
    %v1826 = vshrl.u32 %v1825, 7
    %v1827 = vsub.s32 0, %v1826
    %v1828 = vrot.slane %v1821, %v1827
    %v1834 = vunpack.c.l.b16 %v1817
    %v1835 = vunpack.c.l.b16 %v1818
    %v1836 = vunpack.c.l.b16 %v1819
    %v1837 = vunpack.c.l.b16 %v1820
    %v1838 = vpack.c.b16 %v1835, %v1834
    %v1839 = vpack.c.b16 %v1837, %v1836
    %v1843 = vsel %vm580, %v1822, 0
    %v1846 = vsel %vm580, %v1823, 0
    %1848 = vmatprep.subr.bf16.mxu0 0
    %1849 = vmatpush1.bf16.msra.mxu0 %v1838
    %1850 = vmatprep.subr.bf16.mxu0 0
    %1851 = vmatpush1.bf16.msra.mxu0 %v1839
    %1852 = vmatprep.subr.bf16.mxu0 0
    %1853 = vmatpush1.bf16.msra.mxu0 0
    %1854 = vmatprep.subr.bf16.mxu0 0
    %1855 = vmatpush1.bf16.msra.mxu0 0
    %1856 = vmatprep.subr.bf16.mxu0 0
    %1857 = vmatpush1.bf16.msra.mxu0 0
    %1858 = vmatprep.subr.bf16.mxu0 0
    %1859 = vmatpush1.bf16.msra.mxu0 0
    %1860 = vmatprep.subr.bf16.mxu0 0
    %1861 = vmatpush1.bf16.msra.mxu0 0
    %1862 = vmatprep.subr.bf16.mxu0 0
    %1863 = vmatpush1.bf16.msra.mxu0 0
    %1864 = vmatprep.subr.bf16.mxu0 0
    %1865 = vmatpush1.bf16.msra.mxu0 0
    %1866 = vmatprep.subr.bf16.mxu0 0
    %1867 = vmatpush1.bf16.msra.mxu0 0
    %1868 = vmatprep.subr.bf16.mxu0 0
    %1869 = vmatpush1.bf16.msra.mxu0 0
    %1870 = vmatprep.subr.bf16.mxu0 0
    %1871 = vmatpush1.bf16.msra.mxu0 0
    %1872 = vmatprep.subr.bf16.mxu0 0
    %1873 = vmatpush1.bf16.msra.mxu0 0
    %1874 = vmatprep.subr.bf16.mxu0 0
    %1875 = vmatpush1.bf16.msra.mxu0 0
    %1876 = vmatprep.subr.bf16.mxu0 0
    %1877 = vmatpush1.bf16.msra.mxu0 0
    %1878 = vmatprep.subr.bf16.mxu0 0
    %1879 = vmatpush1.bf16.msra.mxu0 0
    %1880 = vmatprep.mubr.bf16.mxu0 0
    %1881 = vmatmul.mubr.bf16.gmra.mrb[0].mxu0 %v1843
    %v1882 = vpop.f32.mrb[0].mxu0
    %v1883 = vadd.f32 %v1828, %v1882
    %v1884 = vpop.f32.mrb[0].mxu0
    %v1885 = vpop.f32.mrb[0].mxu0
    %v1886 = vadd.f32 %v1828, %v1885
    %v1887 = vpop.f32.mrb[0].mxu0
    %1888 = vmatprep.mubr.bf16.mxu0 0
    %1889 = vmatmul.mubr.bf16.gmra.mrb[0].mxu0 %v1846
    %v1890 = vpop.f32.mrb[0].mxu0
    %v1891 = vadd.f32 %v1828, %v1890
    %v1892 = vpop.f32.mrb[0].mxu0
    %v1893 = vpop.f32.mrb[0].mxu0
    %v1894 = vadd.f32 %v1828, %v1893
    %v1895 = vpop.f32.mrb[0].mxu0
    %1896 = vdwg.mxu0
    %v1897 = vpack.c.bf16 %v1886, %v1883
    %v1898 = vpack.c.bf16 %v1894, %v1891
    %1901 = vrot.lane.b32.xlu0 %v1897, 96
    %v1902 = vpop.permute.xlu0 %1901
    %1903 = vrot.lane.b32.xlu0 %v1898, 96
    %v1904 = vpop.permute.xlu0 %1903
    %v1906 = vsel %vm580, %v1897, 0
    %v1909 = vsel %vm580, %v1898, 0
    %v1912 = vsel %vm580, %v1902, 0
    %v1915 = vsel %vm580, %v1904, 0
    %1917 = vmatprep.subr.bf16.mxu0 0
    %1918 = vmatpush1.bf16.xpose.msra.mxu0 %v1912
    %1919 = vmatprep.subr.bf16.mxu0 0
    %1920 = vmatpush1.bf16.xpose.msra.mxu0 %v1915
    %1921 = vmatprep.subr.bf16.mxu0 0
    %1922 = vmatpush1.bf16.xpose.msra.mxu0 0
    %1923 = vmatprep.subr.bf16.mxu0 0
    %1924 = vmatpush1.bf16.xpose.msra.mxu0 0
    %1925 = vmatprep.subr.bf16.mxu0 0
    %1926 = vmatpush1.bf16.xpose.msra.mxu0 0
    %1927 = vmatprep.subr.bf16.mxu0 0
    %1928 = vmatpush1.bf16.xpose.msra.mxu0 0
    %1929 = vmatprep.subr.bf16.mxu0 0
    %1930 = vmatpush1.bf16.xpose.msra.mxu0 0
    %1931 = vmatprep.subr.bf16.mxu0 0
    %1932 = vmatpush1.bf16.xpose.msra.mxu0 0
    %1933 = vmatprep.subr.bf16.mxu0 0
    %1934 = vmatpush1.bf16.xpose.msra.mxu0 0
    %1935 = vmatprep.subr.bf16.mxu0 0
    %1936 = vmatpush1.bf16.xpose.msra.mxu0 0
    %1937 = vmatprep.subr.bf16.mxu0 0
    %1938 = vmatpush1.bf16.xpose.msra.mxu0 0
    %1939 = vmatprep.subr.bf16.mxu0 0
    %1940 = vmatpush1.bf16.xpose.msra.mxu0 0
    %1941 = vmatprep.subr.bf16.mxu0 0
    %1942 = vmatpush1.bf16.xpose.msra.mxu0 0
    %1943 = vmatprep.subr.bf16.mxu0 0
    %1944 = vmatpush1.bf16.xpose.msra.mxu0 0
    %1945 = vmatprep.subr.bf16.mxu0 0
    %1946 = vmatpush1.bf16.xpose.msra.mxu0 0
    %1947 = vmatprep.subr.bf16.mxu0 0
    %1948 = vmatpush1.bf16.xpose.msra.mxu0 0
    %1949 = vmatprep.mubr.bf16.mxu0 0
    %1950 = vmatmul.mubr.bf16.gmra.mrb[0].mxu0 %v1906
    %v1951 = vpop.f32.mrb[0].mxu0
    %v1952 = vadd.f32 0.0, %v1951
    %v1953 = vpop.f32.mrb[0].mxu0
    %v1954 = vpop.f32.mrb[0].mxu0
    %v1955 = vadd.f32 0.0, %v1954
    %v1956 = vpop.f32.mrb[0].mxu0
    %1957 = vmatprep.mubr.bf16.mxu0 0
    %1958 = vmatmul.mubr.bf16.gmra.mrb[0].mxu0 %v1909
    %v1959 = vpop.f32.mrb[0].mxu0
    %v1960 = vadd.f32 0.0, %v1959
    %v1961 = vpop.f32.mrb[0].mxu0
    %v1962 = vpop.f32.mrb[0].mxu0
    %v1963 = vadd.f32 0.0, %v1962
    %v1964 = vpop.f32.mrb[0].mxu0
    %1965 = vdwg.mxu0
    %v1966 = vmul.f32 %v1952, 0.17677669
    %v1967 = vmul.f32 %v1955, 0.17677669
    %v1968 = vmul.f32 %v1960, 0.17677669
    %v1969 = vmul.f32 %v1963, 0.17677669
    %v1970 = vsel %vm658, %v1966, -1e+30
    %v1971 = vsel %vm659, %v1967, -1e+30
    %v1972 = vsel %vm660, %v1968, -1e+30
    %v1973 = vsel %vm661, %v1969, -1e+30
    %v1974 = vsel %vm580, %v1970, -inf
    %1975 = vmax.xlane.f32.xlu0 %v1974
    %v1976 = vpop.xlane.xlu0 %1975
    %v1977 = vsel %vm580, %v1971, -inf
    %1978 = vmax.xlane.f32.xlu0 %v1977
    %v1979 = vpop.xlane.xlu0 %1978
    %v1980 = vsel %vm580, %v1972, -inf
    %1981 = vmax.xlane.f32.xlu0 %v1980
    %v1982 = vpop.xlane.xlu0 %1981
    %v1983 = vsel %vm580, %v1973, -inf
    %1984 = vmax.xlane.f32.xlu0 %v1983
    %v1985 = vpop.xlane.xlu0 %1984
    %v1986 = vsub.f32 %v1970, %v1976
    %v1987 = vsub.f32 %v1971, %v1979
    %v1988 = vsub.f32 %v1972, %v1982
    %v1989 = vsub.f32 %v1973, %v1985
    %v1990 = vmul.f32 %v1986, 1.442695
    %v1991 = vpow.pop %v1990
    %v1992 = vmul.f32 %v1987, 1.442695
    %v1993 = vpow.pop %v1992
    %v1994 = vmul.f32 %v1988, 1.442695
    %v1995 = vpow.pop %v1994
    %v1996 = vmul.f32 %v1989, 1.442695
    %v1997 = vpow.pop %v1996
    %v1998 = vmul.f32 %v1991, %v694
    %v1999 = vmul.f32 %v1993, %v695
    %v2000 = vmul.f32 %v1995, %v696
    %v2001 = vmul.f32 %v1997, %v697
    %v2002 = vsel %vm580, %v1998, 0.0
    %2003 = vadd.xlane.f32.xlu0 %v2002
    %v2004 = vpop.xlane.xlu0 %2003
    %v2005 = vsel %vm580, %v1999, 0.0
    %2006 = vadd.xlane.f32.xlu0 %v2005
    %v2007 = vpop.xlane.xlu0 %2006
    %v2008 = vsel %vm580, %v2000, 0.0
    %2009 = vadd.xlane.f32.xlu0 %v2008
    %v2010 = vpop.xlane.xlu0 %2009
    %v2011 = vsel %vm580, %v2001, 0.0
    %2012 = vadd.xlane.f32.xlu0 %v2011
    %v2013 = vpop.xlane.xlu0 %2012
    %v2014 = vmax.f32 %v2004, 1e-30
    %v2015 = vmax.f32 %v2007, 1e-30
    %v2016 = vmax.f32 %v2010, 1e-30
    %v2017 = vmax.f32 %v2013, 1e-30
    %v2018 = vrcp.pop %v2014
    %v2019 = vrcp.pop %v2015
    %v2020 = vrcp.pop %v2016
    %v2021 = vrcp.pop %v2017
    %v2022 = vmul.f32 %v1998, %v2018
    %v2023 = vmul.f32 %v1999, %v2019
    %v2024 = vmul.f32 %v2000, %v2020
    %v2025 = vmul.f32 %v2001, %v2021
    %v2026 = vsel %vm738, %v1966, -1e+30
    %v2027 = vsel %vm739, %v1967, -1e+30
    %v2028 = vsel %vm740, %v1968, -1e+30
    %v2029 = vsel %vm741, %v1969, -1e+30
    %v2030 = vsel %vm580, %v2026, -inf
    %2031 = vmax.xlane.f32.xlu0 %v2030
    %v2032 = vpop.xlane.xlu0 %2031
    %v2033 = vsel %vm580, %v2027, -inf
    %2034 = vmax.xlane.f32.xlu0 %v2033
    %v2035 = vpop.xlane.xlu0 %2034
    %v2036 = vsel %vm580, %v2028, -inf
    %2037 = vmax.xlane.f32.xlu0 %v2036
    %v2038 = vpop.xlane.xlu0 %2037
    %v2039 = vsel %vm580, %v2029, -inf
    %2040 = vmax.xlane.f32.xlu0 %v2039
    %v2041 = vpop.xlane.xlu0 %2040
    %v2042 = vsub.f32 %v2026, %v2032
    %v2043 = vsub.f32 %v2027, %v2035
    %v2044 = vsub.f32 %v2028, %v2038
    %v2045 = vsub.f32 %v2029, %v2041
    %v2046 = vmul.f32 %v2042, 1.442695
    %v2047 = vpow.pop %v2046
    %v2048 = vmul.f32 %v2043, 1.442695
    %v2049 = vpow.pop %v2048
    %v2050 = vmul.f32 %v2044, 1.442695
    %v2051 = vpow.pop %v2050
    %v2052 = vmul.f32 %v2045, 1.442695
    %v2053 = vpow.pop %v2052
    %v2054 = vmul.f32 %v2047, %v774
    %v2055 = vmul.f32 %v2049, %v775
    %v2056 = vmul.f32 %v2051, %v776
    %v2057 = vmul.f32 %v2053, %v777
    %v2058 = vsel %vm580, %v2054, 0.0
    %2059 = vadd.xlane.f32.xlu0 %v2058
    %v2060 = vpop.xlane.xlu0 %2059
    %v2061 = vsel %vm580, %v2055, 0.0
    %2062 = vadd.xlane.f32.xlu0 %v2061
    %v2063 = vpop.xlane.xlu0 %2062
    %v2064 = vsel %vm580, %v2056, 0.0
    %2065 = vadd.xlane.f32.xlu0 %v2064
    %v2066 = vpop.xlane.xlu0 %2065
    %v2067 = vsel %vm580, %v2057, 0.0
    %2068 = vadd.xlane.f32.xlu0 %v2067
    %v2069 = vpop.xlane.xlu0 %2068
    %v2070 = vmax.f32 %v2060, 1e-30
    %v2071 = vmax.f32 %v2063, 1e-30
    %v2072 = vmax.f32 %v2066, 1e-30
    %v2073 = vmax.f32 %v2069, 1e-30
    %v2074 = vrcp.pop %v2070
    %v2075 = vrcp.pop %v2071
    %v2076 = vrcp.pop %v2072
    %v2077 = vrcp.pop %v2073
    %v2078 = vmul.f32 %v2054, %v2074
    %v2079 = vmul.f32 %v2055, %v2075
    %v2080 = vmul.f32 %v2056, %v2076
    %v2081 = vmul.f32 %v2057, %v2077
    %v2082 = vpack.c.bf16 %v2023, %v2022
    %v2083 = vpack.c.bf16 %v2025, %v2024
    %2084 = vrot.lane.b32.xlu0 %v1897, 64
    %v2085 = vpop.permute.xlu0 %2084
    %2086 = vrot.lane.b32.xlu0 %v1898, 64
    %v2087 = vpop.permute.xlu0 %2086
    %2094 = vrot.lane.b32.xlu0 %v1883, 32
    %v2095 = vpop.permute.xlu0 %2094
    %2096 = vrot.lane.b32.xlu0 %v1886, 32
    %v2097 = vpop.permute.xlu0 %2096
    %2098 = vrot.lane.b32.xlu0 %v1891, 32
    %v2099 = vpop.permute.xlu0 %2098
    %2100 = vrot.lane.b32.xlu0 %v1894, 32
    %v2101 = vpop.permute.xlu0 %2100
    %v2107 = vsel %vm580, %v2082, 0
    %v2110 = vsel %vm580, %v2083, 0
    %2112 = vmatprep.subr.bf16.mxu0 0
    %2113 = vmatpush1.bf16.msra.mxu0 %v2085
    %2114 = vmatprep.subr.bf16.mxu0 0
    %2115 = vmatpush1.bf16.msra.mxu0 %v2087
    %2116 = vmatprep.subr.bf16.mxu0 0
    %2117 = vmatpush1.bf16.msra.mxu0 0
    %2118 = vmatprep.subr.bf16.mxu0 0
    %2119 = vmatpush1.bf16.msra.mxu0 0
    %2120 = vmatprep.subr.bf16.mxu0 0
    %2121 = vmatpush1.bf16.msra.mxu0 0
    %2122 = vmatprep.subr.bf16.mxu0 0
    %2123 = vmatpush1.bf16.msra.mxu0 0
    %2124 = vmatprep.subr.bf16.mxu0 0
    %2125 = vmatpush1.bf16.msra.mxu0 0
    %2126 = vmatprep.subr.bf16.mxu0 0
    %2127 = vmatpush1.bf16.msra.mxu0 0
    %2128 = vmatprep.subr.bf16.mxu0 0
    %2129 = vmatpush1.bf16.msra.mxu0 0
    %2130 = vmatprep.subr.bf16.mxu0 0
    %2131 = vmatpush1.bf16.msra.mxu0 0
    %2132 = vmatprep.subr.bf16.mxu0 0
    %2133 = vmatpush1.bf16.msra.mxu0 0
    %2134 = vmatprep.subr.bf16.mxu0 0
    %2135 = vmatpush1.bf16.msra.mxu0 0
    %2136 = vmatprep.subr.bf16.mxu0 0
    %2137 = vmatpush1.bf16.msra.mxu0 0
    %2138 = vmatprep.subr.bf16.mxu0 0
    %2139 = vmatpush1.bf16.msra.mxu0 0
    %2140 = vmatprep.subr.bf16.mxu0 0
    %2141 = vmatpush1.bf16.msra.mxu0 0
    %2142 = vmatprep.subr.bf16.mxu0 0
    %2143 = vmatpush1.bf16.msra.mxu0 0
    %2144 = vmatprep.mubr.bf16.mxu0 0
    %2145 = vmatmul.mubr.bf16.gmra.mrb[0].mxu0 %v2107
    %v2146 = vpop.f32.mrb[0].mxu0
    %v2147 = vadd.f32 %v2095, %v2146
    %v2148 = vpop.f32.mrb[0].mxu0
    %v2149 = vpop.f32.mrb[0].mxu0
    %v2150 = vadd.f32 %v2097, %v2149
    %v2151 = vpop.f32.mrb[0].mxu0
    %2152 = vmatprep.mubr.bf16.mxu0 0
    %2153 = vmatmul.mubr.bf16.gmra.mrb[0].mxu0 %v2110
    %v2154 = vpop.f32.mrb[0].mxu0
    %v2155 = vadd.f32 %v2099, %v2154
    %v2156 = vpop.f32.mrb[0].mxu0
    %v2157 = vpop.f32.mrb[0].mxu0
    %v2158 = vadd.f32 %v2101, %v2157
    %v2159 = vpop.f32.mrb[0].mxu0
    %2160 = vdwg.mxu0
    %v2161 = vpack.c.bf16 %v2079, %v2078
    %v2162 = vpack.c.bf16 %v2081, %v2080
    %v2164 = vsel %vm580, %v2161, 0
    %v2167 = vsel %vm580, %v2162, 0
    %2169 = vmatprep.subr.bf16.mxu0 0
    %2170 = vmatpush1.bf16.msra.mxu0 %v2085
    %2171 = vmatprep.subr.bf16.mxu0 0
    %2172 = vmatpush1.bf16.msra.mxu0 %v2087
    %2173 = vmatprep.subr.bf16.mxu0 0
    %2174 = vmatpush1.bf16.msra.mxu0 0
    %2175 = vmatprep.subr.bf16.mxu0 0
    %2176 = vmatpush1.bf16.msra.mxu0 0
    %2177 = vmatprep.subr.bf16.mxu0 0
    %2178 = vmatpush1.bf16.msra.mxu0 0
    %2179 = vmatprep.subr.bf16.mxu0 0
    %2180 = vmatpush1.bf16.msra.mxu0 0
    %2181 = vmatprep.subr.bf16.mxu0 0
    %2182 = vmatpush1.bf16.msra.mxu0 0
    %2183 = vmatprep.subr.bf16.mxu0 0
    %2184 = vmatpush1.bf16.msra.mxu0 0
    %2185 = vmatprep.subr.bf16.mxu0 0
    %2186 = vmatpush1.bf16.msra.mxu0 0
    %2187 = vmatprep.subr.bf16.mxu0 0
    %2188 = vmatpush1.bf16.msra.mxu0 0
    %2189 = vmatprep.subr.bf16.mxu0 0
    %2190 = vmatpush1.bf16.msra.mxu0 0
    %2191 = vmatprep.subr.bf16.mxu0 0
    %2192 = vmatpush1.bf16.msra.mxu0 0
    %2193 = vmatprep.subr.bf16.mxu0 0
    %2194 = vmatpush1.bf16.msra.mxu0 0
    %2195 = vmatprep.subr.bf16.mxu0 0
    %2196 = vmatpush1.bf16.msra.mxu0 0
    %2197 = vmatprep.subr.bf16.mxu0 0
    %2198 = vmatpush1.bf16.msra.mxu0 0
    %2199 = vmatprep.subr.bf16.mxu0 0
    %2200 = vmatpush1.bf16.msra.mxu0 0
    %2201 = vmatprep.mubr.bf16.mxu0 0
    %2202 = vmatmul.mubr.bf16.gmra.mrb[0].mxu0 %v2164
    %v2203 = vpop.f32.mrb[0].mxu0
    %v2204 = vadd.f32 %v2095, %v2203
    %v2205 = vpop.f32.mrb[0].mxu0
    %v2206 = vpop.f32.mrb[0].mxu0
    %v2207 = vadd.f32 %v2097, %v2206
    %v2208 = vpop.f32.mrb[0].mxu0
    %2209 = vmatprep.mubr.bf16.mxu0 0
    %2210 = vmatmul.mubr.bf16.gmra.mrb[0].mxu0 %v2167
    %v2211 = vpop.f32.mrb[0].mxu0
    %v2212 = vadd.f32 %v2099, %v2211
    %v2213 = vpop.f32.mrb[0].mxu0
    %v2214 = vpop.f32.mrb[0].mxu0
    %v2215 = vadd.f32 %v2101, %v2214
    %v2216 = vpop.f32.mrb[0].mxu0
    %2217 = vdwg.mxu0
    %v2218 = vpack.c.bf16 %v2150, %v2147
    %v2219 = vpack.c.bf16 %v2158, %v2155
    %2220 = vxpose.xlu0.c.b16.start [1/8] %v2082, 128
    %2221 = vxpose.xlu0.c.b16.cont [2/8] %v2083, 128
    %2222 = vxpose.xlu0.c.b16.cont [3/8] 0, 128
    %2223 = vxpose.xlu0.c.b16.cont [4/8] 0, 128
    %2224 = vxpose.xlu0.c.b16.cont [5/8] 0, 128
    %2225 = vxpose.xlu0.c.b16.cont [6/8] 0, 128
    %2226 = vxpose.xlu0.c.b16.cont [7/8] 0, 128
    %2227 = vxpose.xlu0.c.b16.end [8/8] 0, 128
    %v2228 = vpop.trf.xlu0
    %v2229 = vpop.trf.xlu0
    %v2230 = vpop.trf.xlu0
    %v2231 = vpop.trf.xlu0
    %v2232 = vpop.trf.xlu0
    %v2233 = vpop.trf.xlu0
    %v2234 = vpop.trf.xlu0
    %v2235 = vpop.trf.xlu0
    %v2237 = vsel %vm580, %v2228, 0
    %v2240 = vsel %vm580, %v2229, 0
    %2242 = vmatprep.subr.bf16.mxu0 0
    %2243 = vmatpush1.bf16.msra.mxu0 %v2218
    %2244 = vmatprep.subr.bf16.mxu0 0
    %2245 = vmatpush1.bf16.msra.mxu0 %v2219
    %2246 = vmatprep.subr.bf16.mxu0 0
    %2247 = vmatpush1.bf16.msra.mxu0 0
    %2248 = vmatprep.subr.bf16.mxu0 0
    %2249 = vmatpush1.bf16.msra.mxu0 0
    %2250 = vmatprep.subr.bf16.mxu0 0
    %2251 = vmatpush1.bf16.msra.mxu0 0
    %2252 = vmatprep.subr.bf16.mxu0 0
    %2253 = vmatpush1.bf16.msra.mxu0 0
    %2254 = vmatprep.subr.bf16.mxu0 0
    %2255 = vmatpush1.bf16.msra.mxu0 0
    %2256 = vmatprep.subr.bf16.mxu0 0
    %2257 = vmatpush1.bf16.msra.mxu0 0
    %2258 = vmatprep.subr.bf16.mxu0 0
    %2259 = vmatpush1.bf16.msra.mxu0 0
    %2260 = vmatprep.subr.bf16.mxu0 0
    %2261 = vmatpush1.bf16.msra.mxu0 0
    %2262 = vmatprep.subr.bf16.mxu0 0
    %2263 = vmatpush1.bf16.msra.mxu0 0
    %2264 = vmatprep.subr.bf16.mxu0 0
    %2265 = vmatpush1.bf16.msra.mxu0 0
    %2266 = vmatprep.subr.bf16.mxu0 0
    %2267 = vmatpush1.bf16.msra.mxu0 0
    %2268 = vmatprep.subr.bf16.mxu0 0
    %2269 = vmatpush1.bf16.msra.mxu0 0
    %2270 = vmatprep.subr.bf16.mxu0 0
    %2271 = vmatpush1.bf16.msra.mxu0 0
    %2272 = vmatprep.subr.bf16.mxu0 0
    %2273 = vmatpush1.bf16.msra.mxu0 0
    %2274 = vmatprep.mubr.bf16.mxu0 0
    %2275 = vmatmul.mubr.bf16.gmra.mrb[0].mxu0 %v2237
    %v2276 = vpop.f32.mrb[0].mxu0
    %v2277 = vadd.f32 0.0, %v2276
    %v2278 = vpop.f32.mrb[0].mxu0
    %v2279 = vpop.f32.mrb[0].mxu0
    %v2280 = vadd.f32 0.0, %v2279
    %v2281 = vpop.f32.mrb[0].mxu0
    %2282 = vmatprep.mubr.bf16.mxu0 0
    %2283 = vmatmul.mubr.bf16.gmra.mrb[0].mxu0 %v2240
    %v2284 = vpop.f32.mrb[0].mxu0
    %v2285 = vadd.f32 0.0, %v2284
    %v2286 = vpop.f32.mrb[0].mxu0
    %v2287 = vpop.f32.mrb[0].mxu0
    %v2288 = vadd.f32 0.0, %v2287
    %v2289 = vpop.f32.mrb[0].mxu0
    %2290 = vdwg.mxu0
    %v2291 = vpack.c.bf16 %v2207, %v2204
    %v2292 = vpack.c.bf16 %v2215, %v2212
    %2293 = vxpose.xlu0.c.b16.start [1/8] %v2161, 128
    %2294 = vxpose.xlu0.c.b16.cont [2/8] %v2162, 128
    %2295 = vxpose.xlu0.c.b16.cont [3/8] 0, 128
    %2296 = vxpose.xlu0.c.b16.cont [4/8] 0, 128
    %2297 = vxpose.xlu0.c.b16.cont [5/8] 0, 128
    %2298 = vxpose.xlu0.c.b16.cont [6/8] 0, 128
    %2299 = vxpose.xlu0.c.b16.cont [7/8] 0, 128
    %2300 = vxpose.xlu0.c.b16.end [8/8] 0, 128
    %v2301 = vpop.trf.xlu0
    %v2302 = vpop.trf.xlu0
    %v2303 = vpop.trf.xlu0
    %v2304 = vpop.trf.xlu0
    %v2305 = vpop.trf.xlu0
    %v2306 = vpop.trf.xlu0
    %v2307 = vpop.trf.xlu0
    %v2308 = vpop.trf.xlu0
    %v2310 = vsel %vm580, %v2301, 0
    %v2313 = vsel %vm580, %v2302, 0
    %2315 = vmatprep.subr.bf16.mxu0 0
    %2316 = vmatpush1.bf16.msra.mxu0 %v2291
    %2317 = vmatprep.subr.bf16.mxu0 0
    %2318 = vmatpush1.bf16.msra.mxu0 %v2292
    %2319 = vmatprep.subr.bf16.mxu0 0
    %2320 = vmatpush1.bf16.msra.mxu0 0
    %2321 = vmatprep.subr.bf16.mxu0 0
    %2322 = vmatpush1.bf16.msra.mxu0 0
    %2323 = vmatprep.subr.bf16.mxu0 0
    %2324 = vmatpush1.bf16.msra.mxu0 0
    %2325 = vmatprep.subr.bf16.mxu0 0
    %2326 = vmatpush1.bf16.msra.mxu0 0
    %2327 = vmatprep.subr.bf16.mxu0 0
    %2328 = vmatpush1.bf16.msra.mxu0 0
    %2329 = vmatprep.subr.bf16.mxu0 0
    %2330 = vmatpush1.bf16.msra.mxu0 0
    %2331 = vmatprep.subr.bf16.mxu0 0
    %2332 = vmatpush1.bf16.msra.mxu0 0
    %2333 = vmatprep.subr.bf16.mxu0 0
    %2334 = vmatpush1.bf16.msra.mxu0 0
    %2335 = vmatprep.subr.bf16.mxu0 0
    %2336 = vmatpush1.bf16.msra.mxu0 0
    %2337 = vmatprep.subr.bf16.mxu0 0
    %2338 = vmatpush1.bf16.msra.mxu0 0
    %2339 = vmatprep.subr.bf16.mxu0 0
    %2340 = vmatpush1.bf16.msra.mxu0 0
    %2341 = vmatprep.subr.bf16.mxu0 0
    %2342 = vmatpush1.bf16.msra.mxu0 0
    %2343 = vmatprep.subr.bf16.mxu0 0
    %2344 = vmatpush1.bf16.msra.mxu0 0
    %2345 = vmatprep.subr.bf16.mxu0 0
    %2346 = vmatpush1.bf16.msra.mxu0 0
    %2347 = vmatprep.mubr.bf16.mxu0 0
    %2348 = vmatmul.mubr.bf16.gmra.mrb[0].mxu0 %v2310
    %v2349 = vpop.f32.mrb[0].mxu0
    %v2350 = vadd.f32 0.0, %v2349
    %v2351 = vpop.f32.mrb[0].mxu0
    %v2352 = vpop.f32.mrb[0].mxu0
    %v2353 = vadd.f32 0.0, %v2352
    %v2354 = vpop.f32.mrb[0].mxu0
    %2355 = vmatprep.mubr.bf16.mxu0 0
    %2356 = vmatmul.mubr.bf16.gmra.mrb[0].mxu0 %v2313
    %v2357 = vpop.f32.mrb[0].mxu0
    %v2358 = vadd.f32 0.0, %v2357
    %v2359 = vpop.f32.mrb[0].mxu0
    %v2360 = vpop.f32.mrb[0].mxu0
    %v2361 = vadd.f32 0.0, %v2360
    %v2362 = vpop.f32.mrb[0].mxu0
    %2363 = vdwg.mxu0
    %v2364 = vmul.f32 %v2277, 0.5
    %v2365 = vmul.f32 %v2280, 0.5
    %v2366 = vmul.f32 %v2285, 0.5
    %v2367 = vmul.f32 %v2288, 0.5
    %v2368 = vmul.f32 %v2350, 0.5
    %v2369 = vmul.f32 %v2353, 0.5
    %v2370 = vmul.f32 %v2358, 0.5
    %v2371 = vmul.f32 %v2361, 0.5
    %v2372 = vadd.f32 %v2364, %v2368
    %v2373 = vadd.f32 %v2365, %v2369
    %v2374 = vadd.f32 %v2366, %v2370
    %v2375 = vadd.f32 %v2367, %v2371
    %v2376 = vld [vmem:[%s43] sm:$0xff]
    %v2377 = vld [vmem:[%s43 + $0x8] sm:$0xff]
    %v2378 = vld [vmem:[%s43 + $0x10] sm:$0xff]
    %v2379 = vld [vmem:[%s43 + $0x18] sm:$0xff]
    %v2380 = vld [vmem:[%s43 + $0x20] sm:$0xff]
    %v2381 = vld [vmem:[%s43 + $0x28] sm:$0xff]
    %v2382 = vld [vmem:[%s43 + $0x30] sm:$0xff]
    %v2383 = vld [vmem:[%s43 + $0x38] sm:$0xff]
    %v2384 = vld [vmem:[%s43 + $0x40] sm:$0xff]
    %v2385 = vld [vmem:[%s43 + $0x48] sm:$0xff]
    %v2386 = vld [vmem:[%s43 + $0x50] sm:$0xff]
    %v2387 = vld [vmem:[%s43 + $0x58] sm:$0xff]
    %v2388 = vmul.f32 %v468, %v468
    %v2389 = vmul.f32 %v469, %v469
    %v2390 = vmul.f32 %v470, %v470
    %v2391 = vmul.f32 %v471, %v471
    %v2392 = vsel %vm346, %v2388, 0.0
    %2393 = vadd.xlane.f32.xlu0 %v2392
    %v2394 = vpop.xlane.xlu0 %2393
    %v2395 = vsel %vm346, %v2389, 0.0
    %2396 = vadd.xlane.f32.xlu0 %v2395
    %v2397 = vpop.xlane.xlu0 %2396
    %v2398 = vsel %vm346, %v2390, 0.0
    %2399 = vadd.xlane.f32.xlu0 %v2398
    %v2400 = vpop.xlane.xlu0 %2399
    %v2401 = vsel %vm346, %v2391, 0.0
    %2402 = vadd.xlane.f32.xlu0 %v2401
    %v2403 = vpop.xlane.xlu0 %2402
    %v2404 = vmul.f32 %v2376, %v2376
    %v2405 = vmul.f32 %v2377, %v2377
    %v2406 = vmul.f32 %v2378, %v2378
    %v2407 = vmul.f32 %v2379, %v2379
    %v2408 = vmul.f32 %v2380, %v2380
    %v2409 = vmul.f32 %v2381, %v2381
    %v2410 = vmul.f32 %v2382, %v2382
    %v2411 = vmul.f32 %v2383, %v2383
    %v2412 = vmul.f32 %v2384, %v2384
    %v2413 = vmul.f32 %v2385, %v2385
    %v2414 = vmul.f32 %v2386, %v2386
    %v2415 = vmul.f32 %v2387, %v2387
    %v2417 = vsel %vm346, 1.0, 0
    %v2420 = vsel %vm346, %v2404, 0
    %v2423 = vsel %vm346, %v2405, 0
    %v2426 = vsel %vm346, %v2406, 0
    %v2429 = vsel %vm346, %v2407, 0
    %v2432 = vsel %vm346, %v2408, 0
    %v2435 = vsel %vm346, %v2409, 0
    %v2438 = vsel %vm346, %v2410, 0
    %v2441 = vsel %vm346, %v2411, 0
    %v2444 = vsel %vm346, %v2412, 0
    %v2447 = vsel %vm346, %v2413, 0
    %v2450 = vsel %vm346, %v2414, 0
    %v2453 = vsel %vm346, %v2415, 0
    %2455 = vmatprep.subr.mxu0 0.0
    %2456 = vmatpush1.xpose.msra.mxu0 %v2420
    %2457 = vmatprep.subr.mxu0 0.0
    %2458 = vmatpush1.xpose.msra.mxu0 %v2423
    %2459 = vmatprep.subr.mxu0 0.0
    %2460 = vmatpush1.xpose.msra.mxu0 %v2426
    %2461 = vmatprep.subr.mxu0 0.0
    %2462 = vmatpush1.xpose.msra.mxu0 %v2429
    %2463 = vmatprep.subr.mxu0 0.0
    %2464 = vmatpush1.xpose.msra.mxu0 %v2432
    %2465 = vmatprep.subr.mxu0 0.0
    %2466 = vmatpush1.xpose.msra.mxu0 %v2435
    %2467 = vmatprep.subr.mxu0 0.0
    %2468 = vmatpush1.xpose.msra.mxu0 %v2438
    %2469 = vmatprep.subr.mxu0 0.0
    %2470 = vmatpush1.xpose.msra.mxu0 %v2441
    %2471 = vmatprep.subr.mxu0 0.0
    %2472 = vmatpush1.xpose.msra.mxu0 %v2444
    %2473 = vmatprep.subr.mxu0 0.0
    %2474 = vmatpush1.xpose.msra.mxu0 %v2447
    %2475 = vmatprep.subr.mxu0 0.0
    %2476 = vmatpush1.xpose.msra.mxu0 %v2450
    %2477 = vmatprep.subr.mxu0 0.0
    %2478 = vmatpush1.xpose.msra.mxu0 %v2453
    %2479 = vmatprep.subr.mxu0 0.0
    %2480 = vmatpush1.xpose.msra.mxu0 0.0
    %2481 = vmatprep.subr.mxu0 0.0
    %2482 = vmatpush1.xpose.msra.mxu0 0.0
    %2483 = vmatprep.subr.mxu0 0.0
    %2484 = vmatpush1.xpose.msra.mxu0 0.0
    %2485 = vmatprep.subr.mxu0 0.0
    %2486 = vmatpush1.xpose.msra.mxu0 0.0
    %2487 = vmatprep.subr.mxu0 0.0
    %2488 = vmatpush1.xpose.msra.mxu0 0.0
    %2489 = vmatprep.subr.mxu0 0.0
    %2490 = vmatpush1.xpose.msra.mxu0 0.0
    %2491 = vmatprep.subr.mxu0 0.0
    %2492 = vmatpush1.xpose.msra.mxu0 0.0
    %2493 = vmatprep.subr.mxu0 0.0
    %2494 = vmatpush1.xpose.msra.mxu0 0.0
    %2495 = vmatprep.subr.mxu0 0.0
    %2496 = vmatpush1.xpose.msra.mxu0 0.0
    %2497 = vmatprep.subr.mxu0 0.0
    %2498 = vmatpush1.xpose.msra.mxu0 0.0
    %2499 = vmatprep.subr.mxu0 0.0
    %2500 = vmatpush1.xpose.msra.mxu0 0.0
    %2501 = vmatprep.subr.mxu0 0.0
    %2502 = vmatpush1.xpose.msra.mxu0 0.0
    %2503 = vmatprep.subr.mxu0 0.0
    %2504 = vmatpush1.xpose.msra.mxu0 0.0
    %2505 = vmatprep.subr.mxu0 0.0
    %2506 = vmatpush1.xpose.msra.mxu0 0.0
    %2507 = vmatprep.subr.mxu0 0.0
    %2508 = vmatpush1.xpose.msra.mxu0 0.0
    %2509 = vmatprep.subr.mxu0 0.0
    %2510 = vmatpush1.xpose.msra.mxu0 0.0
    %2511 = vmatprep.subr.mxu0 0.0
    %2512 = vmatpush1.xpose.msra.mxu0 0.0
    %2513 = vmatprep.subr.mxu0 0.0
    %2514 = vmatpush1.xpose.msra.mxu0 0.0
    %2515 = vmatprep.subr.mxu0 0.0
    %2516 = vmatpush1.xpose.msra.mxu0 0.0
    %2517 = vmatprep.subr.mxu0 0.0
    %2518 = vmatpush1.xpose.msra.mxu0 0.0
    %2519 = vmatprep.mubr.f32.mxu0 0.0
    %2520 = vmatmul.mubr.f32.gmra.mrb[0].mxu0 %v2417
    %v2521 = vpop.f32.mrb[0].mxu0
    %v2522 = vadd.f32 0.0, %v2521
    %v2523 = vpop.f32.mrb[0].mxu0
    %2524 = vdwg.mxu0
    %v2526 = vsel %vm346, %v468, 0
    %v2529 = vsel %vm346, %v469, 0
    %v2532 = vsel %vm346, %v470, 0
    %v2535 = vsel %vm346, %v471, 0
    %v2538 = vsel %vm346, %v2376, 0
    %v2541 = vsel %vm346, %v2377, 0
    %v2544 = vsel %vm346, %v2378, 0
    %v2547 = vsel %vm346, %v2379, 0
    %v2550 = vsel %vm346, %v2380, 0
    %v2553 = vsel %vm346, %v2381, 0
    %v2556 = vsel %vm346, %v2382, 0
    %v2559 = vsel %vm346, %v2383, 0
    %v2562 = vsel %vm346, %v2384, 0
    %v2565 = vsel %vm346, %v2385, 0
    %v2568 = vsel %vm346, %v2386, 0
    %v2571 = vsel %vm346, %v2387, 0
    %2573 = vmatprep.subr.mxu0 0.0
    %2574 = vmatpush1.xpose.msra.mxu0 %v2538
    %2575 = vmatprep.subr.mxu0 0.0
    %2576 = vmatpush1.xpose.msra.mxu0 %v2541
    %2577 = vmatprep.subr.mxu0 0.0
    %2578 = vmatpush1.xpose.msra.mxu0 %v2544
    %2579 = vmatprep.subr.mxu0 0.0
    %2580 = vmatpush1.xpose.msra.mxu0 %v2547
    %2581 = vmatprep.subr.mxu0 0.0
    %2582 = vmatpush1.xpose.msra.mxu0 %v2550
    %2583 = vmatprep.subr.mxu0 0.0
    %2584 = vmatpush1.xpose.msra.mxu0 %v2553
    %2585 = vmatprep.subr.mxu0 0.0
    %2586 = vmatpush1.xpose.msra.mxu0 %v2556
    %2587 = vmatprep.subr.mxu0 0.0
    %2588 = vmatpush1.xpose.msra.mxu0 %v2559
    %2589 = vmatprep.subr.mxu0 0.0
    %2590 = vmatpush1.xpose.msra.mxu0 %v2562
    %2591 = vmatprep.subr.mxu0 0.0
    %2592 = vmatpush1.xpose.msra.mxu0 %v2565
    %2593 = vmatprep.subr.mxu0 0.0
    %2594 = vmatpush1.xpose.msra.mxu0 %v2568
    %2595 = vmatprep.subr.mxu0 0.0
    %2596 = vmatpush1.xpose.msra.mxu0 %v2571
    %2597 = vmatprep.subr.mxu0 0.0
    %2598 = vmatpush1.xpose.msra.mxu0 0.0
    %2599 = vmatprep.subr.mxu0 0.0
    %2600 = vmatpush1.xpose.msra.mxu0 0.0
    %2601 = vmatprep.subr.mxu0 0.0
    %2602 = vmatpush1.xpose.msra.mxu0 0.0
    %2603 = vmatprep.subr.mxu0 0.0
    %2604 = vmatpush1.xpose.msra.mxu0 0.0
    %2605 = vmatprep.subr.mxu0 0.0
    %2606 = vmatpush1.xpose.msra.mxu0 0.0
    %2607 = vmatprep.subr.mxu0 0.0
    %2608 = vmatpush1.xpose.msra.mxu0 0.0
    %2609 = vmatprep.subr.mxu0 0.0
    %2610 = vmatpush1.xpose.msra.mxu0 0.0
    %2611 = vmatprep.subr.mxu0 0.0
    %2612 = vmatpush1.xpose.msra.mxu0 0.0
    %2613 = vmatprep.subr.mxu0 0.0
    %2614 = vmatpush1.xpose.msra.mxu0 0.0
    %2615 = vmatprep.subr.mxu0 0.0
    %2616 = vmatpush1.xpose.msra.mxu0 0.0
    %2617 = vmatprep.subr.mxu0 0.0
    %2618 = vmatpush1.xpose.msra.mxu0 0.0
    %2619 = vmatprep.subr.mxu0 0.0
    %2620 = vmatpush1.xpose.msra.mxu0 0.0
    %2621 = vmatprep.subr.mxu0 0.0
    %2622 = vmatpush1.xpose.msra.mxu0 0.0
    %2623 = vmatprep.subr.mxu0 0.0
    %2624 = vmatpush1.xpose.msra.mxu0 0.0
    %2625 = vmatprep.subr.mxu0 0.0
    %2626 = vmatpush1.xpose.msra.mxu0 0.0
    %2627 = vmatprep.subr.mxu0 0.0
    %2628 = vmatpush1.xpose.msra.mxu0 0.0
    %2629 = vmatprep.subr.mxu0 0.0
    %2630 = vmatpush1.xpose.msra.mxu0 0.0
    %2631 = vmatprep.subr.mxu0 0.0
    %2632 = vmatpush1.xpose.msra.mxu0 0.0
    %2633 = vmatprep.subr.mxu0 0.0
    %2634 = vmatpush1.xpose.msra.mxu0 0.0
    %2635 = vmatprep.subr.mxu0 0.0
    %2636 = vmatpush1.xpose.msra.mxu0 0.0
    %2637 = vmatprep.mubr.f32.mxu0 0.0
    %2638 = vmatmul.mubr.f32.gmra.mrb[0].mxu0 %v2526
    %v2639 = vpop.f32.mrb[0].mxu0
    %v2640 = vadd.f32 0.0, %v2639
    %v2641 = vpop.f32.mrb[0].mxu0
    %2642 = vmatprep.mubr.f32.mxu0 0.0
    %2643 = vmatmul.mubr.f32.gmra.mrb[0].mxu0 %v2529
    %v2644 = vpop.f32.mrb[0].mxu0
    %v2645 = vadd.f32 0.0, %v2644
    %v2646 = vpop.f32.mrb[0].mxu0
    %2647 = vmatprep.mubr.f32.mxu0 0.0
    %2648 = vmatmul.mubr.f32.gmra.mrb[0].mxu0 %v2532
    %v2649 = vpop.f32.mrb[0].mxu0
    %v2650 = vadd.f32 0.0, %v2649
    %v2651 = vpop.f32.mrb[0].mxu0
    %2652 = vmatprep.mubr.f32.mxu0 0.0
    %2653 = vmatmul.mubr.f32.gmra.mrb[0].mxu0 %v2535
    %v2654 = vpop.f32.mrb[0].mxu0
    %v2655 = vadd.f32 0.0, %v2654
    %v2656 = vpop.f32.mrb[0].mxu0
    %2657 = vdwg.mxu0
    %v2658 = vlaneseq
    %v2659 = vshrl.u32 %v2658, 7
    %v2660 = vsub.s32 0, %v2659
    %v2661 = vrot.slane %v2522, %v2660
    %v2662 = vadd.f32 %v2394, %v2661
    %v2663 = vadd.f32 %v2397, %v2661
    %v2664 = vadd.f32 %v2400, %v2661
    %v2665 = vadd.f32 %v2403, %v2661
    %v2666 = vmul.f32 %v2640, 2.0
    %v2667 = vmul.f32 %v2645, 2.0
    %v2668 = vmul.f32 %v2650, 2.0
    %v2669 = vmul.f32 %v2655, 2.0
    %v2670 = vsub.f32 %v2662, %v2666
    %v2671 = vsub.f32 %v2663, %v2667
    %v2672 = vsub.f32 %v2664, %v2668
    %v2673 = vsub.f32 %v2665, %v2669
    %vm2674 = vcmask 785408
    %v2675 = vsel %vm2674, %v2670, inf
    %2676 = vmin.xlane.f32.xlu0 %v2675
    %v2677 = vpop.xlane.xlu0 %2676
    %v2678 = vsel %vm2674, %v2671, inf
    %2679 = vmin.xlane.f32.xlu0 %v2678
    %v2680 = vpop.xlane.xlu0 %2679
    %v2681 = vsel %vm2674, %v2672, inf
    %2682 = vmin.xlane.f32.xlu0 %v2681
    %v2683 = vpop.xlane.xlu0 %2682
    %v2684 = vsel %vm2674, %v2673, inf
    %2685 = vmin.xlane.f32.xlu0 %v2684
    %v2686 = vpop.xlane.xlu0 %2685
    %v2687 = vlaneseq
    %v2688 = vand.u32 %v2687, 127
    %vm2689 = vcmp.le.f32.partialorder %v2670, %v2677
    %vm2690 = vcmp.le.f32.partialorder %v2671, %v2680
    %vm2691 = vcmp.le.f32.partialorder %v2672, %v2683
    %vm2692 = vcmp.le.f32.partialorder %v2673, %v2686
    %v2693 = vsel %vm2689, %v2688, 96
    %v2694 = vsel %vm2690, %v2688, 96
    %v2695 = vsel %vm2691, %v2688, 96
    %v2696 = vsel %vm2692, %v2688, 96
    %v2697 = vsel %vm2674, %v2693, 2147483647
    %v2698 = vand.u32 %v2697, 65535
    %v2699 = vshra.s32 %v2697, 16
    %v2700 = vcvt.s32.f32 %v2698
    %v2701 = vcvt.s32.f32 %v2699
    %2702 = vmin.xlane.f32.xlu0 %v2701
    %v2703 = vpop.xlane.xlu0 %2702
    %vm2704 = vcmp.eq.f32.partialorder %v2701, %v2703
    %v2705 = vsel %vm2704, %v2700, inf
    %2706 = vmin.xlane.f32.xlu0 %v2705
    %v2707 = vpop.xlane.xlu0 %2706
    %v2708 = vcvt.f32.s32 %v2707
    %v2709 = vcvt.f32.s32 %v2703
    %v2710 = vshll.u32 %v2709, 16
    %v2711 = vadd.s32 %v2710, %v2708
    %v2712 = vsel %vm2674, %v2694, 2147483647
    %v2713 = vand.u32 %v2712, 65535
    %v2714 = vshra.s32 %v2712, 16
    %v2715 = vcvt.s32.f32 %v2713
    %v2716 = vcvt.s32.f32 %v2714
    %2717 = vmin.xlane.f32.xlu0 %v2716
    %v2718 = vpop.xlane.xlu0 %2717
    %vm2719 = vcmp.eq.f32.partialorder %v2716, %v2718
    %v2720 = vsel %vm2719, %v2715, inf
    %2721 = vmin.xlane.f32.xlu0 %v2720
    %v2722 = vpop.xlane.xlu0 %2721
    %v2723 = vcvt.f32.s32 %v2722
    %v2724 = vcvt.f32.s32 %v2718
    %v2725 = vshll.u32 %v2724, 16
    %v2726 = vadd.s32 %v2725, %v2723
    %v2727 = vsel %vm2674, %v2695, 2147483647
    %v2728 = vand.u32 %v2727, 65535
    %v2729 = vshra.s32 %v2727, 16
    %v2730 = vcvt.s32.f32 %v2728
    %v2731 = vcvt.s32.f32 %v2729
    %2732 = vmin.xlane.f32.xlu0 %v2731
    %v2733 = vpop.xlane.xlu0 %2732
    %vm2734 = vcmp.eq.f32.partialorder %v2731, %v2733
    %v2735 = vsel %vm2734, %v2730, inf
    %2736 = vmin.xlane.f32.xlu0 %v2735
    %v2737 = vpop.xlane.xlu0 %2736
    %v2738 = vcvt.f32.s32 %v2737
    %v2739 = vcvt.f32.s32 %v2733
    %v2740 = vshll.u32 %v2739, 16
    %v2741 = vadd.s32 %v2740, %v2738
    %v2742 = vsel %vm2674, %v2696, 2147483647
    %v2743 = vand.u32 %v2742, 65535
    %v2744 = vshra.s32 %v2742, 16
    %v2745 = vcvt.s32.f32 %v2743
    %v2746 = vcvt.s32.f32 %v2744
    %2747 = vmin.xlane.f32.xlu0 %v2746
    %v2748 = vpop.xlane.xlu0 %2747
    %vm2749 = vcmp.eq.f32.partialorder %v2746, %v2748
    %v2750 = vsel %vm2749, %v2745, inf
    %2751 = vmin.xlane.f32.xlu0 %v2750
    %v2752 = vpop.xlane.xlu0 %2751
    %v2753 = vcvt.f32.s32 %v2752
    %v2754 = vcvt.f32.s32 %v2748
    %v2755 = vshll.u32 %v2754, 16
    %v2756 = vadd.s32 %v2755, %v2753
    %vm2757 = vcmp.eq.s32.totalorder %v2688, %v2711
    %vm2758 = vcmp.eq.s32.totalorder %v2688, %v2726
    %vm2759 = vcmp.eq.s32.totalorder %v2688, %v2741
    %vm2760 = vcmp.eq.s32.totalorder %v2688, %v2756
    %v2761 = vsel %vm2757, 1, 0
    %v2762 = vsel %vm2758, 1, 0
    %v2763 = vsel %vm2759, 1, 0
    %v2764 = vsel %vm2760, 1, 0
    %v2765 = vcvt.s32.f32 %v2761
    %v2766 = vcvt.s32.f32 %v2762
    %v2767 = vcvt.s32.f32 %v2763
    %v2768 = vcvt.s32.f32 %v2764
    %v2770 = vsel %vm2674, %v2765, 0
    %v2773 = vsel %vm2674, %v2766, 0
    %v2776 = vsel %vm2674, %v2767, 0
    %v2779 = vsel %vm2674, %v2768, 0
    %2781 = vmatprep.subr.mxu0 0.0
    %2782 = vmatpush1.msra.mxu0 %v2376
    %2783 = vmatprep.subr.mxu0 0.0
    %2784 = vmatpush1.msra.mxu0 %v2377
    %2785 = vmatprep.subr.mxu0 0.0
    %2786 = vmatpush1.msra.mxu0 %v2378
    %2787 = vmatprep.subr.mxu0 0.0
    %2788 = vmatpush1.msra.mxu0 %v2379
    %2789 = vmatprep.subr.mxu0 0.0
    %2790 = vmatpush1.msra.mxu0 %v2380
    %2791 = vmatprep.subr.mxu0 0.0
    %2792 = vmatpush1.msra.mxu0 %v2381
    %2793 = vmatprep.subr.mxu0 0.0
    %2794 = vmatpush1.msra.mxu0 %v2382
    %2795 = vmatprep.subr.mxu0 0.0
    %2796 = vmatpush1.msra.mxu0 %v2383
    %2797 = vmatprep.subr.mxu0 0.0
    %2798 = vmatpush1.msra.mxu0 %v2384
    %2799 = vmatprep.subr.mxu0 0.0
    %2800 = vmatpush1.msra.mxu0 %v2385
    %2801 = vmatprep.subr.mxu0 0.0
    %2802 = vmatpush1.msra.mxu0 %v2386
    %2803 = vmatprep.subr.mxu0 0.0
    %2804 = vmatpush1.msra.mxu0 %v2387
    %2805 = vmatprep.subr.mxu0 0.0
    %2806 = vmatpush1.msra.mxu0 0.0
    %2807 = vmatprep.subr.mxu0 0.0
    %2808 = vmatpush1.msra.mxu0 0.0
    %2809 = vmatprep.subr.mxu0 0.0
    %2810 = vmatpush1.msra.mxu0 0.0
    %2811 = vmatprep.subr.mxu0 0.0
    %2812 = vmatpush1.msra.mxu0 0.0
    %2813 = vmatprep.subr.mxu0 0.0
    %2814 = vmatpush1.msra.mxu0 0.0
    %2815 = vmatprep.subr.mxu0 0.0
    %2816 = vmatpush1.msra.mxu0 0.0
    %2817 = vmatprep.subr.mxu0 0.0
    %2818 = vmatpush1.msra.mxu0 0.0
    %2819 = vmatprep.subr.mxu0 0.0
    %2820 = vmatpush1.msra.mxu0 0.0
    %2821 = vmatprep.subr.mxu0 0.0
    %2822 = vmatpush1.msra.mxu0 0.0
    %2823 = vmatprep.subr.mxu0 0.0
    %2824 = vmatpush1.msra.mxu0 0.0
    %2825 = vmatprep.subr.mxu0 0.0
    %2826 = vmatpush1.msra.mxu0 0.0
    %2827 = vmatprep.subr.mxu0 0.0
    %2828 = vmatpush1.msra.mxu0 0.0
    %2829 = vmatprep.subr.mxu0 0.0
    %2830 = vmatpush1.msra.mxu0 0.0
    %2831 = vmatprep.subr.mxu0 0.0
    %2832 = vmatpush1.msra.mxu0 0.0
    %2833 = vmatprep.subr.mxu0 0.0
    %2834 = vmatpush1.msra.mxu0 0.0
    %2835 = vmatprep.subr.mxu0 0.0
    %2836 = vmatpush1.msra.mxu0 0.0
    %2837 = vmatprep.subr.mxu0 0.0
    %2838 = vmatpush1.msra.mxu0 0.0
    %2839 = vmatprep.subr.mxu0 0.0
    %2840 = vmatpush1.msra.mxu0 0.0
    %2841 = vmatprep.subr.mxu0 0.0
    %2842 = vmatpush1.msra.mxu0 0.0
    %2843 = vmatprep.subr.mxu0 0.0
    %2844 = vmatpush1.msra.mxu0 0.0
    %2845 = vmatprep.mubr.f32.mxu0 0.0
    %2846 = vmatmul.mubr.f32.gmra.mrb[0].mxu0 %v2770
    %v2847 = vpop.f32.mrb[0].mxu0
    %v2848 = vadd.f32 0.0, %v2847
    %v2849 = vpop.f32.mrb[0].mxu0
    %2850 = vmatprep.mubr.f32.mxu0 0.0
    %2851 = vmatmul.mubr.f32.gmra.mrb[0].mxu0 %v2773
    %v2852 = vpop.f32.mrb[0].mxu0
    %v2853 = vadd.f32 0.0, %v2852
    %v2854 = vpop.f32.mrb[0].mxu0
    %2855 = vmatprep.mubr.f32.mxu0 0.0
    %2856 = vmatmul.mubr.f32.gmra.mrb[0].mxu0 %v2776
    %v2857 = vpop.f32.mrb[0].mxu0
    %v2858 = vadd.f32 0.0, %v2857
    %v2859 = vpop.f32.mrb[0].mxu0
    %2860 = vmatprep.mubr.f32.mxu0 0.0
    %2861 = vmatmul.mubr.f32.gmra.mrb[0].mxu0 %v2779
    %v2862 = vpop.f32.mrb[0].mxu0
    %v2863 = vadd.f32 0.0, %v2862
    %v2864 = vpop.f32.mrb[0].mxu0
    %2865 = vdwg.mxu0
    %2870 = vrot.lane.b32.xlu0 %v2372, 64
    %v2871 = vpop.permute.xlu0 %2870
    %2872 = vrot.lane.b32.xlu0 %v2373, 64
    %v2873 = vpop.permute.xlu0 %2872
    %2874 = vrot.lane.b32.xlu0 %v2374, 64
    %v2875 = vpop.permute.xlu0 %2874
    %2876 = vrot.lane.b32.xlu0 %v2375, 64
    %v2877 = vpop.permute.xlu0 %2876
    %v2882 = vsel %vm346, %v2848, %v2871
    %v2883 = vsel %vm346, %v2853, %v2873
    %v2884 = vsel %vm346, %v2858, %v2875
    %v2885 = vsel %vm346, %v2863, %v2877
    %2886 = vst.msk [vmem:[#allocation2] sm:$0xff] %vm2674, %v2882
    %2887 = vst.msk [vmem:[#allocation2 + $0x8] sm:$0xff] %vm2674, %v2883
    %2888 = vst.msk [vmem:[#allocation2 + $0x10] sm:$0xff] %vm2674, %v2884
    %2889 = vst.msk [vmem:[#allocation2 + $0x18] sm:$0xff] %vm2674, %v2885
    %v2890 = vld [vmem:[%s45] sm:$0xf]
    %v2891 = vld [vmem:[%s45 + $0x4] sm:$0xf]
    %v2892 = vld [vmem:[%s45 + $0x8] sm:$0xf]
    %v2893 = vld [vmem:[%s45 + $0xc] sm:$0xf]
    %v2894 = vld [vmem:[%s45 + $0x10] sm:$0xf]
    %v2895 = vld [vmem:[%s45 + $0x14] sm:$0xf]
    %v2896 = vld [vmem:[%s45 + $0x18] sm:$0xf]
    %v2897 = vld [vmem:[%s45 + $0x1c] sm:$0xf]
    %v2898 = vld [vmem:[%s45 + $0x20] sm:$0xf]
    %v2899 = vld [vmem:[%s45 + $0x24] sm:$0xf]
    %v2900 = vld [vmem:[%s45 + $0x28] sm:$0xf]
    %v2901 = vld [vmem:[%s45 + $0x2c] sm:$0xf]
    %v2902 = vpack.c.bf16 %v2883, %v2882
    %v2903 = vpack.c.bf16 %v2885, %v2884
    %v2904 = vld [vmem:[%s47] sm:$0x1]
    %v2906 = vlaneseq
    %v2907 = vshrl.u32 %v2906, 7
    %v2908 = vsub.s32 0, %v2907
    %v2909 = vrot.slane %v2904, %v2908
    %v2923 = vunpack.c.l.b16 %v2890
    %v2924 = vunpack.c.l.b16 %v2891
    %v2925 = vunpack.c.l.b16 %v2892
    %v2926 = vunpack.c.l.b16 %v2893
    %v2927 = vunpack.c.l.b16 %v2894
    %v2928 = vunpack.c.l.b16 %v2895
    %v2929 = vunpack.c.l.b16 %v2896
    %v2930 = vunpack.c.l.b16 %v2897
    %v2931 = vunpack.c.l.b16 %v2898
    %v2932 = vunpack.c.l.b16 %v2899
    %v2933 = vunpack.c.l.b16 %v2900
    %v2934 = vunpack.c.l.b16 %v2901
    %v2935 = vpack.c.b16 %v2924, %v2923
    %v2936 = vpack.c.b16 %v2926, %v2925
    %v2937 = vpack.c.b16 %v2928, %v2927
    %v2938 = vpack.c.b16 %v2930, %v2929
    %v2939 = vpack.c.b16 %v2932, %v2931
    %v2940 = vpack.c.b16 %v2934, %v2933
    %v2948 = vsel %vm2674, %v2902, 0
    %v2951 = vsel %vm2674, %v2903, 0
    %2953 = vmatprep.subr.bf16.mxu0 0
    %2954 = vmatpush1.bf16.msra.mxu0 %v2935
    %2955 = vmatprep.subr.bf16.mxu0 0
    %2956 = vmatpush1.bf16.msra.mxu0 %v2936
    %2957 = vmatprep.subr.bf16.mxu0 0
    %2958 = vmatpush1.bf16.msra.mxu0 %v2937
    %2959 = vmatprep.subr.bf16.mxu0 0
    %2960 = vmatpush1.bf16.msra.mxu0 %v2938
    %2961 = vmatprep.subr.bf16.mxu0 0
    %2962 = vmatpush1.bf16.msra.mxu0 %v2939
    %2963 = vmatprep.subr.bf16.mxu0 0
    %2964 = vmatpush1.bf16.msra.mxu0 %v2940
    %2965 = vmatprep.subr.bf16.mxu0 0
    %2966 = vmatpush1.bf16.msra.mxu0 0
    %2967 = vmatprep.subr.bf16.mxu0 0
    %2968 = vmatpush1.bf16.msra.mxu0 0
    %2969 = vmatprep.subr.bf16.mxu0 0
    %2970 = vmatpush1.bf16.msra.mxu0 0
    %2971 = vmatprep.subr.bf16.mxu0 0
    %2972 = vmatpush1.bf16.msra.mxu0 0
    %2973 = vmatprep.subr.bf16.mxu0 0
    %2974 = vmatpush1.bf16.msra.mxu0 0
    %2975 = vmatprep.subr.bf16.mxu0 0
    %2976 = vmatpush1.bf16.msra.mxu0 0
    %2977 = vmatprep.subr.bf16.mxu0 0
    %2978 = vmatpush1.bf16.msra.mxu0 0
    %2979 = vmatprep.subr.bf16.mxu0 0
    %2980 = vmatpush1.bf16.msra.mxu0 0
    %2981 = vmatprep.subr.bf16.mxu0 0
    %2982 = vmatpush1.bf16.msra.mxu0 0
    %2983 = vmatprep.subr.bf16.mxu0 0
    %2984 = vmatpush1.bf16.msra.mxu0 0
    %2985 = vmatprep.mubr.bf16.mxu0 0
    %2986 = vmatmul.mubr.bf16.gmra.mrb[0].mxu0 %v2948
    %v2987 = vpop.f32.mrb[0].mxu0
    %v2988 = vadd.f32 %v2909, %v2987
    %v2989 = vpop.f32.mrb[0].mxu0
    %v2990 = vpop.f32.mrb[0].mxu0
    %v2991 = vadd.f32 %v2909, %v2990
    %v2992 = vpop.f32.mrb[0].mxu0
    %2993 = vmatprep.mubr.bf16.mxu0 0
    %2994 = vmatmul.mubr.bf16.gmra.mrb[0].mxu0 %v2951
    %v2995 = vpop.f32.mrb[0].mxu0
    %v2996 = vadd.f32 %v2909, %v2995
    %v2997 = vpop.f32.mrb[0].mxu0
    %v2998 = vpop.f32.mrb[0].mxu0
    %v2999 = vadd.f32 %v2909, %v2998
    %v3000 = vpop.f32.mrb[0].mxu0
    %3001 = vdwg.mxu0
    %v3002 = vld [vmem:[%s49] sm:$0x1]
    %v3003 = vld [vmem:[%s51] sm:$0x1]
    %v3004 = vld [vmem:[%s53] sm:$0x1]
    %v3005 = vld [vmem:[%s55] sm:$0x1]
    %v3007 = vlaneseq
    %v3008 = vshrl.u32 %v3007, 7
    %v3009 = vsub.s32 0, %v3008
    %v3010 = vrot.slane %v3004, %v3009
    %v3012 = vsub.f32 %v2988, %v3010
    %v3013 = vsub.f32 %v2991, %v3010
    %v3014 = vsub.f32 %v2996, %v3010
    %v3015 = vsub.f32 %v2999, %v3010
    %v3016 = vadd.f32 %v3005, 0.0001
    %v3017 = vrsqrt.pop %v3016
    %v3019 = vlaneseq
    %v3020 = vshrl.u32 %v3019, 7
    %v3021 = vsub.s32 0, %v3020
    %v3022 = vrot.slane %v3017, %v3021
    %v3024 = vmul.f32 %v3012, %v3022
    %v3025 = vmul.f32 %v3013, %v3022
    %v3026 = vmul.f32 %v3014, %v3022
    %v3027 = vmul.f32 %v3015, %v3022
    %v3029 = vlaneseq
    %v3030 = vshrl.u32 %v3029, 7
    %v3031 = vsub.s32 0, %v3030
    %v3032 = vrot.slane %v3002, %v3031
    %v3034 = vmul.f32 %v3024, %v3032
    %v3035 = vmul.f32 %v3025, %v3032
    %v3036 = vmul.f32 %v3026, %v3032
    %v3037 = vmul.f32 %v3027, %v3032
    %v3039 = vlaneseq
    %v3040 = vshrl.u32 %v3039, 7
    %v3041 = vsub.s32 0, %v3040
    %v3042 = vrot.slane %v3003, %v3041
    %v3044 = vadd.f32 %v3034, %v3042
    %v3045 = vadd.f32 %v3035, %v3042
    %v3046 = vadd.f32 %v3036, %v3042
    %v3047 = vadd.f32 %v3037, %v3042
    %v3048 = vmin.f32 %v3044, 0.0
    %v3049 = vmin.f32 %v3045, 0.0
    %v3050 = vmin.f32 %v3046, 0.0
    %v3051 = vmin.f32 %v3047, 0.0
    %v3052 = vmul.f32 %v3048, 1.442695
    %v3053 = vpow.pop %v3052
    %v3054 = vmul.f32 %v3049, 1.442695
    %v3055 = vpow.pop %v3054
    %v3056 = vmul.f32 %v3050, 1.442695
    %v3057 = vpow.pop %v3056
    %v3058 = vmul.f32 %v3051, 1.442695
    %v3059 = vpow.pop %v3058
    %v3060 = vsub.f32 %v3053, 1.0
    %v3061 = vsub.f32 %v3055, 1.0
    %v3062 = vsub.f32 %v3057, 1.0
    %v3063 = vsub.f32 %v3059, 1.0
    %vm3064 = vcmp.gt.f32.partialorder %v3044, 0.0
    %vm3065 = vcmp.gt.f32.partialorder %v3045, 0.0
    %vm3066 = vcmp.gt.f32.partialorder %v3046, 0.0
    %vm3067 = vcmp.gt.f32.partialorder %v3047, 0.0
    %v3068 = vsel %vm3064, %v3044, %v3060
    %v3069 = vsel %vm3065, %v3045, %v3061
    %v3070 = vsel %vm3066, %v3046, %v3062
    %v3071 = vsel %vm3067, %v3047, %v3063
    %3072 = vst.msk [vmem:[#allocation4] sm:$0xff] %vm179, %v3068
    %3073 = vst.msk [vmem:[#allocation4 + $0x8] sm:$0xff] %vm179, %v3069
    %3074 = vst.msk [vmem:[#allocation4 + $0x10] sm:$0xff] %vm179, %v3070
    %3075 = vst.msk [vmem:[#allocation4 + $0x18] sm:$0xff] %vm179, %v3071
    %v3076 = vld [vmem:[%s57] sm:$0xff]
    %v3077 = vmul.f32 %v2882, %v2882
    %v3078 = vmul.f32 %v2883, %v2883
    %v3079 = vmul.f32 %v2884, %v2884
    %v3080 = vmul.f32 %v2885, %v2885
    %v3081 = vsel %vm2674, %v3077, 0.0
    %3082 = vadd.xlane.f32.xlu0 %v3081
    %v3083 = vpop.xlane.xlu0 %3082
    %v3084 = vsel %vm2674, %v3078, 0.0
    %3085 = vadd.xlane.f32.xlu0 %v3084
    %v3086 = vpop.xlane.xlu0 %3085
    %v3087 = vsel %vm2674, %v3079, 0.0
    %3088 = vadd.xlane.f32.xlu0 %v3087
    %v3089 = vpop.xlane.xlu0 %3088
    %v3090 = vsel %vm2674, %v3080, 0.0
    %3091 = vadd.xlane.f32.xlu0 %v3090
    %v3092 = vpop.xlane.xlu0 %3091
    %v3093 = vmul.f32 %v3076, %v3076
    %v3094 = vsel %vm2674, 1.0, 0
    %v3097 = vsel %vm2674, %v3093, 0
    %3099 = vmatprep.subr.mxu0 0.0
    %3100 = vmatpush1.xpose.msra.mxu0 %v3097
    %3101 = vmatprep.subr.mxu0 0.0
    %3102 = vmatpush1.xpose.msra.mxu0 0.0
    %3103 = vmatprep.subr.mxu0 0.0
    %3104 = vmatpush1.xpose.msra.mxu0 0.0
    %3105 = vmatprep.subr.mxu0 0.0
    %3106 = vmatpush1.xpose.msra.mxu0 0.0
    %3107 = vmatprep.subr.mxu0 0.0
    %3108 = vmatpush1.xpose.msra.mxu0 0.0
    %3109 = vmatprep.subr.mxu0 0.0
    %3110 = vmatpush1.xpose.msra.mxu0 0.0
    %3111 = vmatprep.subr.mxu0 0.0
    %3112 = vmatpush1.xpose.msra.mxu0 0.0
    %3113 = vmatprep.subr.mxu0 0.0
    %3114 = vmatpush1.xpose.msra.mxu0 0.0
    %3115 = vmatprep.subr.mxu0 0.0
    %3116 = vmatpush1.xpose.msra.mxu0 0.0
    %3117 = vmatprep.subr.mxu0 0.0
    %3118 = vmatpush1.xpose.msra.mxu0 0.0
    %3119 = vmatprep.subr.mxu0 0.0
    %3120 = vmatpush1.xpose.msra.mxu0 0.0
    %3121 = vmatprep.subr.mxu0 0.0
    %3122 = vmatpush1.xpose.msra.mxu0 0.0
    %3123 = vmatprep.subr.mxu0 0.0
    %3124 = vmatpush1.xpose.msra.mxu0 0.0
    %3125 = vmatprep.subr.mxu0 0.0
    %3126 = vmatpush1.xpose.msra.mxu0 0.0
    %3127 = vmatprep.subr.mxu0 0.0
    %3128 = vmatpush1.xpose.msra.mxu0 0.0
    %3129 = vmatprep.subr.mxu0 0.0
    %3130 = vmatpush1.xpose.msra.mxu0 0.0
    %3131 = vmatprep.subr.mxu0 0.0
    %3132 = vmatpush1.xpose.msra.mxu0 0.0
    %3133 = vmatprep.subr.mxu0 0.0
    %3134 = vmatpush1.xpose.msra.mxu0 0.0
    %3135 = vmatprep.subr.mxu0 0.0
    %3136 = vmatpush1.xpose.msra.mxu0 0.0
    %3137 = vmatprep.subr.mxu0 0.0
    %3138 = vmatpush1.xpose.msra.mxu0 0.0
    %3139 = vmatprep.subr.mxu0 0.0
    %3140 = vmatpush1.xpose.msra.mxu0 0.0
    %3141 = vmatprep.subr.mxu0 0.0
    %3142 = vmatpush1.xpose.msra.mxu0 0.0
    %3143 = vmatprep.subr.mxu0 0.0
    %3144 = vmatpush1.xpose.msra.mxu0 0.0
    %3145 = vmatprep.subr.mxu0 0.0
    %3146 = vmatpush1.xpose.msra.mxu0 0.0
    %3147 = vmatprep.subr.mxu0 0.0
    %3148 = vmatpush1.xpose.msra.mxu0 0.0
    %3149 = vmatprep.subr.mxu0 0.0
    %3150 = vmatpush1.xpose.msra.mxu0 0.0
    %3151 = vmatprep.subr.mxu0 0.0
    %3152 = vmatpush1.xpose.msra.mxu0 0.0
    %3153 = vmatprep.subr.mxu0 0.0
    %3154 = vmatpush1.xpose.msra.mxu0 0.0
    %3155 = vmatprep.subr.mxu0 0.0
    %3156 = vmatpush1.xpose.msra.mxu0 0.0
    %3157 = vmatprep.subr.mxu0 0.0
    %3158 = vmatpush1.xpose.msra.mxu0 0.0
    %3159 = vmatprep.subr.mxu0 0.0
    %3160 = vmatpush1.xpose.msra.mxu0 0.0
    %3161 = vmatprep.subr.mxu0 0.0
    %3162 = vmatpush1.xpose.msra.mxu0 0.0
    %3163 = vmatprep.mubr.f32.mxu0 0.0
    %3164 = vmatmul.mubr.f32.gmra.mrb[0].mxu0 %v3094
    %v3165 = vpop.f32.mrb[0].mxu0
    %v3166 = vadd.f32 0.0, %v3165
    %v3167 = vpop.f32.mrb[0].mxu0
    %3168 = vdwg.mxu0
    %v3170 = vsel %vm2674, %v2882, 0
    %v3173 = vsel %vm2674, %v2883, 0
    %v3176 = vsel %vm2674, %v2884, 0
    %v3179 = vsel %vm2674, %v2885, 0
    %v3182 = vsel %vm2674, %v3076, 0
    %3184 = vmatprep.subr.mxu0 0.0
    %3185 = vmatpush1.xpose.msra.mxu0 %v3182
    %3186 = vmatprep.subr.mxu0 0.0
    %3187 = vmatpush1.xpose.msra.mxu0 0.0
    %3188 = vmatprep.subr.mxu0 0.0
    %3189 = vmatpush1.xpose.msra.mxu0 0.0
    %3190 = vmatprep.subr.mxu0 0.0
    %3191 = vmatpush1.xpose.msra.mxu0 0.0
    %3192 = vmatprep.subr.mxu0 0.0
    %3193 = vmatpush1.xpose.msra.mxu0 0.0
    %3194 = vmatprep.subr.mxu0 0.0
    %3195 = vmatpush1.xpose.msra.mxu0 0.0
    %3196 = vmatprep.subr.mxu0 0.0
    %3197 = vmatpush1.xpose.msra.mxu0 0.0
    %3198 = vmatprep.subr.mxu0 0.0
    %3199 = vmatpush1.xpose.msra.mxu0 0.0
    %3200 = vmatprep.subr.mxu0 0.0
    %3201 = vmatpush1.xpose.msra.mxu0 0.0
    %3202 = vmatprep.subr.mxu0 0.0
    %3203 = vmatpush1.xpose.msra.mxu0 0.0
    %3204 = vmatprep.subr.mxu0 0.0
    %3205 = vmatpush1.xpose.msra.mxu0 0.0
    %3206 = vmatprep.subr.mxu0 0.0
    %3207 = vmatpush1.xpose.msra.mxu0 0.0
    %3208 = vmatprep.subr.mxu0 0.0
    %3209 = vmatpush1.xpose.msra.mxu0 0.0
    %3210 = vmatprep.subr.mxu0 0.0
    %3211 = vmatpush1.xpose.msra.mxu0 0.0
    %3212 = vmatprep.subr.mxu0 0.0
    %3213 = vmatpush1.xpose.msra.mxu0 0.0
    %3214 = vmatprep.subr.mxu0 0.0
    %3215 = vmatpush1.xpose.msra.mxu0 0.0
    %3216 = vmatprep.subr.mxu0 0.0
    %3217 = vmatpush1.xpose.msra.mxu0 0.0
    %3218 = vmatprep.subr.mxu0 0.0
    %3219 = vmatpush1.xpose.msra.mxu0 0.0
    %3220 = vmatprep.subr.mxu0 0.0
    %3221 = vmatpush1.xpose.msra.mxu0 0.0
    %3222 = vmatprep.subr.mxu0 0.0
    %3223 = vmatpush1.xpose.msra.mxu0 0.0
    %3224 = vmatprep.subr.mxu0 0.0
    %3225 = vmatpush1.xpose.msra.mxu0 0.0
    %3226 = vmatprep.subr.mxu0 0.0
    %3227 = vmatpush1.xpose.msra.mxu0 0.0
    %3228 = vmatprep.subr.mxu0 0.0
    %3229 = vmatpush1.xpose.msra.mxu0 0.0
    %3230 = vmatprep.subr.mxu0 0.0
    %3231 = vmatpush1.xpose.msra.mxu0 0.0
    %3232 = vmatprep.subr.mxu0 0.0
    %3233 = vmatpush1.xpose.msra.mxu0 0.0
    %3234 = vmatprep.subr.mxu0 0.0
    %3235 = vmatpush1.xpose.msra.mxu0 0.0
    %3236 = vmatprep.subr.mxu0 0.0
    %3237 = vmatpush1.xpose.msra.mxu0 0.0
    %3238 = vmatprep.subr.mxu0 0.0
    %3239 = vmatpush1.xpose.msra.mxu0 0.0
    %3240 = vmatprep.subr.mxu0 0.0
    %3241 = vmatpush1.xpose.msra.mxu0 0.0
    %3242 = vmatprep.subr.mxu0 0.0
    %3243 = vmatpush1.xpose.msra.mxu0 0.0
    %3244 = vmatprep.subr.mxu0 0.0
    %3245 = vmatpush1.xpose.msra.mxu0 0.0
    %3246 = vmatprep.subr.mxu0 0.0
    %3247 = vmatpush1.xpose.msra.mxu0 0.0
    %3248 = vmatprep.mubr.f32.mxu0 0.0
    %3249 = vmatmul.mubr.f32.gmra.mrb[0].mxu0 %v3170
    %v3250 = vpop.f32.mrb[0].mxu0
    %v3251 = vadd.f32 0.0, %v3250
    %v3252 = vpop.f32.mrb[0].mxu0
    %3253 = vmatprep.mubr.f32.mxu0 0.0
    %3254 = vmatmul.mubr.f32.gmra.mrb[0].mxu0 %v3173
    %v3255 = vpop.f32.mrb[0].mxu0
    %v3256 = vadd.f32 0.0, %v3255
    %v3257 = vpop.f32.mrb[0].mxu0
    %3258 = vmatprep.mubr.f32.mxu0 0.0
    %3259 = vmatmul.mubr.f32.gmra.mrb[0].mxu0 %v3176
    %v3260 = vpop.f32.mrb[0].mxu0
    %v3261 = vadd.f32 0.0, %v3260
    %v3262 = vpop.f32.mrb[0].mxu0
    %3263 = vmatprep.mubr.f32.mxu0 0.0
    %3264 = vmatmul.mubr.f32.gmra.mrb[0].mxu0 %v3179
    %v3265 = vpop.f32.mrb[0].mxu0
    %v3266 = vadd.f32 0.0, %v3265
    %v3267 = vpop.f32.mrb[0].mxu0
    %3268 = vdwg.mxu0
    %v3269 = vlaneseq
    %v3270 = vshrl.u32 %v3269, 7
    %v3271 = vsub.s32 0, %v3270
    %v3272 = vrot.slane %v3166, %v3271
    %v3273 = vadd.f32 %v3083, %v3272
    %v3274 = vadd.f32 %v3086, %v3272
    %v3275 = vadd.f32 %v3089, %v3272
    %v3276 = vadd.f32 %v3092, %v3272
    %v3277 = vmul.f32 %v3251, 2.0
    %v3278 = vmul.f32 %v3256, 2.0
    %v3279 = vmul.f32 %v3261, 2.0
    %v3280 = vmul.f32 %v3266, 2.0
    %v3281 = vsub.f32 %v3273, %v3277
    %v3282 = vsub.f32 %v3274, %v3278
    %v3283 = vsub.f32 %v3275, %v3279
    %v3284 = vsub.f32 %v3276, %v3280
    %v3285 = vmax.f32 %v3281, 0.0
    %v3286 = vmax.f32 %v3282, 0.0
    %v3287 = vmax.f32 %v3283, 0.0
    %v3288 = vmax.f32 %v3284, 0.0
    %v3289 = vadd.f32 %v3285, 1.0
    %v3290 = vadd.f32 %v3286, 1.0
    %v3291 = vadd.f32 %v3287, 1.0
    %v3292 = vadd.f32 %v3288, 1.0
    %v3293 = vrcp.pop %v3289
    %v3294 = vmul.f32 1.0, %v3293
    %v3295 = vrcp.pop %v3290
    %v3296 = vmul.f32 1.0, %v3295
    %v3297 = vrcp.pop %v3291
    %v3298 = vmul.f32 1.0, %v3297
    %v3299 = vrcp.pop %v3292
    %v3300 = vmul.f32 1.0, %v3299
    %vm3301 = vcmask 64512
    %v3302 = vsel %vm3301, %v3294, 0.0
    %3303 = vadd.xlane.f32.xlu0 %v3302
    %v3304 = vpop.xlane.xlu0 %3303
    %v3305 = vsel %vm3301, %v3296, 0.0
    %3306 = vadd.xlane.f32.xlu0 %v3305
    %v3307 = vpop.xlane.xlu0 %3306
    %v3308 = vsel %vm3301, %v3298, 0.0
    %3309 = vadd.xlane.f32.xlu0 %v3308
    %v3310 = vpop.xlane.xlu0 %3309
    %v3311 = vsel %vm3301, %v3300, 0.0
    %3312 = vadd.xlane.f32.xlu0 %v3311
    %v3313 = vpop.xlane.xlu0 %3312
    %v3314 = vrcp.pop %v3304
    %v3315 = vmul.f32 %v3294, %v3314
    %v3316 = vrcp.pop %v3307
    %v3317 = vmul.f32 %v3296, %v3316
    %v3318 = vrcp.pop %v3310
    %v3319 = vmul.f32 %v3298, %v3318
    %v3320 = vrcp.pop %v3313
    %v3321 = vmul.f32 %v3300, %v3320
    %3322 = vst.msk [vmem:[%s63] sm:$0xff] %vm3301, %v3315
    %3323 = vst.msk [vmem:[%s63 + $0x8] sm:$0xff] %vm3301, %v3317
    %3324 = vst.msk [vmem:[%s63 + $0x10] sm:$0xff] %vm3301, %v3319
    %3325 = vst.msk [vmem:[%s63 + $0x18] sm:$0xff] %vm3301, %v3321
    // Predicated region
    $region118: #{st_transformer_adaptive_forward.1} parent=1 // pred_check
      _
    $region119: #{st_transformer_adaptive_forward.1} parent=1 // pred_check_branch
      %3327 = sbr.rel (0) target = $region121
    $region120: #{st_transformer_adaptive_forward.1} parent=1 // pred_region
      %s3329 = ssub.s32 512, 512
      %3330 = vsyncadd [#allocation3], %s3329
      %s3331 = sshll.u32 [#allocation2], 4
      %s3332 = int_to_ptr.vmem [resolvable:$true] %s3331
      %3337 = dma.vmem_to_hbm [thread:$0]  %s3332, 512, %s59, [#allocation3], 128, 128, 8
    $region121: #{st_transformer_adaptive_forward.1} parent=1 // pred_fallthru
      _
    // Predicated region
    $region122: #{st_transformer_adaptive_forward.1} parent=1 // pred_check
      _
    $region123: #{st_transformer_adaptive_forward.1} parent=1 // pred_check_branch
      %3339 = sbr.rel (0) target = $region125
    $region124: #{st_transformer_adaptive_forward.1} parent=1 // pred_region
      %s3341 = ssub.s32 512, 512
      %3342 = vsyncadd [#allocation5], %s3341
      %s3343 = sshll.u32 [#allocation4], 4
      %s3344 = int_to_ptr.vmem [resolvable:$true] %s3343
      %3349 = dma.vmem_to_hbm [thread:$0]  %s3344, 512, %s61, [#allocation5], 128, 128, 8
    $region125: #{st_transformer_adaptive_forward.1} parent=1 // pred_fallthru
      _
    // Predicated region
    $region126: #{st_transformer_adaptive_forward.1} parent=1 // pred_check
      _
    $region127: #{st_transformer_adaptive_forward.1} parent=1 // pred_check_branch
      %3351 = sbr.rel (0) target = $region129
    $region128: #{st_transformer_adaptive_forward.1} parent=1 // pred_region
      _
    $region129: #{st_transformer_adaptive_forward.1} parent=1 // pred_fallthru
      _
    // Predicated region
    $region130: #{st_transformer_adaptive_forward.1} parent=1 // pred_check
      _
    $region131: #{st_transformer_adaptive_forward.1} parent=1 // pred_check_branch
      %3353 = sbr.rel (0) target = $region133
    $region132: #{st_transformer_adaptive_forward.1} parent=1 // pred_region
      %s3355 = ssub.s32 512, 512
      %3356 = vsyncadd [#allocation5], %s3355
      %s3357 = sshll.u32 [#allocation6], 4
      %s3358 = int_to_ptr.vmem [resolvable:$true] %s3357
      %3363 = dma.vmem_to_hbm [thread:$0]  %s3358, 512, %s65, [#allocation5], 128, 128, 8
    $region133: #{st_transformer_adaptive_forward.1} parent=1 // pred_fallthru
      _
    // Predicated region
    $region134: #{st_transformer_adaptive_forward.1} parent=1 // pred_check
      _
    $region135: #{st_transformer_adaptive_forward.1} parent=1 // pred_check_branch
      %3365 = sbr.rel (0) target = $region137
    $region136: #{st_transformer_adaptive_forward.1} parent=1 // pred_region
      %3366 = dma.done [#allocation3], 512
    $region137: #{st_transformer_adaptive_forward.1} parent=1 // pred_fallthru
      _
    // Predicated region
    $region138: #{st_transformer_adaptive_forward.1} parent=1 // pred_check
      _
    $region139: #{st_transformer_adaptive_forward.1} parent=1 // pred_check_branch
      %3368 = sbr.rel (0) target = $region141
    $region140: #{st_transformer_adaptive_forward.1} parent=1 // pred_region
      %3369 = dma.done [#allocation5], 512
    $region141: #{st_transformer_adaptive_forward.1} parent=1 // pred_fallthru
      _
    // Predicated region
    $region142: #{st_transformer_adaptive_forward.1} parent=1 // pred_check
      _
    $region143: #{st_transformer_adaptive_forward.1} parent=1 // pred_check_branch
      %3371 = sbr.rel (0) target = $region145
    $region144: #{st_transformer_adaptive_forward.1} parent=1 // pred_region
      _
    $region145: #{st_transformer_adaptive_forward.1} parent=1 // pred_fallthru
      _
    // Predicated region
    $region146: #{st_transformer_adaptive_forward.1} parent=1 // pred_check
      _
    $region147: #{st_transformer_adaptive_forward.1} parent=1 // pred_check_branch
      %3373 = sbr.rel (0) target = $region149
    $region148: #{st_transformer_adaptive_forward.1} parent=1 // pred_region
      %3374 = dma.done [#allocation5], 512
    $region149: #{st_transformer_adaptive_forward.1} parent=1 // pred_fallthru
      _
    %3375 = vsyncpa [#allocation3], 1
    %3376 = vsyncpa [#allocation5], 1

</llo_original>
